<compile_context>
chip_gen: v5e
topology: v5e:2x2
jax: 0.10.0
libtpu: 0.0.40
codegen_flags: <defaults>
</compile_context>

<pallas_src>
import math
import functools

import jax
import jax.numpy as jnp
from jax.experimental import pallas as pl
from jax.experimental.pallas import tpu as pltpu


# ----------------------------------------------------------------------------
# Small, TPU-friendly config (emb_dim lane-dense at 128)
# ----------------------------------------------------------------------------
EMB_DIM = 128                 # args.emb_dim
H_DIM = T_DIM = R_DIM = 32    # args.h_dim / t_dim / r_dim
NUM_HOPS = 3                  # h, r, t  (pos_embedding rows)
MASK_RATIO = 0.25             # remain_T = int(3 * 0.75) = 2  -> seq N = 3 (with cls)
NUM_LAYERS = 2                # args.encoder_num_layer
MLP_RATIO = 4
BATCH = 8
LN_EPS = 1e-5
NEG_INF = -1e30


# ----------------------------------------------------------------------------
# The single fused encoder kernel
# ----------------------------------------------------------------------------
def encoder_kernel(xcat_ref, idx_ref, bias_ref, wcat_ref, bpos_ref, cls_ref,
                   g1_ref, b1_ref, wqkv_ref, bqkv_ref, wp_ref, bp_ref,
                   g2_ref, b2_ref, w1_ref, bm1_ref, w2_ref, bm2_ref,
                   gf_ref, bf_ref, o_ref, *, batch, seq, emb, layers):
    B, N, C, L = batch, seq, emb, layers

    def layer_norm(z, g, b):
        mu = jnp.mean(z, axis=-1, keepdims=True)
        zc = z - mu
        var = jnp.mean(zc * zc, axis=-1, keepdims=True)
        return zc * jax.lax.rsqrt(var + LN_EPS) * g + b

    # ---- fused h/r/t input projection; bias + pos-embedding pre-fused into bpos ----
    emb_out = jnp.dot(xcat_ref[...], wcat_ref[...],
                      preferred_element_type=jnp.float32) + bpos_ref[...]     # (B, 3C)
    eh = emb_out[:, :C]            # hop 0 (h)
    er = emb_out[:, C:2 * C]       # hop 1 (r)
    et = emb_out[:, 2 * C:]        # hop 2 (t)

    # ---- in-kernel PatchShuffle gather: vectorized 3-way select over kept hop ids ----
    idx = idx_ref[...]                                   # (B, N-1) int32
    def pick(col):
        hop = jnp.broadcast_to(idx[:, col:col + 1], (B, C))
        return jnp.where(hop == 0, eh, jnp.where(hop == 1, er, et))

    cls_rows = jnp.broadcast_to(cls_ref[...], (B, C))
    # Residual stream, t-major flat layout: row = t*B + b  ->  (N*B, C) = (24, 128)
    x = jnp.concatenate([cls_rows] + [pick(c) for c in range(N - 1)], axis=0)

    bias = bias_ref[...]           # (N*B, N*B) block-diagonal additive attention mask

    for li in range(L):            # static unroll over the 2 layers; weights stay in VMEM
        # --- LN1 + fused QKV (1/sqrt(dim) folded into Wq/bq at prep time) ---
        xn = layer_norm(x, g1_ref[li], b1_ref[li])
        qkv = jnp.dot(xn, wqkv_ref[li], preferred_element_type=jnp.float32) + bqkv_ref[li]
        q = qkv[:, :C]
        k = qkv[:, C:2 * C]
        v = qkv[:, 2 * C:]

        # All-pairs scores + per-batch block-diagonal mask; exact softmax (no approx recip).
        s = jax.lax.dot_general(q, k, (((1,), (1,)), ((), ())),
                                preferred_element_type=jnp.float32) + bias    # (NB, NB)
        m = jnp.max(s, axis=-1, keepdims=True)
        e = jnp.exp(s - m)                      # masked entries underflow to exactly 0
        p = e / jnp.sum(e, axis=-1, keepdims=True)

        ctx = jnp.dot(p, v, preferred_element_type=jnp.float32)              # (NB, C)
        attn = jnp.dot(ctx, wp_ref[li], preferred_element_type=jnp.float32) + bp_ref[li]
        x = x + attn

        # --- LN2 + MLP (fc1 -> GELU -> fc2) ---
        xn2 = layer_norm(x, g2_ref[li], b2_ref[li])
        hdn = jnp.dot(xn2, w1_ref[li], preferred_element_type=jnp.float32) + bm1_ref[li]
        # TODO(synk): PyTorch nn.GELU default is erf-exact; tanh approximation used here.
        hdn = 0.5 * hdn * (1.0 + jnp.tanh(0.7978845608028654 *
                                          (hdn + 0.044715 * hdn * hdn * hdn)))
        y = jnp.dot(hdn, w2_ref[li], preferred_element_type=jnp.float32) + bm2_ref[li]
        x = x + y

    # final encoder LayerNorm fused into the same kernel
    x = layer_norm(x, gf_ref[...], bf_ref[...])
    o_ref[...] = x.astype(o_ref.dtype)          # single unmasked (24, 128) dense store


def encoder_fused(xcat, idx_kept, attn_bias, p):
    B, Din = xcat.shape
    C = EMB_DIM
    N = idx_kept.shape[1] + 1
    BN = N * B
    L, _, H = p["w1"].shape

    def full(shape):
        return pl.BlockSpec(shape, lambda i, _s=shape: (0,) * len(_s))

    kernel = functools.partial(encoder_kernel, batch=B, seq=N, emb=C, layers=L)
    return pl.pallas_call(
        kernel,
        out_shape=jax.ShapeDtypeStruct((BN, C), jnp.float32),
        grid=(1,),
        in_specs=[
            full((B, Din)),                              # xcat  (h | r | t inputs)
            full((B, N - 1)),                            # kept shuffle indices (int32)
            full((BN, BN)),                              # additive block-diag attn mask
            full((Din, 3 * C)),                          # block-diag fused h/r/t weight
            full((1, 3 * C)),                            # fused bias + pos embedding
            full((1, C)),                                # cls token
            full((L, 1, C)), full((L, 1, C)),            # LN1 gamma/beta
            full((L, C, 3 * C)), full((L, 1, 3 * C)),    # fused QKV
            full((L, C, C)), full((L, 1, C)),            # attention proj
            full((L, 1, C)), full((L, 1, C)),            # LN2 gamma/beta
            full((L, C, H)), full((L, 1, H)),            # MLP fc1
            full((L, H, C)), full((L, 1, C)),            # MLP fc2
            full((1, C)), full((1, C)),                  # final LayerNorm gamma/beta
        ],
        out_specs=full((BN, C)),
        compiler_params=pltpu.CompilerParams(dimension_semantics=("arbitrary",)),
    )(xcat, idx_kept, attn_bias, p["wcat"], p["bpos"], p["cls"],
      p["g1"], p["b1"], p["wqkv"], p["bqkv"], p["wp"], p["bp"],
      p["g2"], p["b2"], p["w1"], p["bm1"], p["w2"], p["bm2"],
      p["gf"], p["bf"])


# ----------------------------------------------------------------------------
# Parameter init (PyTorch-style) and one-time kernel-format weight prep
# ----------------------------------------------------------------------------
def init_params(key):
    keys = iter(jax.random.split(key, 64))

    def linear(in_dim, out_dim):
        s = 1.0 / math.sqrt(in_dim)
        w = jax.random.uniform(next(keys), (in_dim, out_dim), jnp.float32, -s, s)
        b = jax.random.uniform(next(keys), (out_dim,), jnp.float32, -s, s)
        return w, b

    p = {}
    p["wh"], p["bh"] = linear(H_DIM, EMB_DIM)
    p["wt"], p["bt"] = linear(T_DIM, EMB_DIM)
    p["wr"], p["br"] = linear(R_DIM, EMB_DIM)
    p["cls"] = 0.02 * jax.random.truncated_normal(next(keys), -2.0, 2.0,
                                                  (1, 1, EMB_DIM), jnp.float32)
    p["pos"] = 0.02 * jax.random.truncated_normal(next(keys), -2.0, 2.0,
                                                  (NUM_HOPS, 1, EMB_DIM), jnp.float32)
    hid = int(EMB_DIM * MLP_RATIO)
    p["blocks"] = []
    for _ in range(NUM_LAYERS):
        blk = {}
        blk["wq"], blk["bq"] = linear(EMB_DIM, EMB_DIM)
        blk["wk"], blk["bk"] = linear(EMB_DIM, EMB_DIM)
        blk["wv"], blk["bv"] = linear(EMB_DIM, EMB_DIM)
        blk["wp"], blk["bp"] = linear(EMB_DIM, EMB_DIM)
        blk["w1"], blk["b1"] = linear(EMB_DIM, hid)
        blk["w2"], blk["b2"] = linear(hid, EMB_DIM)
        blk["ln1_g"] = jnp.ones((EMB_DIM,), jnp.float32)
        blk["ln1_b"] = jnp.zeros((EMB_DIM,), jnp.float32)
        blk["ln2_g"] = jnp.ones((EMB_DIM,), jnp.float32)
        blk["ln2_b"] = jnp.zeros((EMB_DIM,), jnp.float32)
        p["blocks"].append(blk)
    p["lnf_g"] = jnp.ones((EMB_DIM,), jnp.float32)
    p["lnf_b"] = jnp.zeros((EMB_DIM,), jnp.float32)
    return p


def prepare_encoder_params(p):
    """One-time prep (hoisted out of the forward path): block-diagonal h|r|t weight,
    pos embedding fused into the embed bias, Q/K/V fused with 1/sqrt(dim) folded into
    Wq/bq, per-layer weights stacked along a leading L axis."""
    C = EMB_DIM
    din = H_DIM + R_DIM + T_DIM
    w = jnp.zeros((din, 3 * C), jnp.float32)
    w = w.at[:H_DIM, :C].set(p["wh"])
    w = w.at[H_DIM:H_DIM + R_DIM, C:2 * C].set(p["wr"])
    w = w.at[H_DIM + R_DIM:, 2 * C:].set(p["wt"])
    b = jnp.concatenate([p["bh"], p["br"], p["bt"]]).reshape(1, 3 * C)
    pos = p["pos"][:, 0, :].reshape(1, 3 * C)          # hop order [0,1,2] == [h, r, t]
    inv = 1.0 / math.sqrt(C)

    def stack(fn):
        return jnp.stack([fn(blk) for blk in p["blocks"]], axis=0)

    return {
        "wcat": w,
        "bpos": b + pos,
        "cls": p["cls"].reshape(1, C),
        "g1": stack(lambda k: k["ln1_g"].reshape(1, C)),
        "b1": stack(lambda k: k["ln1_b"].reshape(1, C)),
        "wqkv": stack(lambda k: jnp.concatenate([k["wq"] * inv, k["wk"], k["wv"]], axis=1)),
        "bqkv": stack(lambda k: jnp.concatenate([k["bq"] * inv, k["bk"], k["bv"]]).reshape(1, 3 * C)),
        "wp": stack(lambda k: k["wp"]),
        "bp": stack(lambda k: k["bp"].reshape(1, C)),
        "g2": stack(lambda k: k["ln2_g"].reshape(1, C)),
        "b2": stack(lambda k: k["ln2_b"].reshape(1, C)),
        "w1": stack(lambda k: k["w1"]),
        "bm1": stack(lambda k: k["b1"].reshape(1, -1)),
        "w2": stack(lambda k: k["w2"]),
        "bm2": stack(lambda k: k["b2"].reshape(1, C)),
        "gf": p["lnf_g"].reshape(1, C),
        "bf": p["lnf_b"].reshape(1, C),
    }


# ----------------------------------------------------------------------------
# Full encoder forward (Pallas path) and pure-JAX reference
# ----------------------------------------------------------------------------
def mae_encoder_pallas(prepped, src_x, dst_x, src_dst_x, shuffle_key):
    B = src_x.shape[0]
    C = EMB_DIM
    T = NUM_HOPS
    remain_t = int(T * (1 - MASK_RATIO))
    N = remain_t + 1

    # PatchShuffle index bookkeeping (vmapped permutation; stays in plain JAX).
    keys = jax.random.split(shuffle_key, B)
    fwd = jax.vmap(lambda k: jax.random.permutation(k, T))(keys)     # (B, T)
    bwd = jnp.argsort(fwd, axis=1)                                   # (B, T)
    idx_kept = fwd[:, :remain_t].astype(jnp.int32)                   # (B, remain_t)

    xcat = jnp.concatenate([src_x, src_dst_x, dst_x], axis=1)        # order h | r | t

    # Constant block-diagonal additive mask (row = t*B + b; same batch <=> same row%B).
    row_b = jnp.arange(N * B, dtype=jnp.int32) % B
    attn_bias = jnp.where(row_b[:, None] == row_b[None, :], 0.0, NEG_INF).astype(jnp.float32)

    flat = encoder_fused(xcat, idx_kept, attn_bias, prepped)         # (N*B, C), t-major
    features = flat.reshape(N, B, C)                                 # (t, b, c) — free reshape
    return features, bwd.T


def mae_encoder_ref(params, src_x, dst_x, src_dst_x, shuffle_key):
    C = EMB_DIM
    B = src_x.shape[0]
    T = NUM_HOPS
    remain_t = int(T * (1 - MASK_RATIO))

    def ln(z, g, b):
        mu = jnp.mean(z, -1, keepdims=True)
        var = jnp.mean((z - mu) ** 2, -1, keepdims=True)
        return (z - mu) / jnp.sqrt(var + LN_EPS) * g + b

    h = src_x @ params["wh"] + params["bh"]
    t = dst_x @ params["wt"] + params["bt"]
    r = src_dst_x @ params["wr"] + params["br"]
    conv = jnp.stack([h, r, t], axis=1)                              # (B, 3, C)
    patches = conv.transpose(1, 0, 2) + params["pos"]                # (T, B, C)

    keys = jax.random.split(shuffle_key, B)
    fwd = jax.vmap(lambda k: jax.random.permutation(k, T))(keys)     # (B, T)
    bwd = jnp.argsort(fwd, axis=1)
    fwd_tb = fwd.T                                                   # (T, B)
    idx3 = jnp.broadcast_to(fwd_tb[:, :, None], patches.shape)
    shuffled = jnp.take_along_axis(patches, idx3, axis=0)
    kept = shuffled[:remain_t]

    cls = jnp.broadcast_to(params["cls"], (1, B, C))
    pt = jnp.concatenate([cls, kept], axis=0)                        # (N, B, C)
    x = pt.transpose(1, 0, 2)                                        # (B, N, C)

    for blk in params["blocks"]:
        xn = ln(x, blk["ln1_g"], blk["ln1_b"])
        q = xn @ blk["wq"] + blk["bq"]
        k = xn @ blk["wk"] + blk["bk"]
        v = xn @ blk["wv"] + blk["bv"]
        scores = jnp.einsum("bnc,bmc->bnm", q, k) / math.sqrt(C)
        probs = jax.nn.softmax(scores, axis=-1)
        ctx = jnp.einsum("bnm,bmc->bnc", probs, v)
        x = x + (ctx @ blk["wp"] + blk["bp"])
        x2 = ln(x, blk["ln2_g"], blk["ln2_b"])
        hid = x2 @ blk["w1"] + blk["b1"]
        hid = jax.nn.gelu(hid, approximate=True)   # matches kernel (tanh approx; see TODO)
        x = x + (hid @ blk["w2"] + blk["b2"])
    x = ln(x, params["lnf_g"], params["lnf_b"])
    return x.transpose(1, 0, 2), bwd.T


if __name__ == "__main__":
    key = jax.random.PRNGKey(0)
    kparams, kx1, kx2, kx3, kshuf = jax.random.split(key, 5)
    params = init_params(kparams)

    src_x = jax.random.normal(kx1, (BATCH, H_DIM), jnp.float32)
    dst_x = jax.random.normal(kx2, (BATCH, T_DIM), jnp.float32)
    src_dst_x = jax.random.normal(kx3, (BATCH, R_DIM), jnp.float32)

    prepped = prepare_encoder_params(params)       # one-time weight prep (hoisted)
    forward = jax.jit(mae_encoder_pallas)          # jitted end-to-end forward

    feats, bwd_idx = forward(prepped, src_x, dst_x, src_dst_x, kshuf)
    feats = jax.block_until_ready(feats)

    ref_feats, ref_bwd = mae_encoder_ref(params, src_x, dst_x, src_dst_x, kshuf)

    n_seq = 1 + int(NUM_HOPS * (1 - MASK_RATIO))
    assert feats.shape == (n_seq, BATCH, EMB_DIM)
    assert bwd_idx.shape == (NUM_HOPS, BATCH)
    assert jnp.array_equal(bwd_idx, ref_bwd)
    max_err = float(jnp.max(jnp.abs(feats - ref_feats)))
    # f32 matmuls + exact softmax divide in-kernel; headroom only for the TPU's default
    # reduced-precision f32 dot passes in the pure-JAX reference.
    assert jnp.allclose(feats, ref_feats, atol=2e-2, rtol=2e-2), \
        f"mismatch vs reference: max|diff|={max_err}"
    print("KERNEL_OK")
</pallas_src>

<mosaic_0001>
module attributes {stable_mosaic.version = 11 : i64} {
  func.func @encoder_kernel(%arg0: i32, %arg1: memref<8x96xf32, #tpu.memory_space<vmem>>, %arg2: memref<8x2xi32, #tpu.memory_space<vmem>>, %arg3: memref<24x24xf32, #tpu.memory_space<vmem>>, %arg4: memref<96x384xf32, #tpu.memory_space<vmem>>, %arg5: memref<1x384xf32, #tpu.memory_space<vmem>>, %arg6: memref<1x128xf32, #tpu.memory_space<vmem>>, %arg7: memref<2x1x128xf32, #tpu.memory_space<vmem>>, %arg8: memref<2x1x128xf32, #tpu.memory_space<vmem>>, %arg9: memref<2x128x384xf32, #tpu.memory_space<vmem>>, %arg10: memref<2x1x384xf32, #tpu.memory_space<vmem>>, %arg11: memref<2x128x128xf32, #tpu.memory_space<vmem>>, %arg12: memref<2x1x128xf32, #tpu.memory_space<vmem>>, %arg13: memref<2x1x128xf32, #tpu.memory_space<vmem>>, %arg14: memref<2x1x128xf32, #tpu.memory_space<vmem>>, %arg15: memref<2x128x512xf32, #tpu.memory_space<vmem>>, %arg16: memref<2x1x512xf32, #tpu.memory_space<vmem>>, %arg17: memref<2x512x128xf32, #tpu.memory_space<vmem>>, %arg18: memref<2x1x128xf32, #tpu.memory_space<vmem>>, %arg19: memref<1x128xf32, #tpu.memory_space<vmem>>, %arg20: memref<1x128xf32, #tpu.memory_space<vmem>>, %arg21: memref<24x128xf32, #tpu.memory_space<vmem>>) attributes {dimension_semantics = [#tpu.dimension_semantics<arbitrary>], iteration_bounds = array<i64: 1>, scalar_prefetch = 0 : i64, scratch_operands = 0 : i64, tpu.core_type = #tpu.core_type<tc>, window_params = [{pipeline_mode = #tpu.pipeline_mode<synchronous>, transform_indices = @transform_0, window_bounds = array<i64: 8, 96>}, {pipeline_mode = #tpu.pipeline_mode<synchronous>, transform_indices = @transform_1, window_bounds = array<i64: 8, 2>}, {pipeline_mode = #tpu.pipeline_mode<synchronous>, transform_indices = @transform_2, window_bounds = array<i64: 24, 24>}, {pipeline_mode = #tpu.pipeline_mode<synchronous>, transform_indices = @transform_3, window_bounds = array<i64: 96, 384>}, {pipeline_mode = #tpu.pipeline_mode<synchronous>, transform_indices = @transform_4, window_bounds = array<i64: 1, 384>}, {pipeline_mode = #tpu.pipeline_mode<synchronous>, transform_indices = @transform_5, window_bounds = array<i64: 1, 128>}, {pipeline_mode = #tpu.pipeline_mode<synchronous>, transform_indices = @transform_6, window_bounds = array<i64: 2, 1, 128>}, {pipeline_mode = #tpu.pipeline_mode<synchronous>, transform_indices = @transform_7, window_bounds = array<i64: 2, 1, 128>}, {pipeline_mode = #tpu.pipeline_mode<synchronous>, transform_indices = @transform_8, window_bounds = array<i64: 2, 128, 384>}, {pipeline_mode = #tpu.pipeline_mode<synchronous>, transform_indices = @transform_9, window_bounds = array<i64: 2, 1, 384>}, {pipeline_mode = #tpu.pipeline_mode<synchronous>, transform_indices = @transform_10, window_bounds = array<i64: 2, 128, 128>}, {pipeline_mode = #tpu.pipeline_mode<synchronous>, transform_indices = @transform_11, window_bounds = array<i64: 2, 1, 128>}, {pipeline_mode = #tpu.pipeline_mode<synchronous>, transform_indices = @transform_12, window_bounds = array<i64: 2, 1, 128>}, {pipeline_mode = #tpu.pipeline_mode<synchronous>, transform_indices = @transform_13, window_bounds = array<i64: 2, 1, 128>}, {pipeline_mode = #tpu.pipeline_mode<synchronous>, transform_indices = @transform_14, window_bounds = array<i64: 2, 128, 512>}, {pipeline_mode = #tpu.pipeline_mode<synchronous>, transform_indices = @transform_15, window_bounds = array<i64: 2, 1, 512>}, {pipeline_mode = #tpu.pipeline_mode<synchronous>, transform_indices = @transform_16, window_bounds = array<i64: 2, 512, 128>}, {pipeline_mode = #tpu.pipeline_mode<synchronous>, transform_indices = @transform_17, window_bounds = array<i64: 2, 1, 128>}, {pipeline_mode = #tpu.pipeline_mode<synchronous>, transform_indices = @transform_18, window_bounds = array<i64: 1, 128>}, {pipeline_mode = #tpu.pipeline_mode<synchronous>, transform_indices = @transform_19, window_bounds = array<i64: 1, 128>}, {pipeline_mode = #tpu.pipeline_mode<synchronous>, transform_indices = @transform_20, window_bounds = array<i64: 24, 128>}]} {
    %c0 = arith.constant 0 : index
    %c0_0 = arith.constant 0 : index
    %0 = vector.load %arg1[%c0, %c0_0] : memref<8x96xf32, #tpu.memory_space<vmem>>, vector<8x96xf32>
    %c0_1 = arith.constant 0 : index
    %c0_2 = arith.constant 0 : index
    %1 = vector.load %arg4[%c0_1, %c0_2] : memref<96x384xf32, #tpu.memory_space<vmem>>, vector<96x384xf32>
    %cst = arith.constant dense<0.000000e+00> : vector<8x384xf32>
    %2 = tpu.matmul %0, %1, %cst {dimension_numbers = #tpu.dot_dimension_numbers<[1], [0], [0], [1], [0, 0, 1, 1], [], []>} : vector<8x96xf32>, vector<96x384xf32>, vector<8x384xf32> -> vector<8x384xf32>
    %c0_3 = arith.constant 0 : index
    %c0_4 = arith.constant 0 : index
    %3 = vector.load %arg5[%c0_3, %c0_4] : memref<1x384xf32, #tpu.memory_space<vmem>>, vector<1x384xf32>
    %4 = vector.broadcast %3 : vector<1x384xf32> to vector<8x384xf32>
    %5 = arith.addf %2, %4 : vector<8x384xf32>
    %6 = vector.extract_strided_slice %5 {offsets = [0, 0], sizes = [8, 128], strides = [1, 1]} : vector<8x384xf32> to vector<8x128xf32>
    %7 = vector.extract_strided_slice %5 {offsets = [0, 128], sizes = [8, 128], strides = [1, 1]} : vector<8x384xf32> to vector<8x128xf32>
    %8 = vector.extract_strided_slice %5 {offsets = [0, 256], sizes = [8, 128], strides = [1, 1]} : vector<8x384xf32> to vector<8x128xf32>
    %c0_5 = arith.constant 0 : index
    %c0_6 = arith.constant 0 : index
    %9 = vector.load %arg2[%c0_5, %c0_6] : memref<8x2xi32, #tpu.memory_space<vmem>>, vector<8x2xi32>
    %c0_7 = arith.constant 0 : index
    %c0_8 = arith.constant 0 : index
    %10 = vector.load %arg6[%c0_7, %c0_8] : memref<1x128xf32, #tpu.memory_space<vmem>>, vector<1x128xf32>
    %11 = vector.shape_cast %10 : vector<1x128xf32> to vector<1x128xf32>
    %12 = vector.broadcast %11 : vector<1x128xf32> to vector<8x128xf32>
    %13 = vector.extract_strided_slice %9 {offsets = [0, 0], sizes = [8, 1], strides = [1, 1]} : vector<8x2xi32> to vector<8x1xi32>
    %14 = vector.shape_cast %13 : vector<8x1xi32> to vector<8x1xi32>
    %15 = vector.broadcast %14 : vector<8x1xi32> to vector<8x128xi32>
    %c0_i32 = arith.constant 0 : i32
    %16 = vector.broadcast %c0_i32 : i32 to vector<8x128xi32>
    %17 = arith.cmpi eq, %15, %16 : vector<8x128xi32>
    %c1_i32 = arith.constant 1 : i32
    %18 = vector.broadcast %c1_i32 : i32 to vector<8x128xi32>
    %19 = arith.cmpi eq, %15, %18 : vector<8x128xi32>
    %20 = arith.select %19, %7, %8 : vector<8x128xi1>, vector<8x128xf32>
    %21 = arith.select %17, %6, %20 : vector<8x128xi1>, vector<8x128xf32>
    %22 = vector.extract_strided_slice %9 {offsets = [0, 1], sizes = [8, 1], strides = [1, 1]} : vector<8x2xi32> to vector<8x1xi32>
    %23 = vector.shape_cast %22 : vector<8x1xi32> to vector<8x1xi32>
    %24 = vector.broadcast %23 : vector<8x1xi32> to vector<8x128xi32>
    %c0_i32_9 = arith.constant 0 : i32
    %25 = vector.broadcast %c0_i32_9 : i32 to vector<8x128xi32>
    %26 = arith.cmpi eq, %24, %25 : vector<8x128xi32>
    %c1_i32_10 = arith.constant 1 : i32
    %27 = vector.broadcast %c1_i32_10 : i32 to vector<8x128xi32>
    %28 = arith.cmpi eq, %24, %27 : vector<8x128xi32>
    %29 = arith.select %28, %7, %8 : vector<8x128xi1>, vector<8x128xf32>
    %30 = arith.select %26, %6, %29 : vector<8x128xi1>, vector<8x128xf32>
    %31 = tpu.concatenate %12, %21, %30 in 0 : vector<8x128xf32>, vector<8x128xf32>, vector<8x128xf32> -> vector<24x128xf32>
    %c0_11 = arith.constant 0 : index
    %c0_12 = arith.constant 0 : index
    %32 = vector.load %arg3[%c0_11, %c0_12] : memref<24x24xf32, #tpu.memory_space<vmem>>, vector<24x24xf32>
    %c0_13 = arith.constant 0 : index
    %c0_14 = arith.constant 0 : index
    %c0_15 = arith.constant 0 : index
    %33 = vector.load %arg7[%c0_13, %c0_14, %c0_15] : memref<2x1x128xf32, #tpu.memory_space<vmem>>, vector<1x1x128xf32>
    %34 = vector.shape_cast %33 : vector<1x1x128xf32> to vector<1x128xf32>
    %c0_16 = arith.constant 0 : index
    %c0_17 = arith.constant 0 : index
    %c0_18 = arith.constant 0 : index
    %35 = vector.load %arg8[%c0_16, %c0_17, %c0_18] : memref<2x1x128xf32, #tpu.memory_space<vmem>>, vector<1x1x128xf32>
    %36 = vector.shape_cast %35 : vector<1x1x128xf32> to vector<1x128xf32>
    %cst_19 = arith.constant dense<0.000000e+00> : vector<24xf32>
    %37 = vector.multi_reduction <add>, %31, %cst_19 [1] : vector<24x128xf32> to vector<24xf32>
    %38 = vector.shape_cast %37 : vector<24xf32> to vector<24x1xf32>
    %cst_20 = arith.constant 1.280000e+02 : f32
    %39 = vector.broadcast %cst_20 : f32 to vector<24x1xf32>
    %40 = arith.divf %38, %39 : vector<24x1xf32>
    %41 = vector.broadcast %40 : vector<24x1xf32> to vector<24x128xf32>
    %42 = arith.subf %31, %41 : vector<24x128xf32>
    %43 = arith.mulf %42, %42 : vector<24x128xf32>
    %cst_21 = arith.constant dense<0.000000e+00> : vector<24xf32>
    %44 = vector.multi_reduction <add>, %43, %cst_21 [1] : vector<24x128xf32> to vector<24xf32>
    %45 = vector.shape_cast %44 : vector<24xf32> to vector<24x1xf32>
    %cst_22 = arith.constant 1.280000e+02 : f32
    %46 = vector.broadcast %cst_22 : f32 to vector<24x1xf32>
    %47 = arith.divf %45, %46 : vector<24x1xf32>
    %cst_23 = arith.constant 9.99999974E-6 : f32
    %48 = vector.broadcast %cst_23 : f32 to vector<24x1xf32>
    %49 = arith.addf %47, %48 : vector<24x1xf32>
    %50 = math.rsqrt %49 : vector<24x1xf32>
    %51 = vector.broadcast %50 : vector<24x1xf32> to vector<24x128xf32>
    %52 = arith.mulf %42, %51 : vector<24x128xf32>
    %53 = vector.broadcast %34 : vector<1x128xf32> to vector<24x128xf32>
    %54 = arith.mulf %52, %53 : vector<24x128xf32>
    %55 = vector.broadcast %36 : vector<1x128xf32> to vector<24x128xf32>
    %56 = arith.addf %54, %55 : vector<24x128xf32>
    %c0_24 = arith.constant 0 : index
    %c0_25 = arith.constant 0 : index
    %c0_26 = arith.constant 0 : index
    %57 = vector.load %arg9[%c0_24, %c0_25, %c0_26] : memref<2x128x384xf32, #tpu.memory_space<vmem>>, vector<1x128x384xf32>
    %58 = vector.shape_cast %57 : vector<1x128x384xf32> to vector<128x384xf32>
    %cst_27 = arith.constant dense<0.000000e+00> : vector<24x384xf32>
    %59 = tpu.matmul %56, %58, %cst_27 {dimension_numbers = #tpu.dot_dimension_numbers<[1], [0], [0], [1], [0, 0, 1, 1], [], []>} : vector<24x128xf32>, vector<128x384xf32>, vector<24x384xf32> -> vector<24x384xf32>
    %c0_28 = arith.constant 0 : index
    %c0_29 = arith.constant 0 : index
    %c0_30 = arith.constant 0 : index
    %60 = vector.load %arg10[%c0_28, %c0_29, %c0_30] : memref<2x1x384xf32, #tpu.memory_space<vmem>>, vector<1x1x384xf32>
    %61 = vector.shape_cast %60 : vector<1x1x384xf32> to vector<1x384xf32>
    %62 = vector.broadcast %61 : vector<1x384xf32> to vector<24x384xf32>
    %63 = arith.addf %59, %62 : vector<24x384xf32>
    %64 = vector.extract_strided_slice %63 {offsets = [0, 0], sizes = [24, 128], strides = [1, 1]} : vector<24x384xf32> to vector<24x128xf32>
    %65 = vector.extract_strided_slice %63 {offsets = [0, 128], sizes = [24, 128], strides = [1, 1]} : vector<24x384xf32> to vector<24x128xf32>
    %66 = vector.extract_strided_slice %63 {offsets = [0, 256], sizes = [24, 128], strides = [1, 1]} : vector<24x384xf32> to vector<24x128xf32>
    %cst_31 = arith.constant dense<0.000000e+00> : vector<24x24xf32>
    %67 = tpu.matmul %64, %65, %cst_31 {dimension_numbers = #tpu.dot_dimension_numbers<[1], [1], [0], [0], [0, 0, 1, 0], [], []>} : vector<24x128xf32>, vector<24x128xf32>, vector<24x24xf32> -> vector<24x24xf32>
    %68 = arith.addf %67, %32 : vector<24x24xf32>
    %cst_32 = arith.constant dense<0xFF800000> : vector<24xf32>
    %69 = vector.multi_reduction <maximumf>, %68, %cst_32 [1] : vector<24x24xf32> to vector<24xf32>
    %70 = vector.shape_cast %69 : vector<24xf32> to vector<24x1xf32>
    %71 = vector.broadcast %70 : vector<24x1xf32> to vector<24x24xf32>
    %72 = arith.subf %68, %71 : vector<24x24xf32>
    %73 = math.exp %72 : vector<24x24xf32>
    %cst_33 = arith.constant dense<0.000000e+00> : vector<24xf32>
    %74 = vector.multi_reduction <add>, %73, %cst_33 [1] : vector<24x24xf32> to vector<24xf32>
    %75 = vector.shape_cast %74 : vector<24xf32> to vector<24x1xf32>
    %76 = vector.broadcast %75 : vector<24x1xf32> to vector<24x24xf32>
    %77 = arith.divf %73, %76 : vector<24x24xf32>
    %cst_34 = arith.constant dense<0.000000e+00> : vector<24x128xf32>
    %78 = tpu.matmul %77, %66, %cst_34 {dimension_numbers = #tpu.dot_dimension_numbers<[1], [0], [0], [1], [0, 0, 1, 1], [], []>} : vector<24x24xf32>, vector<24x128xf32>, vector<24x128xf32> -> vector<24x128xf32>
    %c0_35 = arith.constant 0 : index
    %c0_36 = arith.constant 0 : index
    %c0_37 = arith.constant 0 : index
    %79 = vector.load %arg11[%c0_35, %c0_36, %c0_37] : memref<2x128x128xf32, #tpu.memory_space<vmem>>, vector<1x128x128xf32>
    %80 = vector.shape_cast %79 : vector<1x128x128xf32> to vector<128x128xf32>
    %cst_38 = arith.constant dense<0.000000e+00> : vector<24x128xf32>
    %81 = tpu.matmul %78, %80, %cst_38 {dimension_numbers = #tpu.dot_dimension_numbers<[1], [0], [0], [1], [0, 0, 1, 1], [], []>} : vector<24x128xf32>, vector<128x128xf32>, vector<24x128xf32> -> vector<24x128xf32>
    %c0_39 = arith.constant 0 : index
    %c0_40 = arith.constant 0 : index
    %c0_41 = arith.constant 0 : index
    %82 = vector.load %arg12[%c0_39, %c0_40, %c0_41] : memref<2x1x128xf32, #tpu.memory_space<vmem>>, vector<1x1x128xf32>
    %83 = vector.shape_cast %82 : vector<1x1x128xf32> to vector<1x128xf32>
    %84 = vector.broadcast %83 : vector<1x128xf32> to vector<24x128xf32>
    %85 = arith.addf %81, %84 : vector<24x128xf32>
    %86 = arith.addf %31, %85 : vector<24x128xf32>
    %c0_42 = arith.constant 0 : index
    %c0_43 = arith.constant 0 : index
    %c0_44 = arith.constant 0 : index
    %87 = vector.load %arg13[%c0_42, %c0_43, %c0_44] : memref<2x1x128xf32, #tpu.memory_space<vmem>>, vector<1x1x128xf32>
    %88 = vector.shape_cast %87 : vector<1x1x128xf32> to vector<1x128xf32>
    %c0_45 = arith.constant 0 : index
    %c0_46 = arith.constant 0 : index
    %c0_47 = arith.constant 0 : index
    %89 = vector.load %arg14[%c0_45, %c0_46, %c0_47] : memref<2x1x128xf32, #tpu.memory_space<vmem>>, vector<1x1x128xf32>
    %90 = vector.shape_cast %89 : vector<1x1x128xf32> to vector<1x128xf32>
    %cst_48 = arith.constant dense<0.000000e+00> : vector<24xf32>
    %91 = vector.multi_reduction <add>, %86, %cst_48 [1] : vector<24x128xf32> to vector<24xf32>
    %92 = vector.shape_cast %91 : vector<24xf32> to vector<24x1xf32>
    %cst_49 = arith.constant 1.280000e+02 : f32
    %93 = vector.broadcast %cst_49 : f32 to vector<24x1xf32>
    %94 = arith.divf %92, %93 : vector<24x1xf32>
    %95 = vector.broadcast %94 : vector<24x1xf32> to vector<24x128xf32>
    %96 = arith.subf %86, %95 : vector<24x128xf32>
    %97 = arith.mulf %96, %96 : vector<24x128xf32>
    %cst_50 = arith.constant dense<0.000000e+00> : vector<24xf32>
    %98 = vector.multi_reduction <add>, %97, %cst_50 [1] : vector<24x128xf32> to vector<24xf32>
    %99 = vector.shape_cast %98 : vector<24xf32> to vector<24x1xf32>
    %cst_51 = arith.constant 1.280000e+02 : f32
    %100 = vector.broadcast %cst_51 : f32 to vector<24x1xf32>
    %101 = arith.divf %99, %100 : vector<24x1xf32>
    %cst_52 = arith.constant 9.99999974E-6 : f32
    %102 = vector.broadcast %cst_52 : f32 to vector<24x1xf32>
    %103 = arith.addf %101, %102 : vector<24x1xf32>
    %104 = math.rsqrt %103 : vector<24x1xf32>
    %105 = vector.broadcast %104 : vector<24x1xf32> to vector<24x128xf32>
    %106 = arith.mulf %96, %105 : vector<24x128xf32>
    %107 = vector.broadcast %88 : vector<1x128xf32> to vector<24x128xf32>
    %108 = arith.mulf %106, %107 : vector<24x128xf32>
    %109 = vector.broadcast %90 : vector<1x128xf32> to vector<24x128xf32>
    %110 = arith.addf %108, %109 : vector<24x128xf32>
    %c0_53 = arith.constant 0 : index
    %c0_54 = arith.constant 0 : index
    %c0_55 = arith.constant 0 : index
    %111 = vector.load %arg15[%c0_53, %c0_54, %c0_55] : memref<2x128x512xf32, #tpu.memory_space<vmem>>, vector<1x128x512xf32>
    %112 = vector.shape_cast %111 : vector<1x128x512xf32> to vector<128x512xf32>
    %cst_56 = arith.constant dense<0.000000e+00> : vector<24x512xf32>
    %113 = tpu.matmul %110, %112, %cst_56 {dimension_numbers = #tpu.dot_dimension_numbers<[1], [0], [0], [1], [0, 0, 1, 1], [], []>} : vector<24x128xf32>, vector<128x512xf32>, vector<24x512xf32> -> vector<24x512xf32>
    %c0_57 = arith.constant 0 : index
    %c0_58 = arith.constant 0 : index
    %c0_59 = arith.constant 0 : index
    %114 = vector.load %arg16[%c0_57, %c0_58, %c0_59] : memref<2x1x512xf32, #tpu.memory_space<vmem>>, vector<1x1x512xf32>
    %115 = vector.shape_cast %114 : vector<1x1x512xf32> to vector<1x512xf32>
    %116 = vector.broadcast %115 : vector<1x512xf32> to vector<24x512xf32>
    %117 = arith.addf %113, %116 : vector<24x512xf32>
    %cst_60 = arith.constant 5.000000e-01 : f32
    %118 = vector.broadcast %cst_60 : f32 to vector<24x512xf32>
    %119 = arith.mulf %118, %117 : vector<24x512xf32>
    %cst_61 = arith.constant 4.471500e-02 : f32
    %120 = vector.broadcast %cst_61 : f32 to vector<24x512xf32>
    %121 = arith.mulf %120, %117 : vector<24x512xf32>
    %122 = arith.mulf %121, %117 : vector<24x512xf32>
    %123 = arith.mulf %122, %117 : vector<24x512xf32>
    %124 = arith.addf %117, %123 : vector<24x512xf32>
    %cst_62 = arith.constant 0.797884583 : f32
    %125 = vector.broadcast %cst_62 : f32 to vector<24x512xf32>
    %126 = arith.mulf %125, %124 : vector<24x512xf32>
    %127 = math.tanh %126 : vector<24x512xf32>
    %cst_63 = arith.constant 1.000000e+00 : f32
    %128 = vector.broadcast %cst_63 : f32 to vector<24x512xf32>
    %129 = arith.addf %128, %127 : vector<24x512xf32>
    %130 = arith.mulf %119, %129 : vector<24x512xf32>
    %c0_64 = arith.constant 0 : index
    %c0_65 = arith.constant 0 : index
    %c0_66 = arith.constant 0 : index
    %131 = vector.load %arg17[%c0_64, %c0_65, %c0_66] : memref<2x512x128xf32, #tpu.memory_space<vmem>>, vector<1x512x128xf32>
    %132 = vector.shape_cast %131 : vector<1x512x128xf32> to vector<512x128xf32>
    %cst_67 = arith.constant dense<0.000000e+00> : vector<24x128xf32>
    %133 = tpu.matmul %130, %132, %cst_67 {dimension_numbers = #tpu.dot_dimension_numbers<[1], [0], [0], [1], [0, 0, 1, 1], [], []>} : vector<24x512xf32>, vector<512x128xf32>, vector<24x128xf32> -> vector<24x128xf32>
    %c0_68 = arith.constant 0 : index
    %c0_69 = arith.constant 0 : index
    %c0_70 = arith.constant 0 : index
    %134 = vector.load %arg18[%c0_68, %c0_69, %c0_70] : memref<2x1x128xf32, #tpu.memory_space<vmem>>, vector<1x1x128xf32>
    %135 = vector.shape_cast %134 : vector<1x1x128xf32> to vector<1x128xf32>
    %136 = vector.broadcast %135 : vector<1x128xf32> to vector<24x128xf32>
    %137 = arith.addf %133, %136 : vector<24x128xf32>
    %138 = arith.addf %86, %137 : vector<24x128xf32>
    %c1 = arith.constant 1 : index
    %c0_71 = arith.constant 0 : index
    %c0_72 = arith.constant 0 : index
    %139 = vector.load %arg7[%c1, %c0_71, %c0_72] : memref<2x1x128xf32, #tpu.memory_space<vmem>>, vector<1x1x128xf32>
    %140 = vector.shape_cast %139 : vector<1x1x128xf32> to vector<1x128xf32>
    %c1_73 = arith.constant 1 : index
    %c0_74 = arith.constant 0 : index
    %c0_75 = arith.constant 0 : index
    %141 = vector.load %arg8[%c1_73, %c0_74, %c0_75] : memref<2x1x128xf32, #tpu.memory_space<vmem>>, vector<1x1x128xf32>
    %142 = vector.shape_cast %141 : vector<1x1x128xf32> to vector<1x128xf32>
    %cst_76 = arith.constant dense<0.000000e+00> : vector<24xf32>
    %143 = vector.multi_reduction <add>, %138, %cst_76 [1] : vector<24x128xf32> to vector<24xf32>
    %144 = vector.shape_cast %143 : vector<24xf32> to vector<24x1xf32>
    %cst_77 = arith.constant 1.280000e+02 : f32
    %145 = vector.broadcast %cst_77 : f32 to vector<24x1xf32>
    %146 = arith.divf %144, %145 : vector<24x1xf32>
    %147 = vector.broadcast %146 : vector<24x1xf32> to vector<24x128xf32>
    %148 = arith.subf %138, %147 : vector<24x128xf32>
    %149 = arith.mulf %148, %148 : vector<24x128xf32>
    %cst_78 = arith.constant dense<0.000000e+00> : vector<24xf32>
    %150 = vector.multi_reduction <add>, %149, %cst_78 [1] : vector<24x128xf32> to vector<24xf32>
    %151 = vector.shape_cast %150 : vector<24xf32> to vector<24x1xf32>
    %cst_79 = arith.constant 1.280000e+02 : f32
    %152 = vector.broadcast %cst_79 : f32 to vector<24x1xf32>
    %153 = arith.divf %151, %152 : vector<24x1xf32>
    %cst_80 = arith.constant 9.99999974E-6 : f32
    %154 = vector.broadcast %cst_80 : f32 to vector<24x1xf32>
    %155 = arith.addf %153, %154 : vector<24x1xf32>
    %156 = math.rsqrt %155 : vector<24x1xf32>
    %157 = vector.broadcast %156 : vector<24x1xf32> to vector<24x128xf32>
    %158 = arith.mulf %148, %157 : vector<24x128xf32>
    %159 = vector.broadcast %140 : vector<1x128xf32> to vector<24x128xf32>
    %160 = arith.mulf %158, %159 : vector<24x128xf32>
    %161 = vector.broadcast %142 : vector<1x128xf32> to vector<24x128xf32>
    %162 = arith.addf %160, %161 : vector<24x128xf32>
    %c1_81 = arith.constant 1 : index
    %c0_82 = arith.constant 0 : index
    %c0_83 = arith.constant 0 : index
    %163 = vector.load %arg9[%c1_81, %c0_82, %c0_83] : memref<2x128x384xf32, #tpu.memory_space<vmem>>, vector<1x128x384xf32>
    %164 = vector.shape_cast %163 : vector<1x128x384xf32> to vector<128x384xf32>
    %cst_84 = arith.constant dense<0.000000e+00> : vector<24x384xf32>
    %165 = tpu.matmul %162, %164, %cst_84 {dimension_numbers = #tpu.dot_dimension_numbers<[1], [0], [0], [1], [0, 0, 1, 1], [], []>} : vector<24x128xf32>, vector<128x384xf32>, vector<24x384xf32> -> vector<24x384xf32>
    %c1_85 = arith.constant 1 : index
    %c0_86 = arith.constant 0 : index
    %c0_87 = arith.constant 0 : index
    %166 = vector.load %arg10[%c1_85, %c0_86, %c0_87] : memref<2x1x384xf32, #tpu.memory_space<vmem>>, vector<1x1x384xf32>
    %167 = vector.shape_cast %166 : vector<1x1x384xf32> to vector<1x384xf32>
    %168 = vector.broadcast %167 : vector<1x384xf32> to vector<24x384xf32>
    %169 = arith.addf %165, %168 : vector<24x384xf32>
    %170 = vector.extract_strided_slice %169 {offsets = [0, 0], sizes = [24, 128], strides = [1, 1]} : vector<24x384xf32> to vector<24x128xf32>
    %171 = vector.extract_strided_slice %169 {offsets = [0, 128], sizes = [24, 128], strides = [1, 1]} : vector<24x384xf32> to vector<24x128xf32>
    %172 = vector.extract_strided_slice %169 {offsets = [0, 256], sizes = [24, 128], strides = [1, 1]} : vector<24x384xf32> to vector<24x128xf32>
    %cst_88 = arith.constant dense<0.000000e+00> : vector<24x24xf32>
    %173 = tpu.matmul %170, %171, %cst_88 {dimension_numbers = #tpu.dot_dimension_numbers<[1], [1], [0], [0], [0, 0, 1, 0], [], []>} : vector<24x128xf32>, vector<24x128xf32>, vector<24x24xf32> -> vector<24x24xf32>
    %174 = arith.addf %173, %32 : vector<24x24xf32>
    %cst_89 = arith.constant dense<0xFF800000> : vector<24xf32>
    %175 = vector.multi_reduction <maximumf>, %174, %cst_89 [1] : vector<24x24xf32> to vector<24xf32>
    %176 = vector.shape_cast %175 : vector<24xf32> to vector<24x1xf32>
    %177 = vector.broadcast %176 : vector<24x1xf32> to vector<24x24xf32>
    %178 = arith.subf %174, %177 : vector<24x24xf32>
    %179 = math.exp %178 : vector<24x24xf32>
    %cst_90 = arith.constant dense<0.000000e+00> : vector<24xf32>
    %180 = vector.multi_reduction <add>, %179, %cst_90 [1] : vector<24x24xf32> to vector<24xf32>
    %181 = vector.shape_cast %180 : vector<24xf32> to vector<24x1xf32>
    %182 = vector.broadcast %181 : vector<24x1xf32> to vector<24x24xf32>
    %183 = arith.divf %179, %182 : vector<24x24xf32>
    %cst_91 = arith.constant dense<0.000000e+00> : vector<24x128xf32>
    %184 = tpu.matmul %183, %172, %cst_91 {dimension_numbers = #tpu.dot_dimension_numbers<[1], [0], [0], [1], [0, 0, 1, 1], [], []>} : vector<24x24xf32>, vector<24x128xf32>, vector<24x128xf32> -> vector<24x128xf32>
    %c1_92 = arith.constant 1 : index
    %c0_93 = arith.constant 0 : index
    %c0_94 = arith.constant 0 : index
    %185 = vector.load %arg11[%c1_92, %c0_93, %c0_94] : memref<2x128x128xf32, #tpu.memory_space<vmem>>, vector<1x128x128xf32>
    %186 = vector.shape_cast %185 : vector<1x128x128xf32> to vector<128x128xf32>
    %cst_95 = arith.constant dense<0.000000e+00> : vector<24x128xf32>
    %187 = tpu.matmul %184, %186, %cst_95 {dimension_numbers = #tpu.dot_dimension_numbers<[1], [0], [0], [1], [0, 0, 1, 1], [], []>} : vector<24x128xf32>, vector<128x128xf32>, vector<24x128xf32> -> vector<24x128xf32>
    %c1_96 = arith.constant 1 : index
    %c0_97 = arith.constant 0 : index
    %c0_98 = arith.constant 0 : index
    %188 = vector.load %arg12[%c1_96, %c0_97, %c0_98] : memref<2x1x128xf32, #tpu.memory_space<vmem>>, vector<1x1x128xf32>
    %189 = vector.shape_cast %188 : vector<1x1x128xf32> to vector<1x128xf32>
    %190 = vector.broadcast %189 : vector<1x128xf32> to vector<24x128xf32>
    %191 = arith.addf %187, %190 : vector<24x128xf32>
    %192 = arith.addf %138, %191 : vector<24x128xf32>
    %c1_99 = arith.constant 1 : index
    %c0_100 = arith.constant 0 : index
    %c0_101 = arith.constant 0 : index
    %193 = vector.load %arg13[%c1_99, %c0_100, %c0_101] : memref<2x1x128xf32, #tpu.memory_space<vmem>>, vector<1x1x128xf32>
    %194 = vector.shape_cast %193 : vector<1x1x128xf32> to vector<1x128xf32>
    %c1_102 = arith.constant 1 : index
    %c0_103 = arith.constant 0 : index
    %c0_104 = arith.constant 0 : index
    %195 = vector.load %arg14[%c1_102, %c0_103, %c0_104] : memref<2x1x128xf32, #tpu.memory_space<vmem>>, vector<1x1x128xf32>
    %196 = vector.shape_cast %195 : vector<1x1x128xf32> to vector<1x128xf32>
    %cst_105 = arith.constant dense<0.000000e+00> : vector<24xf32>
    %197 = vector.multi_reduction <add>, %192, %cst_105 [1] : vector<24x128xf32> to vector<24xf32>
    %198 = vector.shape_cast %197 : vector<24xf32> to vector<24x1xf32>
    %cst_106 = arith.constant 1.280000e+02 : f32
    %199 = vector.broadcast %cst_106 : f32 to vector<24x1xf32>
    %200 = arith.divf %198, %199 : vector<24x1xf32>
    %201 = vector.broadcast %200 : vector<24x1xf32> to vector<24x128xf32>
    %202 = arith.subf %192, %201 : vector<24x128xf32>
    %203 = arith.mulf %202, %202 : vector<24x128xf32>
    %cst_107 = arith.constant dense<0.000000e+00> : vector<24xf32>
    %204 = vector.multi_reduction <add>, %203, %cst_107 [1] : vector<24x128xf32> to vector<24xf32>
    %205 = vector.shape_cast %204 : vector<24xf32> to vector<24x1xf32>
    %cst_108 = arith.constant 1.280000e+02 : f32
    %206 = vector.broadcast %cst_108 : f32 to vector<24x1xf32>
    %207 = arith.divf %205, %206 : vector<24x1xf32>
    %cst_109 = arith.constant 9.99999974E-6 : f32
    %208 = vector.broadcast %cst_109 : f32 to vector<24x1xf32>
    %209 = arith.addf %207, %208 : vector<24x1xf32>
    %210 = math.rsqrt %209 : vector<24x1xf32>
    %211 = vector.broadcast %210 : vector<24x1xf32> to vector<24x128xf32>
    %212 = arith.mulf %202, %211 : vector<24x128xf32>
    %213 = vector.broadcast %194 : vector<1x128xf32> to vector<24x128xf32>
    %214 = arith.mulf %212, %213 : vector<24x128xf32>
    %215 = vector.broadcast %196 : vector<1x128xf32> to vector<24x128xf32>
    %216 = arith.addf %214, %215 : vector<24x128xf32>
    %c1_110 = arith.constant 1 : index
    %c0_111 = arith.constant 0 : index
    %c0_112 = arith.constant 0 : index
    %217 = vector.load %arg15[%c1_110, %c0_111, %c0_112] : memref<2x128x512xf32, #tpu.memory_space<vmem>>, vector<1x128x512xf32>
    %218 = vector.shape_cast %217 : vector<1x128x512xf32> to vector<128x512xf32>
    %cst_113 = arith.constant dense<0.000000e+00> : vector<24x512xf32>
    %219 = tpu.matmul %216, %218, %cst_113 {dimension_numbers = #tpu.dot_dimension_numbers<[1], [0], [0], [1], [0, 0, 1, 1], [], []>} : vector<24x128xf32>, vector<128x512xf32>, vector<24x512xf32> -> vector<24x512xf32>
    %c1_114 = arith.constant 1 : index
    %c0_115 = arith.constant 0 : index
    %c0_116 = arith.constant 0 : index
    %220 = vector.load %arg16[%c1_114, %c0_115, %c0_116] : memref<2x1x512xf32, #tpu.memory_space<vmem>>, vector<1x1x512xf32>
    %221 = vector.shape_cast %220 : vector<1x1x512xf32> to vector<1x512xf32>
    %222 = vector.broadcast %221 : vector<1x512xf32> to vector<24x512xf32>
    %223 = arith.addf %219, %222 : vector<24x512xf32>
    %cst_117 = arith.constant 5.000000e-01 : f32
    %224 = vector.broadcast %cst_117 : f32 to vector<24x512xf32>
    %225 = arith.mulf %224, %223 : vector<24x512xf32>
    %cst_118 = arith.constant 4.471500e-02 : f32
    %226 = vector.broadcast %cst_118 : f32 to vector<24x512xf32>
    %227 = arith.mulf %226, %223 : vector<24x512xf32>
    %228 = arith.mulf %227, %223 : vector<24x512xf32>
    %229 = arith.mulf %228, %223 : vector<24x512xf32>
    %230 = arith.addf %223, %229 : vector<24x512xf32>
    %cst_119 = arith.constant 0.797884583 : f32
    %231 = vector.broadcast %cst_119 : f32 to vector<24x512xf32>
    %232 = arith.mulf %231, %230 : vector<24x512xf32>
    %233 = math.tanh %232 : vector<24x512xf32>
    %cst_120 = arith.constant 1.000000e+00 : f32
    %234 = vector.broadcast %cst_120 : f32 to vector<24x512xf32>
    %235 = arith.addf %234, %233 : vector<24x512xf32>
    %236 = arith.mulf %225, %235 : vector<24x512xf32>
    %c1_121 = arith.constant 1 : index
    %c0_122 = arith.constant 0 : index
    %c0_123 = arith.constant 0 : index
    %237 = vector.load %arg17[%c1_121, %c0_122, %c0_123] : memref<2x512x128xf32, #tpu.memory_space<vmem>>, vector<1x512x128xf32>
    %238 = vector.shape_cast %237 : vector<1x512x128xf32> to vector<512x128xf32>
    %cst_124 = arith.constant dense<0.000000e+00> : vector<24x128xf32>
    %239 = tpu.matmul %236, %238, %cst_124 {dimension_numbers = #tpu.dot_dimension_numbers<[1], [0], [0], [1], [0, 0, 1, 1], [], []>} : vector<24x512xf32>, vector<512x128xf32>, vector<24x128xf32> -> vector<24x128xf32>
    %c1_125 = arith.constant 1 : index
    %c0_126 = arith.constant 0 : index
    %c0_127 = arith.constant 0 : index
    %240 = vector.load %arg18[%c1_125, %c0_126, %c0_127] : memref<2x1x128xf32, #tpu.memory_space<vmem>>, vector<1x1x128xf32>
    %241 = vector.shape_cast %240 : vector<1x1x128xf32> to vector<1x128xf32>
    %242 = vector.broadcast %241 : vector<1x128xf32> to vector<24x128xf32>
    %243 = arith.addf %239, %242 : vector<24x128xf32>
    %244 = arith.addf %192, %243 : vector<24x128xf32>
    %c0_128 = arith.constant 0 : index
    %c0_129 = arith.constant 0 : index
    %245 = vector.load %arg19[%c0_128, %c0_129] : memref<1x128xf32, #tpu.memory_space<vmem>>, vector<1x128xf32>
    %c0_130 = arith.constant 0 : index
    %c0_131 = arith.constant 0 : index
    %246 = vector.load %arg20[%c0_130, %c0_131] : memref<1x128xf32, #tpu.memory_space<vmem>>, vector<1x128xf32>
    %cst_132 = arith.constant dense<0.000000e+00> : vector<24xf32>
    %247 = vector.multi_reduction <add>, %244, %cst_132 [1] : vector<24x128xf32> to vector<24xf32>
    %248 = vector.shape_cast %247 : vector<24xf32> to vector<24x1xf32>
    %cst_133 = arith.constant 1.280000e+02 : f32
    %249 = vector.broadcast %cst_133 : f32 to vector<24x1xf32>
    %250 = arith.divf %248, %249 : vector<24x1xf32>
    %251 = vector.broadcast %250 : vector<24x1xf32> to vector<24x128xf32>
    %252 = arith.subf %244, %251 : vector<24x128xf32>
    %253 = arith.mulf %252, %252 : vector<24x128xf32>
    %cst_134 = arith.constant dense<0.000000e+00> : vector<24xf32>
    %254 = vector.multi_reduction <add>, %253, %cst_134 [1] : vector<24x128xf32> to vector<24xf32>
    %255 = vector.shape_cast %254 : vector<24xf32> to vector<24x1xf32>
    %cst_135 = arith.constant 1.280000e+02 : f32
    %256 = vector.broadcast %cst_135 : f32 to vector<24x1xf32>
    %257 = arith.divf %255, %256 : vector<24x1xf32>
    %cst_136 = arith.constant 9.99999974E-6 : f32
    %258 = vector.broadcast %cst_136 : f32 to vector<24x1xf32>
    %259 = arith.addf %257, %258 : vector<24x1xf32>
    %260 = math.rsqrt %259 : vector<24x1xf32>
    %261 = vector.broadcast %260 : vector<24x1xf32> to vector<24x128xf32>
    %262 = arith.mulf %252, %261 : vector<24x128xf32>
    %263 = vector.broadcast %245 : vector<1x128xf32> to vector<24x128xf32>
    %264 = arith.mulf %262, %263 : vector<24x128xf32>
    %265 = vector.broadcast %246 : vector<1x128xf32> to vector<24x128xf32>
    %266 = arith.addf %264, %265 : vector<24x128xf32>
    %c0_137 = arith.constant 0 : index
    %c0_138 = arith.constant 0 : index
    %267 = vector.load %arg21[%c0_137, %c0_138] : memref<24x128xf32, #tpu.memory_space<vmem>>, vector<24x128xf32>
    tpu.vector_store %arg21[%c0_137, %c0_138], %266 {strides = array<i32>} : memref<24x128xf32, #tpu.memory_space<vmem>>, vector<24x128xf32>,
    return
  }
  func.func @transform_0(%arg0: i32) -> (i32, i32) {
    %c0_i32 = arith.constant 0 : i32
    %c0_i32_0 = arith.constant 0 : i32
    %c0_i32_1 = arith.constant 0 : i32
    return %c0_i32, %c0_i32_0 : i32, i32
  }
  func.func @transform_1(%arg0: i32) -> (i32, i32) {
    %c0_i32 = arith.constant 0 : i32
    %c0_i32_0 = arith.constant 0 : i32
    %c0_i32_1 = arith.constant 0 : i32
    return %c0_i32, %c0_i32_0 : i32, i32
  }
  func.func @transform_2(%arg0: i32) -> (i32, i32) {
    %c0_i32 = arith.constant 0 : i32
    %c0_i32_0 = arith.constant 0 : i32
    %c0_i32_1 = arith.constant 0 : i32
    return %c0_i32, %c0_i32_0 : i32, i32
  }
  func.func @transform_3(%arg0: i32) -> (i32, i32) {
    %c0_i32 = arith.constant 0 : i32
    %c0_i32_0 = arith.constant 0 : i32
    %c0_i32_1 = arith.constant 0 : i32
    return %c0_i32, %c0_i32_0 : i32, i32
  }
  func.func @transform_4(%arg0: i32) -> (i32, i32) {
    %c0_i32 = arith.constant 0 : i32
    %c0_i32_0 = arith.constant 0 : i32
    %c0_i32_1 = arith.constant 0 : i32
    return %c0_i32, %c0_i32_0 : i32, i32
  }
  func.func @transform_5(%arg0: i32) -> (i32, i32) {
    %c0_i32 = arith.constant 0 : i32
    %c0_i32_0 = arith.constant 0 : i32
    %c0_i32_1 = arith.constant 0 : i32
    return %c0_i32, %c0_i32_0 : i32, i32
  }
  func.func @transform_6(%arg0: i32) -> (i32, i32, i32) {
    %c0_i32 = arith.constant 0 : i32
    %c0_i32_0 = arith.constant 0 : i32
    %c0_i32_1 = arith.constant 0 : i32
    %c0_i32_2 = arith.constant 0 : i32
    return %c0_i32, %c0_i32_0, %c0_i32_1 : i32, i32, i32
  }
  func.func @transform_7(%arg0: i32) -> (i32, i32, i32) {
    %c0_i32 = arith.constant 0 : i32
    %c0_i32_0 = arith.constant 0 : i32
    %c0_i32_1 = arith.constant 0 : i32
    %c0_i32_2 = arith.constant 0 : i32
    return %c0_i32, %c0_i32_0, %c0_i32_1 : i32, i32, i32
  }
  func.func @transform_8(%arg0: i32) -> (i32, i32, i32) {
    %c0_i32 = arith.constant 0 : i32
    %c0_i32_0 = arith.constant 0 : i32
    %c0_i32_1 = arith.constant 0 : i32
    %c0_i32_2 = arith.constant 0 : i32
    return %c0_i32, %c0_i32_0, %c0_i32_1 : i32, i32, i32
  }
  func.func @transform_9(%arg0: i32) -> (i32, i32, i32) {
    %c0_i32 = arith.constant 0 : i32
    %c0_i32_0 = arith.constant 0 : i32
    %c0_i32_1 = arith.constant 0 : i32
    %c0_i32_2 = arith.constant 0 : i32
    return %c0_i32, %c0_i32_0, %c0_i32_1 : i32, i32, i32
  }
  func.func @transform_10(%arg0: i32) -> (i32, i32, i32) {
    %c0_i32 = arith.constant 0 : i32
    %c0_i32_0 = arith.constant 0 : i32
    %c0_i32_1 = arith.constant 0 : i32
    %c0_i32_2 = arith.constant 0 : i32
    return %c0_i32, %c0_i32_0, %c0_i32_1 : i32, i32, i32
  }
  func.func @transform_11(%arg0: i32) -> (i32, i32, i32) {
    %c0_i32 = arith.constant 0 : i32
    %c0_i32_0 = arith.constant 0 : i32
    %c0_i32_1 = arith.constant 0 : i32
    %c0_i32_2 = arith.constant 0 : i32
    return %c0_i32, %c0_i32_0, %c0_i32_1 : i32, i32, i32
  }
  func.func @transform_12(%arg0: i32) -> (i32, i32, i32) {
    %c0_i32 = arith.constant 0 : i32
    %c0_i32_0 = arith.constant 0 : i32
    %c0_i32_1 = arith.constant 0 : i32
    %c0_i32_2 = arith.constant 0 : i32
    return %c0_i32, %c0_i32_0, %c0_i32_1 : i32, i32, i32
  }
  func.func @transform_13(%arg0: i32) -> (i32, i32, i32) {
    %c0_i32 = arith.constant 0 : i32
    %c0_i32_0 = arith.constant 0 : i32
    %c0_i32_1 = arith.constant 0 : i32
    %c0_i32_2 = arith.constant 0 : i32
    return %c0_i32, %c0_i32_0, %c0_i32_1 : i32, i32, i32
  }
  func.func @transform_14(%arg0: i32) -> (i32, i32, i32) {
    %c0_i32 = arith.constant 0 : i32
    %c0_i32_0 = arith.constant 0 : i32
    %c0_i32_1 = arith.constant 0 : i32
    %c0_i32_2 = arith.constant 0 : i32
    return %c0_i32, %c0_i32_0, %c0_i32_1 : i32, i32, i32
  }
  func.func @transform_15(%arg0: i32) -> (i32, i32, i32) {
    %c0_i32 = arith.constant 0 : i32
    %c0_i32_0 = arith.constant 0 : i32
    %c0_i32_1 = arith.constant 0 : i32
    %c0_i32_2 = arith.constant 0 : i32
    return %c0_i32, %c0_i32_0, %c0_i32_1 : i32, i32, i32
  }
  func.func @transform_16(%arg0: i32) -> (i32, i32, i32) {
    %c0_i32 = arith.constant 0 : i32
    %c0_i32_0 = arith.constant 0 : i32
    %c0_i32_1 = arith.constant 0 : i32
    %c0_i32_2 = arith.constant 0 : i32
    return %c0_i32, %c0_i32_0, %c0_i32_1 : i32, i32, i32
  }
  func.func @transform_17(%arg0: i32) -> (i32, i32, i32) {
    %c0_i32 = arith.constant 0 : i32
    %c0_i32_0 = arith.constant 0 : i32
    %c0_i32_1 = arith.constant 0 : i32
    %c0_i32_2 = arith.constant 0 : i32
    return %c0_i32, %c0_i32_0, %c0_i32_1 : i32, i32, i32
  }
  func.func @transform_18(%arg0: i32) -> (i32, i32) {
    %c0_i32 = arith.constant 0 : i32
    %c0_i32_0 = arith.constant 0 : i32
    %c0_i32_1 = arith.constant 0 : i32
    return %c0_i32, %c0_i32_0 : i32, i32
  }
  func.func @transform_19(%arg0: i32) -> (i32, i32) {
    %c0_i32 = arith.constant 0 : i32
    %c0_i32_0 = arith.constant 0 : i32
    %c0_i32_1 = arith.constant 0 : i32
    return %c0_i32, %c0_i32_0 : i32, i32
  }
  func.func @transform_20(%arg0: i32) -> (i32, i32) {
    %c0_i32 = arith.constant 0 : i32
    %c0_i32_0 = arith.constant 0 : i32
    %c0_i32_1 = arith.constant 0 : i32
    return %c0_i32, %c0_i32_0 : i32, i32
  }
}

</mosaic_0001>

<llo_original>
// kernel: mae_encoder_pallas.3
$region0: #{mae_encoder_pallas.3}
  #allocation0 [shape = 'u32[]', space=smem, size = 0x4, offset = 0x4, fixed_abs, tag = 'smem constant byte address 0x4 - core index']
  #allocation1 [shape = 'u32[72,128]{1,0:T(1,128)}', space=vmem, size = 0x9000, scoped, tag = 'internal scratch']
  %s0 = inlined_call_operand.vmem [shape: f32[8,96], index: 0, kind: input, shape index: {}]
  %s1 = inlined_call_operand.vmem [shape: s32[8,2], index: 1, kind: input, shape index: {}]
  %s2 = inlined_call_operand.vmem [shape: f32[24,24], index: 2, kind: input, shape index: {}]
  %s3 = inlined_call_operand.hbm [shape: f32[96,384], index: 3, kind: input, shape index: {}]
  %s4 = inlined_call_operand.vmem [shape: f32[1,384], index: 4, kind: input, shape index: {}]
  %s5 = inlined_call_operand.vmem [shape: f32[1,128], index: 5, kind: input, shape index: {}]
  %s6 = inlined_call_operand.vmem [shape: f32[2,1,128], index: 6, kind: input, shape index: {}]
  %s7 = inlined_call_operand.vmem [shape: f32[2,1,128], index: 7, kind: input, shape index: {}]
  %s8 = inlined_call_operand.hbm [shape: f32[2,128,384], index: 8, kind: input, shape index: {}]
  %s9 = inlined_call_operand.vmem [shape: f32[2,1,384], index: 9, kind: input, shape index: {}]
  %s10 = inlined_call_operand.hbm [shape: f32[2,128,128], index: 10, kind: input, shape index: {}]
  %s11 = inlined_call_operand.vmem [shape: f32[2,1,128], index: 11, kind: input, shape index: {}]
  %s12 = inlined_call_operand.vmem [shape: f32[2,1,128], index: 12, kind: input, shape index: {}]
  %s13 = inlined_call_operand.vmem [shape: f32[2,1,128], index: 13, kind: input, shape index: {}]
  %s14 = inlined_call_operand.hbm [shape: f32[2,128,512], index: 14, kind: input, shape index: {}]
  %s15 = inlined_call_operand.vmem [shape: f32[2,1,512], index: 15, kind: input, shape index: {}]
  %s16 = inlined_call_operand.hbm [shape: f32[2,512,128], index: 16, kind: input, shape index: {}]
  %s17 = inlined_call_operand.vmem [shape: f32[2,1,128], index: 17, kind: input, shape index: {}]
  %s18 = inlined_call_operand.vmem [shape: f32[1,128], index: 18, kind: input, shape index: {}]
  %s19 = inlined_call_operand.vmem [shape: f32[1,128], index: 19, kind: input, shape index: {}]
  %s20 = inlined_call_operand.hbm [shape: f32[24,128], index: 20, kind: output, shape index: {}]
  %s21 = sld [smem:[#allocation0]]
  $region110: #{mae_encoder_pallas.3} parent=0
    _
  %s23 = ssub.s32 1, %s21
  %s24 = scalar_select 0, %s23, %s21
  $region1: #{mae_encoder_pallas.3} parent=0
    #allocation2 [shape = 'u8[147456]{0}', space=vmem, size = 0x24000, scoped, tag = 'input window, operand 3, single buffered']
    #allocation3 [shape = 's32[1]{0}', space=sflag, size = 0x4, scoped, tag = 'scoped memory for mae_encoder_pallas.3']
    #allocation4 [shape = 's32[1]{0}', space=sflag, size = 0x4, scoped, tag = 'scoped memory for mae_encoder_pallas.3']
    #allocation5 [shape = 'u8[393216]{0}', space=vmem, size = 0x60000, scoped, tag = 'input window, operand 8, single buffered']
    #allocation6 [shape = 's32[1]{0}', space=sflag, size = 0x4, scoped, tag = 'scoped memory for mae_encoder_pallas.3']
    #allocation7 [shape = 'u8[131072]{0}', space=vmem, size = 0x20000, scoped, tag = 'input window, operand 10, single buffered']
    #allocation8 [shape = 'u8[524288]{0}', space=vmem, size = 0x80000, scoped, tag = 'input window, operand 14, single buffered']
    #allocation9 [shape = 's32[1]{0}', space=sflag, size = 0x4, scoped, tag = 'scoped memory for mae_encoder_pallas.3']
    #allocation10 [shape = 'u8[524288]{0}', space=vmem, size = 0x80000, scoped, tag = 'input window, operand 16, single buffered']
    #allocation11 [shape = 'u8[12288]{0}', space=vmem, size = 0x3000, scoped, tag = 'output window, operand 0, single buffered']
    %25 = vsyncpa [#allocation3], 0
    %26 = vsyncpa [#allocation6], 0
    %27 = vsyncpa [#allocation9], 0
    %28 = vsyncpa [#allocation4], 0
    // Predicated region
    $region2: #{mae_encoder_pallas.3} parent=1 // pred_check
      _
    $region3: #{mae_encoder_pallas.3} parent=1 // pred_check_branch
      %30 = sbr.rel (0) target = $region5
    $region4: #{mae_encoder_pallas.3} parent=1 // pred_region
      _
    $region5: #{mae_encoder_pallas.3} parent=1 // pred_fallthru
      _
    // Predicated region
    $region6: #{mae_encoder_pallas.3} parent=1 // pred_check
      _
    $region7: #{mae_encoder_pallas.3} parent=1 // pred_check_branch
      %32 = sbr.rel (0) target = $region9
    $region8: #{mae_encoder_pallas.3} parent=1 // pred_region
      _
    $region9: #{mae_encoder_pallas.3} parent=1 // pred_fallthru
      _
    // Predicated region
    $region10: #{mae_encoder_pallas.3} parent=1 // pred_check
      _
    $region11: #{mae_encoder_pallas.3} parent=1 // pred_check_branch
      %34 = sbr.rel (0) target = $region13
    $region12: #{mae_encoder_pallas.3} parent=1 // pred_region
      _
    $region13: #{mae_encoder_pallas.3} parent=1 // pred_fallthru
      _
    // Predicated region
    $region14: #{mae_encoder_pallas.3} parent=1 // pred_check
      _
    $region15: #{mae_encoder_pallas.3} parent=1 // pred_check_branch
      %36 = sbr.rel (0) target = $region17
    $region16: #{mae_encoder_pallas.3} parent=1 // pred_region
      %38 = vsyncadd [#allocation3], 0
      %s39 = sshll.u32 %s3, 4
      %s40 = int_to_ptr.hbm [resolvable:$true] %s39
      %s41 = sshll.u32 [#allocation2], 4
      %s42 = int_to_ptr.vmem [resolvable:$true] %s41
      %47 = dma.hbm_to_vmem [thread:$0]  %s40, 4608, %s42, [#allocation3], 384, 384, 24
    $region17: #{mae_encoder_pallas.3} parent=1 // pred_fallthru
      _
    // Predicated region
    $region18: #{mae_encoder_pallas.3} parent=1 // pred_check
      _
    $region19: #{mae_encoder_pallas.3} parent=1 // pred_check_branch
      %49 = sbr.rel (0) target = $region21
    $region20: #{mae_encoder_pallas.3} parent=1 // pred_region
      _
    $region21: #{mae_encoder_pallas.3} parent=1 // pred_fallthru
      _
    // Predicated region
    $region22: #{mae_encoder_pallas.3} parent=1 // pred_check
      _
    $region23: #{mae_encoder_pallas.3} parent=1 // pred_check_branch
      %51 = sbr.rel (0) target = $region25
    $region24: #{mae_encoder_pallas.3} parent=1 // pred_region
      _
    $region25: #{mae_encoder_pallas.3} parent=1 // pred_fallthru
      _
    // Predicated region
    $region26: #{mae_encoder_pallas.3} parent=1 // pred_check
      _
    $region27: #{mae_encoder_pallas.3} parent=1 // pred_check_branch
      %53 = sbr.rel (0) target = $region29
    $region28: #{mae_encoder_pallas.3} parent=1 // pred_region
      _
    $region29: #{mae_encoder_pallas.3} parent=1 // pred_fallthru
      _
    // Predicated region
    $region30: #{mae_encoder_pallas.3} parent=1 // pred_check
      _
    $region31: #{mae_encoder_pallas.3} parent=1 // pred_check_branch
      %55 = sbr.rel (0) target = $region33
    $region32: #{mae_encoder_pallas.3} parent=1 // pred_region
      _
    $region33: #{mae_encoder_pallas.3} parent=1 // pred_fallthru
      _
    // Predicated region
    $region34: #{mae_encoder_pallas.3} parent=1 // pred_check
      _
    $region35: #{mae_encoder_pallas.3} parent=1 // pred_check_branch
      %57 = sbr.rel (0) target = $region37
    $region36: #{mae_encoder_pallas.3} parent=1 // pred_region
      %59 = vsyncadd [#allocation6], 0
      %s60 = sshll.u32 %s8, 4
      %s61 = int_to_ptr.hbm [resolvable:$true] %s60
      %s62 = sshll.u32 [#allocation5], 4
      %s63 = int_to_ptr.vmem [resolvable:$true] %s62
      %68 = dma.hbm_to_vmem [thread:$0]  %s61, 12288, %s63, [#allocation6], 384, 384, 24
    $region37: #{mae_encoder_pallas.3} parent=1 // pred_fallthru
      _
    // Predicated region
    $region38: #{mae_encoder_pallas.3} parent=1 // pred_check
      _
    $region39: #{mae_encoder_pallas.3} parent=1 // pred_check_branch
      %70 = sbr.rel (0) target = $region41
    $region40: #{mae_encoder_pallas.3} parent=1 // pred_region
      _
    $region41: #{mae_encoder_pallas.3} parent=1 // pred_fallthru
      _
    // Predicated region
    $region42: #{mae_encoder_pallas.3} parent=1 // pred_check
      _
    $region43: #{mae_encoder_pallas.3} parent=1 // pred_check_branch
      %72 = sbr.rel (0) target = $region45
    $region44: #{mae_encoder_pallas.3} parent=1 // pred_region
      %74 = vsyncadd [#allocation6], 0
      %s75 = sshll.u32 %s10, 4
      %s76 = int_to_ptr.hbm [resolvable:$true] %s75
      %s77 = sshll.u32 [#allocation7], 4
      %s78 = int_to_ptr.vmem [resolvable:$true] %s77
      %83 = dma.hbm_to_vmem [thread:$0]  %s76, 4096, %s78, [#allocation6], 128, 128, 8
    $region45: #{mae_encoder_pallas.3} parent=1 // pred_fallthru
      _
    // Predicated region
    $region46: #{mae_encoder_pallas.3} parent=1 // pred_check
      _
    $region47: #{mae_encoder_pallas.3} parent=1 // pred_check_branch
      %85 = sbr.rel (0) target = $region49
    $region48: #{mae_encoder_pallas.3} parent=1 // pred_region
      _
    $region49: #{mae_encoder_pallas.3} parent=1 // pred_fallthru
      _
    // Predicated region
    $region50: #{mae_encoder_pallas.3} parent=1 // pred_check
      _
    $region51: #{mae_encoder_pallas.3} parent=1 // pred_check_branch
      %87 = sbr.rel (0) target = $region53
    $region52: #{mae_encoder_pallas.3} parent=1 // pred_region
      _
    $region53: #{mae_encoder_pallas.3} parent=1 // pred_fallthru
      _
    // Predicated region
    $region54: #{mae_encoder_pallas.3} parent=1 // pred_check
      _
    $region55: #{mae_encoder_pallas.3} parent=1 // pred_check_branch
      %89 = sbr.rel (0) target = $region57
    $region56: #{mae_encoder_pallas.3} parent=1 // pred_region
      _
    $region57: #{mae_encoder_pallas.3} parent=1 // pred_fallthru
      _
    // Predicated region
    $region58: #{mae_encoder_pallas.3} parent=1 // pred_check
      _
    $region59: #{mae_encoder_pallas.3} parent=1 // pred_check_branch
      %91 = sbr.rel (0) target = $region61
    $region60: #{mae_encoder_pallas.3} parent=1 // pred_region
      %93 = vsyncadd [#allocation9], 0
      %s94 = sshll.u32 %s14, 4
      %s95 = int_to_ptr.hbm [resolvable:$true] %s94
      %s96 = sshll.u32 [#allocation8], 4
      %s97 = int_to_ptr.vmem [resolvable:$true] %s96
      %102 = dma.hbm_to_vmem [thread:$0]  %s95, 16384, %s97, [#allocation9], 512, 512, 32
    $region61: #{mae_encoder_pallas.3} parent=1 // pred_fallthru
      _
    // Predicated region
    $region62: #{mae_encoder_pallas.3} parent=1 // pred_check
      _
    $region63: #{mae_encoder_pallas.3} parent=1 // pred_check_branch
      %104 = sbr.rel (0) target = $region65
    $region64: #{mae_encoder_pallas.3} parent=1 // pred_region
      _
    $region65: #{mae_encoder_pallas.3} parent=1 // pred_fallthru
      _
    // Predicated region
    $region66: #{mae_encoder_pallas.3} parent=1 // pred_check
      _
    $region67: #{mae_encoder_pallas.3} parent=1 // pred_check_branch
      %106 = sbr.rel (0) target = $region69
    $region68: #{mae_encoder_pallas.3} parent=1 // pred_region
      %108 = vsyncadd [#allocation9], 0
      %s109 = sshll.u32 %s16, 4
      %s110 = int_to_ptr.hbm [resolvable:$true] %s109
      %s111 = sshll.u32 [#allocation10], 4
      %s112 = int_to_ptr.vmem [resolvable:$true] %s111
      %117 = dma.hbm_to_vmem [thread:$0]  %s110, 16384, %s112, [#allocation9], 128, 128, 8
    $region69: #{mae_encoder_pallas.3} parent=1 // pred_fallthru
      _
    // Predicated region
    $region70: #{mae_encoder_pallas.3} parent=1 // pred_check
      _
    $region71: #{mae_encoder_pallas.3} parent=1 // pred_check_branch
      %119 = sbr.rel (0) target = $region73
    $region72: #{mae_encoder_pallas.3} parent=1 // pred_region
      _
    $region73: #{mae_encoder_pallas.3} parent=1 // pred_fallthru
      _
    // Predicated region
    $region74: #{mae_encoder_pallas.3} parent=1 // pred_check
      _
    $region75: #{mae_encoder_pallas.3} parent=1 // pred_check_branch
      %121 = sbr.rel (0) target = $region77
    $region76: #{mae_encoder_pallas.3} parent=1 // pred_region
      _
    $region77: #{mae_encoder_pallas.3} parent=1 // pred_fallthru
      _
    // Predicated region
    $region78: #{mae_encoder_pallas.3} parent=1 // pred_check
      _
    $region79: #{mae_encoder_pallas.3} parent=1 // pred_check_branch
      %123 = sbr.rel (0) target = $region81
    $region80: #{mae_encoder_pallas.3} parent=1 // pred_region
      _
    $region81: #{mae_encoder_pallas.3} parent=1 // pred_fallthru
      _
    // Predicated region
    $region82: #{mae_encoder_pallas.3} parent=1 // pred_check
      _
    $region83: #{mae_encoder_pallas.3} parent=1 // pred_check_branch
      %125 = sbr.rel (0) target = $region85
    $region84: #{mae_encoder_pallas.3} parent=1 // pred_region
      %127 = dma.done [#allocation3], 4608
    $region85: #{mae_encoder_pallas.3} parent=1 // pred_fallthru
      _
    // Predicated region
    $region86: #{mae_encoder_pallas.3} parent=1 // pred_check
      _
    $region87: #{mae_encoder_pallas.3} parent=1 // pred_check_branch
      %129 = sbr.rel (0) target = $region89
    $region88: #{mae_encoder_pallas.3} parent=1 // pred_region
      %131 = dma.done [#allocation6], 12288
    $region89: #{mae_encoder_pallas.3} parent=1 // pred_fallthru
      _
    // Predicated region
    $region90: #{mae_encoder_pallas.3} parent=1 // pred_check
      _
    $region91: #{mae_encoder_pallas.3} parent=1 // pred_check_branch
      %133 = sbr.rel (0) target = $region93
    $region92: #{mae_encoder_pallas.3} parent=1 // pred_region
      %135 = dma.done [#allocation6], 4096
    $region93: #{mae_encoder_pallas.3} parent=1 // pred_fallthru
      _
    // Predicated region
    $region94: #{mae_encoder_pallas.3} parent=1 // pred_check
      _
    $region95: #{mae_encoder_pallas.3} parent=1 // pred_check_branch
      %137 = sbr.rel (0) target = $region97
    $region96: #{mae_encoder_pallas.3} parent=1 // pred_region
      %139 = dma.done [#allocation9], 16384
    $region97: #{mae_encoder_pallas.3} parent=1 // pred_fallthru
      _
    // Predicated region
    $region98: #{mae_encoder_pallas.3} parent=1 // pred_check
      _
    $region99: #{mae_encoder_pallas.3} parent=1 // pred_check_branch
      %141 = sbr.rel (0) target = $region101
    $region100: #{mae_encoder_pallas.3} parent=1 // pred_region
      %143 = dma.done [#allocation9], 16384
    $region101: #{mae_encoder_pallas.3} parent=1 // pred_fallthru
      _
    %v144 = vld [vmem:[%s0] sm:$0xff]
    %v145 = vld [vmem:[#allocation2] sm:$0xff]
    %v146 = vld [vmem:[#allocation2 + $0x8] sm:$0xff]
    %v147 = vld [vmem:[#allocation2 + $0x10] sm:$0xff]
    %v148 = vld [vmem:[#allocation2 + $0x18] sm:$0xff]
    %v149 = vld [vmem:[#allocation2 + $0x20] sm:$0xff]
    %v150 = vld [vmem:[#allocation2 + $0x28] sm:$0xff]
    %v151 = vld [vmem:[#allocation2 + $0x30] sm:$0xff]
    %v152 = vld [vmem:[#allocation2 + $0x38] sm:$0xff]
    %v153 = vld [vmem:[#allocation2 + $0x40] sm:$0xff]
    %v154 = vld [vmem:[#allocation2 + $0x48] sm:$0xff]
    %v155 = vld [vmem:[#allocation2 + $0x50] sm:$0xff]
    %v156 = vld [vmem:[#allocation2 + $0x58] sm:$0xff]
    %v157 = vld [vmem:[#allocation2 + $0x60] sm:$0xff]
    %v158 = vld [vmem:[#allocation2 + $0x68] sm:$0xff]
    %v159 = vld [vmem:[#allocation2 + $0x70] sm:$0xff]
    %v160 = vld [vmem:[#allocation2 + $0x78] sm:$0xff]
    %v161 = vld [vmem:[#allocation2 + $0x80] sm:$0xff]
    %v162 = vld [vmem:[#allocation2 + $0x88] sm:$0xff]
    %v163 = vld [vmem:[#allocation2 + $0x90] sm:$0xff]
    %v164 = vld [vmem:[#allocation2 + $0x98] sm:$0xff]
    %v165 = vld [vmem:[#allocation2 + $0xa0] sm:$0xff]
    %v166 = vld [vmem:[#allocation2 + $0xa8] sm:$0xff]
    %v167 = vld [vmem:[#allocation2 + $0xb0] sm:$0xff]
    %v168 = vld [vmem:[#allocation2 + $0xb8] sm:$0xff]
    %v169 = vld [vmem:[#allocation2 + $0xc0] sm:$0xff]
    %v170 = vld [vmem:[#allocation2 + $0xc8] sm:$0xff]
    %v171 = vld [vmem:[#allocation2 + $0xd0] sm:$0xff]
    %v172 = vld [vmem:[#allocation2 + $0xd8] sm:$0xff]
    %v173 = vld [vmem:[#allocation2 + $0xe0] sm:$0xff]
    %v174 = vld [vmem:[#allocation2 + $0xe8] sm:$0xff]
    %v175 = vld [vmem:[#allocation2 + $0xf0] sm:$0xff]
    %v176 = vld [vmem:[#allocation2 + $0xf8] sm:$0xff]
    %v177 = vld [vmem:[#allocation2 + $0x100] sm:$0xff]
    %v178 = vld [vmem:[#allocation2 + $0x108] sm:$0xff]
    %v179 = vld [vmem:[#allocation2 + $0x110] sm:$0xff]
    %v180 = vld [vmem:[#allocation2 + $0x118] sm:$0xff]
    %v181 = vld [vmem:[%s4] sm:$0x7]
    %v183 = vperm.slane %v181, 0
    %v184 = vperm.slane %v181, 1
    %v185 = vperm.slane %v181, 2
    %vm189 = vcmask 785408
    %v191 = vsel %vm189, %v144, 0
    %193 = vmatpush.msra.mxu0 0.0
    %194 = vmatpush.msra.mxu0 0.0
    %195 = vmatpush.msra.mxu0 0.0
    %196 = vmatpush.msra.mxu0 0.0
    %197 = vmatpush.msra.mxu0 %v178
    %198 = vmatpush.msra.mxu0 %v175
    %199 = vmatpush.msra.mxu0 %v172
    %200 = vmatpush.msra.mxu0 %v169
    %201 = vmatpush.msra.mxu0 %v166
    %202 = vmatpush.msra.mxu0 %v163
    %203 = vmatpush.msra.mxu0 %v160
    %204 = vmatpush.msra.mxu0 %v157
    %205 = vmatpush.msra.mxu0 %v154
    %206 = vmatpush.msra.mxu0 %v151
    %207 = vmatpush.msra.mxu0 %v148
    %208 = vmatpush.msra.mxu0 %v145
    %209 = vmatmul.f32.gmra.mxu0 %v191
    %v210 = vpop.f32.mrf.mxu0
    %v211 = vadd.f32 %v183, %v210
    %212 = vdwg.mxu0
    %213 = vmatpush.msra.mxu0 0.0
    %214 = vmatpush.msra.mxu0 0.0
    %215 = vmatpush.msra.mxu0 0.0
    %216 = vmatpush.msra.mxu0 0.0
    %217 = vmatpush.msra.mxu0 %v179
    %218 = vmatpush.msra.mxu0 %v176
    %219 = vmatpush.msra.mxu0 %v173
    %220 = vmatpush.msra.mxu0 %v170
    %221 = vmatpush.msra.mxu0 %v167
    %222 = vmatpush.msra.mxu0 %v164
    %223 = vmatpush.msra.mxu0 %v161
    %224 = vmatpush.msra.mxu0 %v158
    %225 = vmatpush.msra.mxu0 %v155
    %226 = vmatpush.msra.mxu0 %v152
    %227 = vmatpush.msra.mxu0 %v149
    %228 = vmatpush.msra.mxu0 %v146
    %229 = vmatmul.f32.gmra.mxu0 %v191
    %v230 = vpop.f32.mrf.mxu0
    %v231 = vadd.f32 %v184, %v230
    %232 = vdwg.mxu0
    %233 = vmatpush.msra.mxu0 0.0
    %234 = vmatpush.msra.mxu0 0.0
    %235 = vmatpush.msra.mxu0 0.0
    %236 = vmatpush.msra.mxu0 0.0
    %237 = vmatpush.msra.mxu0 %v180
    %238 = vmatpush.msra.mxu0 %v177
    %239 = vmatpush.msra.mxu0 %v174
    %240 = vmatpush.msra.mxu0 %v171
    %241 = vmatpush.msra.mxu0 %v168
    %242 = vmatpush.msra.mxu0 %v165
    %243 = vmatpush.msra.mxu0 %v162
    %244 = vmatpush.msra.mxu0 %v159
    %245 = vmatpush.msra.mxu0 %v156
    %246 = vmatpush.msra.mxu0 %v153
    %247 = vmatpush.msra.mxu0 %v150
    %248 = vmatpush.msra.mxu0 %v147
    %249 = vmatmul.f32.gmra.mxu0 %v191
    %v250 = vpop.f32.mrf.mxu0
    %v251 = vadd.f32 %v185, %v250
    %252 = vdwg.mxu0
    %v253 = vld [vmem:[%s1] sm:$0xff]
    %v254 = vld [vmem:[%s5] sm:$0x1]
    %v256 = vperm.slane %v254, 0
    %258 = vset.pattern.permute.xlu0 0
    %259 = vperm.xlu0 %258, %v253
    %v260 = vpop.permute.xlu0 %259
    %vm261 = vcmp.eq.s32.totalorder %v260, 0
    %vm262 = vcmp.eq.s32.totalorder %v260, 1
    %v263 = vsel %vm262, %v231, %v251
    %v264 = vsel %vm261, %v211, %v263
    %265 = vset.pattern.permute.xlu0 1
    %266 = vperm.xlu0 %265, %v253
    %v267 = vpop.permute.xlu0 %266
    %vm268 = vcmp.eq.s32.totalorder %v267, 0
    %vm269 = vcmp.eq.s32.totalorder %v267, 1
    %v270 = vsel %vm269, %v231, %v251
    %v271 = vsel %vm268, %v211, %v270
    %v272 = vld [vmem:[%s2] sm:$0xff]
    %v273 = vld [vmem:[%s2 + $0x8] sm:$0xff]
    %v274 = vld [vmem:[%s2 + $0x10] sm:$0xff]
    %v275 = vld [vmem:[%s6] sm:$0x1]
    %v276 = vld [vmem:[%s7] sm:$0x1]
    %277 = vadd.xlane.f32.xlu0 %v256
    %v278 = vpop.xlane.xlu0 %277
    %279 = vadd.xlane.f32.xlu0 %v264
    %v280 = vpop.xlane.xlu0 %279
    %281 = vadd.xlane.f32.xlu0 %v271
    %v282 = vpop.xlane.xlu0 %281
    %v283 = vrcp.pop 128.0
    %v284 = vmul.f32 128.0, %v283
    %v285 = vsub.f32 1.0, %v284
    %v286 = vmul.f32 %v283, %v285
    %v287 = vadd.f32 %v283, %v286
    %vm288 = vweird.f32 %v283
    %v289 = vsel %vm288, %v283, %v287
    %v290 = vmul.f32 %v278, %v289
    %v291 = vmul.f32 %v280, %v289
    %v292 = vmul.f32 %v282, %v289
    %v293 = vsub.f32 %v256, %v290
    %v294 = vsub.f32 %v264, %v291
    %v295 = vsub.f32 %v271, %v292
    %v296 = vmul.f32 %v293, %v293
    %v297 = vmul.f32 %v294, %v294
    %v298 = vmul.f32 %v295, %v295
    %299 = vadd.xlane.f32.xlu0 %v296
    %v300 = vpop.xlane.xlu0 %299
    %301 = vadd.xlane.f32.xlu0 %v297
    %v302 = vpop.xlane.xlu0 %301
    %303 = vadd.xlane.f32.xlu0 %v298
    %v304 = vpop.xlane.xlu0 %303
    %v305 = vmul.f32 %v300, %v289
    %v306 = vmul.f32 %v302, %v289
    %v307 = vmul.f32 %v304, %v289
    %v308 = vadd.f32 %v305, 1e-05
    %v309 = vadd.f32 %v306, 1e-05
    %v310 = vadd.f32 %v307, 1e-05
    %v311 = vrsqrt.pop %v308
    %v312 = vmul.f32 %v311, %v308
    %v313 = vmul.f32 %v312, %v311
    %v314 = vmul.f32 0.5, %v313
    %v315 = vsub.f32 1.5, %v314
    %v316 = vmul.f32 %v311, %v315
    %vm317 = vweird.f32 %v308
    %vm318 = vweird.f32 %v311
    %vm319 = vmor %vm317, %vm318
    %v320 = vsel %vm319, %v311, %v316
    %v321 = vrsqrt.pop %v309
    %v322 = vmul.f32 %v321, %v309
    %v323 = vmul.f32 %v322, %v321
    %v324 = vmul.f32 0.5, %v323
    %v325 = vsub.f32 1.5, %v324
    %v326 = vmul.f32 %v321, %v325
    %vm327 = vweird.f32 %v309
    %vm328 = vweird.f32 %v321
    %vm329 = vmor %vm327, %vm328
    %v330 = vsel %vm329, %v321, %v326
    %v331 = vrsqrt.pop %v310
    %v332 = vmul.f32 %v331, %v310
    %v333 = vmul.f32 %v332, %v331
    %v334 = vmul.f32 0.5, %v333
    %v335 = vsub.f32 1.5, %v334
    %v336 = vmul.f32 %v331, %v335
    %vm337 = vweird.f32 %v310
    %vm338 = vweird.f32 %v331
    %vm339 = vmor %vm337, %vm338
    %v340 = vsel %vm339, %v331, %v336
    %v341 = vmul.f32 %v293, %v320
    %v342 = vmul.f32 %v294, %v330
    %v343 = vmul.f32 %v295, %v340
    %v345 = vperm.slane %v275, 0
    %v347 = vmul.f32 %v341, %v345
    %v348 = vmul.f32 %v342, %v345
    %v349 = vmul.f32 %v343, %v345
    %v351 = vperm.slane %v276, 0
    %v353 = vadd.f32 %v347, %v351
    %v354 = vadd.f32 %v348, %v351
    %v355 = vadd.f32 %v349, %v351
    %v356 = vld [vmem:[#allocation5] sm:$0xff]
    %v357 = vld [vmem:[#allocation5 + $0x8] sm:$0xff]
    %v358 = vld [vmem:[#allocation5 + $0x10] sm:$0xff]
    %v359 = vld [vmem:[#allocation5 + $0x18] sm:$0xff]
    %v360 = vld [vmem:[#allocation5 + $0x20] sm:$0xff]
    %v361 = vld [vmem:[#allocation5 + $0x28] sm:$0xff]
    %v362 = vld [vmem:[#allocation5 + $0x30] sm:$0xff]
    %v363 = vld [vmem:[#allocation5 + $0x38] sm:$0xff]
    %v364 = vld [vmem:[#allocation5 + $0x40] sm:$0xff]
    %v365 = vld [vmem:[#allocation5 + $0x48] sm:$0xff]
    %v366 = vld [vmem:[#allocation5 + $0x50] sm:$0xff]
    %v367 = vld [vmem:[#allocation5 + $0x58] sm:$0xff]
    %v368 = vld [vmem:[#allocation5 + $0x60] sm:$0xff]
    %v369 = vld [vmem:[#allocation5 + $0x68] sm:$0xff]
    %v370 = vld [vmem:[#allocation5 + $0x70] sm:$0xff]
    %v371 = vld [vmem:[#allocation5 + $0x78] sm:$0xff]
    %v372 = vld [vmem:[#allocation5 + $0x80] sm:$0xff]
    %v373 = vld [vmem:[#allocation5 + $0x88] sm:$0xff]
    %v374 = vld [vmem:[#allocation5 + $0x90] sm:$0xff]
    %v375 = vld [vmem:[#allocation5 + $0x98] sm:$0xff]
    %v376 = vld [vmem:[#allocation5 + $0xa0] sm:$0xff]
    %v377 = vld [vmem:[#allocation5 + $0xa8] sm:$0xff]
    %v378 = vld [vmem:[#allocation5 + $0xb0] sm:$0xff]
    %v379 = vld [vmem:[#allocation5 + $0xb8] sm:$0xff]
    %v380 = vld [vmem:[#allocation5 + $0xc0] sm:$0xff]
    %v381 = vld [vmem:[#allocation5 + $0xc8] sm:$0xff]
    %v382 = vld [vmem:[#allocation5 + $0xd0] sm:$0xff]
    %v383 = vld [vmem:[#allocation5 + $0xd8] sm:$0xff]
    %v384 = vld [vmem:[#allocation5 + $0xe0] sm:$0xff]
    %v385 = vld [vmem:[#allocation5 + $0xe8] sm:$0xff]
    %v386 = vld [vmem:[#allocation5 + $0xf0] sm:$0xff]
    %v387 = vld [vmem:[#allocation5 + $0xf8] sm:$0xff]
    %v388 = vld [vmem:[#allocation5 + $0x100] sm:$0xff]
    %v389 = vld [vmem:[#allocation5 + $0x108] sm:$0xff]
    %v390 = vld [vmem:[#allocation5 + $0x110] sm:$0xff]
    %v391 = vld [vmem:[#allocation5 + $0x118] sm:$0xff]
    %v392 = vld [vmem:[#allocation5 + $0x120] sm:$0xff]
    %v393 = vld [vmem:[#allocation5 + $0x128] sm:$0xff]
    %v394 = vld [vmem:[#allocation5 + $0x130] sm:$0xff]
    %v395 = vld [vmem:[#allocation5 + $0x138] sm:$0xff]
    %v396 = vld [vmem:[#allocation5 + $0x140] sm:$0xff]
    %v397 = vld [vmem:[#allocation5 + $0x148] sm:$0xff]
    %v398 = vld [vmem:[#allocation5 + $0x150] sm:$0xff]
    %v399 = vld [vmem:[#allocation5 + $0x158] sm:$0xff]
    %v400 = vld [vmem:[#allocation5 + $0x160] sm:$0xff]
    %v401 = vld [vmem:[#allocation5 + $0x168] sm:$0xff]
    %v402 = vld [vmem:[#allocation5 + $0x170] sm:$0xff]
    %v403 = vld [vmem:[#allocation5 + $0x178] sm:$0xff]
    %v404 = vld [vmem:[%s9] sm:$0x7]
    %v406 = vperm.slane %v404, 0
    %v407 = vperm.slane %v404, 1
    %v408 = vperm.slane %v404, 2
    %412 = vmatpush.msra.mxu0 %v401
    %413 = vmatpush.msra.mxu0 %v398
    %414 = vmatpush.msra.mxu0 %v395
    %415 = vmatpush.msra.mxu0 %v392
    %416 = vmatpush.msra.mxu0 %v389
    %417 = vmatpush.msra.mxu0 %v386
    %418 = vmatpush.msra.mxu0 %v383
    %419 = vmatpush.msra.mxu0 %v380
    %420 = vmatpush.msra.mxu0 %v377
    %421 = vmatpush.msra.mxu0 %v374
    %422 = vmatpush.msra.mxu0 %v371
    %423 = vmatpush.msra.mxu0 %v368
    %424 = vmatpush.msra.mxu0 %v365
    %425 = vmatpush.msra.mxu0 %v362
    %426 = vmatpush.msra.mxu0 %v359
    %427 = vmatpush.msra.mxu0 %v356
    %428 = vmatmul.f32.gmra.mxu0 %v353
    %v429 = vpop.f32.mrf.mxu0
    %v430 = vadd.f32 %v406, %v429
    %431 = vmatmul.f32.gmra.mxu0 %v354
    %v432 = vpop.f32.mrf.mxu0
    %v433 = vadd.f32 %v406, %v432
    %434 = vmatmul.f32.gmra.mxu0 %v355
    %v435 = vpop.f32.mrf.mxu0
    %v436 = vadd.f32 %v406, %v435
    %437 = vdwg.mxu0
    %438 = vmatpush.msra.mxu0 %v402
    %439 = vmatpush.msra.mxu0 %v399
    %440 = vmatpush.msra.mxu0 %v396
    %441 = vmatpush.msra.mxu0 %v393
    %442 = vmatpush.msra.mxu0 %v390
    %443 = vmatpush.msra.mxu0 %v387
    %444 = vmatpush.msra.mxu0 %v384
    %445 = vmatpush.msra.mxu0 %v381
    %446 = vmatpush.msra.mxu0 %v378
    %447 = vmatpush.msra.mxu0 %v375
    %448 = vmatpush.msra.mxu0 %v372
    %449 = vmatpush.msra.mxu0 %v369
    %450 = vmatpush.msra.mxu0 %v366
    %451 = vmatpush.msra.mxu0 %v363
    %452 = vmatpush.msra.mxu0 %v360
    %453 = vmatpush.msra.mxu0 %v357
    %454 = vmatmul.f32.gmra.mxu0 %v353
    %v455 = vpop.f32.mrf.mxu0
    %v456 = vadd.f32 %v407, %v455
    %457 = vmatmul.f32.gmra.mxu0 %v354
    %v458 = vpop.f32.mrf.mxu0
    %v459 = vadd.f32 %v407, %v458
    %460 = vmatmul.f32.gmra.mxu0 %v355
    %v461 = vpop.f32.mrf.mxu0
    %v462 = vadd.f32 %v407, %v461
    %463 = vdwg.mxu0
    %464 = vmatpush.msra.mxu0 %v403
    %465 = vmatpush.msra.mxu0 %v400
    %466 = vmatpush.msra.mxu0 %v397
    %467 = vmatpush.msra.mxu0 %v394
    %468 = vmatpush.msra.mxu0 %v391
    %469 = vmatpush.msra.mxu0 %v388
    %470 = vmatpush.msra.mxu0 %v385
    %471 = vmatpush.msra.mxu0 %v382
    %472 = vmatpush.msra.mxu0 %v379
    %473 = vmatpush.msra.mxu0 %v376
    %474 = vmatpush.msra.mxu0 %v373
    %475 = vmatpush.msra.mxu0 %v370
    %476 = vmatpush.msra.mxu0 %v367
    %477 = vmatpush.msra.mxu0 %v364
    %478 = vmatpush.msra.mxu0 %v361
    %479 = vmatpush.msra.mxu0 %v358
    %480 = vmatmul.f32.gmra.mxu0 %v353
    %v481 = vpop.f32.mrf.mxu0
    %v482 = vadd.f32 %v408, %v481
    %483 = vmatmul.f32.gmra.mxu0 %v354
    %v484 = vpop.f32.mrf.mxu0
    %v485 = vadd.f32 %v408, %v484
    %486 = vmatmul.f32.gmra.mxu0 %v355
    %v487 = vpop.f32.mrf.mxu0
    %v488 = vadd.f32 %v408, %v487
    %489 = vdwg.mxu0
    %490 = vmatpush.xpose.msra.mxu0 0.0
    %491 = vmatpush.xpose.msra.mxu0 0.0
    %492 = vmatpush.xpose.msra.mxu0 0.0
    %493 = vmatpush.xpose.msra.mxu0 0.0
    %494 = vmatpush.xpose.msra.mxu0 0.0
    %495 = vmatpush.xpose.msra.mxu0 0.0
    %496 = vmatpush.xpose.msra.mxu0 0.0
    %497 = vmatpush.xpose.msra.mxu0 0.0
    %498 = vmatpush.xpose.msra.mxu0 0.0
    %499 = vmatpush.xpose.msra.mxu0 0.0
    %500 = vmatpush.xpose.msra.mxu0 0.0
    %501 = vmatpush.xpose.msra.mxu0 0.0
    %502 = vmatpush.xpose.msra.mxu0 0.0
    %503 = vmatpush.xpose.msra.mxu0 %v462
    %504 = vmatpush.xpose.msra.mxu0 %v459
    %505 = vmatpush.xpose.msra.mxu0 %v456
    %506 = vmatmul.f32.gmra.mxu0 %v430
    %v507 = vpop.f32.mrf.mxu0
    %v508 = vadd.f32 %v272, %v507
    %509 = vmatmul.f32.gmra.mxu0 %v433
    %v510 = vpop.f32.mrf.mxu0
    %v511 = vadd.f32 %v273, %v510
    %512 = vmatmul.f32.gmra.mxu0 %v436
    %v513 = vpop.f32.mrf.mxu0
    %v514 = vadd.f32 %v274, %v513
    %515 = vdwg.mxu0
    %vm516 = vcmask 195584
    %v517 = vsel %vm516, %v508, -inf
    %518 = vmax.xlane.f32.xlu0 %v517
    %v519 = vpop.xlane.xlu0 %518
    %v520 = vsel %vm516, %v511, -inf
    %521 = vmax.xlane.f32.xlu0 %v520
    %v522 = vpop.xlane.xlu0 %521
    %v523 = vsel %vm516, %v514, -inf
    %524 = vmax.xlane.f32.xlu0 %v523
    %v525 = vpop.xlane.xlu0 %524
    %v526 = vsub.f32 %v508, %v519
    %v527 = vsub.f32 %v511, %v522
    %v528 = vsub.f32 %v514, %v525
    %v529 = vmul.f32 %v526, 1.442695
    %v530 = vpow.pop %v529
    %v531 = vmul.f32 %v527, 1.442695
    %v532 = vpow.pop %v531
    %v533 = vmul.f32 %v528, 1.442695
    %v534 = vpow.pop %v533
    %v535 = vsel %vm516, %v530, 0.0
    %536 = vadd.xlane.f32.xlu0 %v535
    %v537 = vpop.xlane.xlu0 %536
    %v538 = vsel %vm516, %v532, 0.0
    %539 = vadd.xlane.f32.xlu0 %v538
    %v540 = vpop.xlane.xlu0 %539
    %v541 = vsel %vm516, %v534, 0.0
    %542 = vadd.xlane.f32.xlu0 %v541
    %v543 = vpop.xlane.xlu0 %542
    %v544 = vrcp.pop %v537
    %v545 = vmul.f32 %v537, %v544
    %v546 = vsub.f32 1.0, %v545
    %v547 = vmul.f32 %v544, %v546
    %v548 = vadd.f32 %v544, %v547
    %vm549 = vweird.f32 %v537
    %vm550 = vweird.f32 %v544
    %vm551 = vmor %vm549, %vm550
    %v552 = vsel %vm551, %v544, %v548
    %v553 = vand.u32 2147483647, %v537
    %vm554 = vcmp.eq.f32.partialorder %v553, 8.507059e+37
    %v555 = vand.u32 %v537, 2147483648
    %v556 = vor.u32 1.1754944e-38, %v555
    %v557 = vsel %vm554, %v556, %v552
    %v558 = vmul.f32 %v530, %v557
    %v559 = vrcp.pop %v540
    %v560 = vmul.f32 %v540, %v559
    %v561 = vsub.f32 1.0, %v560
    %v562 = vmul.f32 %v559, %v561
    %v563 = vadd.f32 %v559, %v562
    %vm564 = vweird.f32 %v540
    %vm565 = vweird.f32 %v559
    %vm566 = vmor %vm564, %vm565
    %v567 = vsel %vm566, %v559, %v563
    %v568 = vand.u32 2147483647, %v540
    %vm569 = vcmp.eq.f32.partialorder %v568, 8.507059e+37
    %v570 = vand.u32 %v540, 2147483648
    %v571 = vor.u32 1.1754944e-38, %v570
    %v572 = vsel %vm569, %v571, %v567
    %v573 = vmul.f32 %v532, %v572
    %v574 = vrcp.pop %v543
    %v575 = vmul.f32 %v543, %v574
    %v576 = vsub.f32 1.0, %v575
    %v577 = vmul.f32 %v574, %v576
    %v578 = vadd.f32 %v574, %v577
    %vm579 = vweird.f32 %v543
    %vm580 = vweird.f32 %v574
    %vm581 = vmor %vm579, %vm580
    %v582 = vsel %vm581, %v574, %v578
    %v583 = vand.u32 2147483647, %v543
    %vm584 = vcmp.eq.f32.partialorder %v583, 8.507059e+37
    %v585 = vand.u32 %v543, 2147483648
    %v586 = vor.u32 1.1754944e-38, %v585
    %v587 = vsel %vm584, %v586, %v582
    %v588 = vmul.f32 %v534, %v587
    %v590 = vsel %vm516, %v558, 0
    %v593 = vsel %vm516, %v573, 0
    %v596 = vsel %vm516, %v588, 0
    %598 = vmatpush.msra.mxu0 0.0
    %599 = vmatpush.msra.mxu0 0.0
    %600 = vmatpush.msra.mxu0 0.0
    %601 = vmatpush.msra.mxu0 0.0
    %602 = vmatpush.msra.mxu0 0.0
    %603 = vmatpush.msra.mxu0 0.0
    %604 = vmatpush.msra.mxu0 0.0
    %605 = vmatpush.msra.mxu0 0.0
    %606 = vmatpush.msra.mxu0 0.0
    %607 = vmatpush.msra.mxu0 0.0
    %608 = vmatpush.msra.mxu0 0.0
    %609 = vmatpush.msra.mxu0 0.0
    %610 = vmatpush.msra.mxu0 0.0
    %611 = vmatpush.msra.mxu0 %v488
    %612 = vmatpush.msra.mxu0 %v485
    %613 = vmatpush.msra.mxu0 %v482
    %614 = vmatmul.f32.gmra.mxu0 %v590
    %v615 = vpop.f32.mrf.mxu0
    %v616 = vadd.f32 0.0, %v615
    %617 = vmatmul.f32.gmra.mxu0 %v593
    %v618 = vpop.f32.mrf.mxu0
    %v619 = vadd.f32 0.0, %v618
    %620 = vmatmul.f32.gmra.mxu0 %v596
    %v621 = vpop.f32.mrf.mxu0
    %v622 = vadd.f32 0.0, %v621
    %623 = vdwg.mxu0
    %v624 = vld [vmem:[#allocation7] sm:$0xff]
    %v625 = vld [vmem:[#allocation7 + $0x8] sm:$0xff]
    %v626 = vld [vmem:[#allocation7 + $0x10] sm:$0xff]
    %v627 = vld [vmem:[#allocation7 + $0x18] sm:$0xff]
    %v628 = vld [vmem:[#allocation7 + $0x20] sm:$0xff]
    %v629 = vld [vmem:[#allocation7 + $0x28] sm:$0xff]
    %v630 = vld [vmem:[#allocation7 + $0x30] sm:$0xff]
    %v631 = vld [vmem:[#allocation7 + $0x38] sm:$0xff]
    %v632 = vld [vmem:[#allocation7 + $0x40] sm:$0xff]
    %v633 = vld [vmem:[#allocation7 + $0x48] sm:$0xff]
    %v634 = vld [vmem:[#allocation7 + $0x50] sm:$0xff]
    %v635 = vld [vmem:[#allocation7 + $0x58] sm:$0xff]
    %v636 = vld [vmem:[#allocation7 + $0x60] sm:$0xff]
    %v637 = vld [vmem:[#allocation7 + $0x68] sm:$0xff]
    %v638 = vld [vmem:[#allocation7 + $0x70] sm:$0xff]
    %v639 = vld [vmem:[#allocation7 + $0x78] sm:$0xff]
    %v640 = vld [vmem:[%s11] sm:$0x1]
    %v642 = vperm.slane %v640, 0
    %644 = vmatpush.msra.mxu0 %v639
    %645 = vmatpush.msra.mxu0 %v638
    %646 = vmatpush.msra.mxu0 %v637
    %647 = vmatpush.msra.mxu0 %v636
    %648 = vmatpush.msra.mxu0 %v635
    %649 = vmatpush.msra.mxu0 %v634
    %650 = vmatpush.msra.mxu0 %v633
    %651 = vmatpush.msra.mxu0 %v632
    %652 = vmatpush.msra.mxu0 %v631
    %653 = vmatpush.msra.mxu0 %v630
    %654 = vmatpush.msra.mxu0 %v629
    %655 = vmatpush.msra.mxu0 %v628
    %656 = vmatpush.msra.mxu0 %v627
    %657 = vmatpush.msra.mxu0 %v626
    %658 = vmatpush.msra.mxu0 %v625
    %659 = vmatpush.msra.mxu0 %v624
    %660 = vmatmul.f32.gmra.mxu0 %v616
    %v661 = vpop.f32.mrf.mxu0
    %v662 = vadd.f32 %v642, %v661
    %663 = vmatmul.f32.gmra.mxu0 %v619
    %v664 = vpop.f32.mrf.mxu0
    %v665 = vadd.f32 %v642, %v664
    %666 = vmatmul.f32.gmra.mxu0 %v622
    %v667 = vpop.f32.mrf.mxu0
    %v668 = vadd.f32 %v642, %v667
    %669 = vdwg.mxu0
    %v670 = vadd.f32 %v256, %v662
    %v671 = vadd.f32 %v264, %v665
    %v672 = vadd.f32 %v271, %v668
    %v673 = vld [vmem:[%s12] sm:$0x1]
    %v674 = vld [vmem:[%s13] sm:$0x1]
    %675 = vadd.xlane.f32.xlu0 %v670
    %v676 = vpop.xlane.xlu0 %675
    %677 = vadd.xlane.f32.xlu0 %v671
    %v678 = vpop.xlane.xlu0 %677
    %679 = vadd.xlane.f32.xlu0 %v672
    %v680 = vpop.xlane.xlu0 %679
    %v681 = vmul.f32 %v676, %v289
    %v682 = vmul.f32 %v678, %v289
    %v683 = vmul.f32 %v680, %v289
    %v684 = vsub.f32 %v670, %v681
    %v685 = vsub.f32 %v671, %v682
    %v686 = vsub.f32 %v672, %v683
    %v687 = vmul.f32 %v684, %v684
    %v688 = vmul.f32 %v685, %v685
    %v689 = vmul.f32 %v686, %v686
    %690 = vadd.xlane.f32.xlu0 %v687
    %v691 = vpop.xlane.xlu0 %690
    %692 = vadd.xlane.f32.xlu0 %v688
    %v693 = vpop.xlane.xlu0 %692
    %694 = vadd.xlane.f32.xlu0 %v689
    %v695 = vpop.xlane.xlu0 %694
    %v696 = vmul.f32 %v691, %v289
    %v697 = vmul.f32 %v693, %v289
    %v698 = vmul.f32 %v695, %v289
    %v699 = vadd.f32 %v696, 1e-05
    %v700 = vadd.f32 %v697, 1e-05
    %v701 = vadd.f32 %v698, 1e-05
    %v702 = vrsqrt.pop %v699
    %v703 = vmul.f32 %v702, %v699
    %v704 = vmul.f32 %v703, %v702
    %v705 = vmul.f32 0.5, %v704
    %v706 = vsub.f32 1.5, %v705
    %v707 = vmul.f32 %v702, %v706
    %vm708 = vweird.f32 %v699
    %vm709 = vweird.f32 %v702
    %vm710 = vmor %vm708, %vm709
    %v711 = vsel %vm710, %v702, %v707
    %v712 = vrsqrt.pop %v700
    %v713 = vmul.f32 %v712, %v700
    %v714 = vmul.f32 %v713, %v712
    %v715 = vmul.f32 0.5, %v714
    %v716 = vsub.f32 1.5, %v715
    %v717 = vmul.f32 %v712, %v716
    %vm718 = vweird.f32 %v700
    %vm719 = vweird.f32 %v712
    %vm720 = vmor %vm718, %vm719
    %v721 = vsel %vm720, %v712, %v717
    %v722 = vrsqrt.pop %v701
    %v723 = vmul.f32 %v722, %v701
    %v724 = vmul.f32 %v723, %v722
    %v725 = vmul.f32 0.5, %v724
    %v726 = vsub.f32 1.5, %v725
    %v727 = vmul.f32 %v722, %v726
    %vm728 = vweird.f32 %v701
    %vm729 = vweird.f32 %v722
    %vm730 = vmor %vm728, %vm729
    %v731 = vsel %vm730, %v722, %v727
    %v732 = vmul.f32 %v684, %v711
    %v733 = vmul.f32 %v685, %v721
    %v734 = vmul.f32 %v686, %v731
    %v736 = vperm.slane %v673, 0
    %v738 = vmul.f32 %v732, %v736
    %v739 = vmul.f32 %v733, %v736
    %v740 = vmul.f32 %v734, %v736
    %v742 = vperm.slane %v674, 0
    %v744 = vadd.f32 %v738, %v742
    %v745 = vadd.f32 %v739, %v742
    %v746 = vadd.f32 %v740, %v742
    %v747 = vld [vmem:[#allocation8] sm:$0xff]
    %v748 = vld [vmem:[#allocation8 + $0x8] sm:$0xff]
    %v749 = vld [vmem:[#allocation8 + $0x10] sm:$0xff]
    %v750 = vld [vmem:[#allocation8 + $0x18] sm:$0xff]
    %v751 = vld [vmem:[#allocation8 + $0x20] sm:$0xff]
    %v752 = vld [vmem:[#allocation8 + $0x28] sm:$0xff]
    %v753 = vld [vmem:[#allocation8 + $0x30] sm:$0xff]
    %v754 = vld [vmem:[#allocation8 + $0x38] sm:$0xff]
    %v755 = vld [vmem:[#allocation8 + $0x40] sm:$0xff]
    %v756 = vld [vmem:[#allocation8 + $0x48] sm:$0xff]
    %v757 = vld [vmem:[#allocation8 + $0x50] sm:$0xff]
    %v758 = vld [vmem:[#allocation8 + $0x58] sm:$0xff]
    %v759 = vld [vmem:[#allocation8 + $0x60] sm:$0xff]
    %v760 = vld [vmem:[#allocation8 + $0x68] sm:$0xff]
    %v761 = vld [vmem:[#allocation8 + $0x70] sm:$0xff]
    %v762 = vld [vmem:[#allocation8 + $0x78] sm:$0xff]
    %v763 = vld [vmem:[#allocation8 + $0x80] sm:$0xff]
    %v764 = vld [vmem:[#allocation8 + $0x88] sm:$0xff]
    %v765 = vld [vmem:[#allocation8 + $0x90] sm:$0xff]
    %v766 = vld [vmem:[#allocation8 + $0x98] sm:$0xff]
    %v767 = vld [vmem:[#allocation8 + $0xa0] sm:$0xff]
    %v768 = vld [vmem:[#allocation8 + $0xa8] sm:$0xff]
    %v769 = vld [vmem:[#allocation8 + $0xb0] sm:$0xff]
    %v770 = vld [vmem:[#allocation8 + $0xb8] sm:$0xff]
    %v771 = vld [vmem:[#allocation8 + $0xc0] sm:$0xff]
    %v772 = vld [vmem:[#allocation8 + $0xc8] sm:$0xff]
    %v773 = vld [vmem:[#allocation8 + $0xd0] sm:$0xff]
    %v774 = vld [vmem:[#allocation8 + $0xd8] sm:$0xff]
    %v775 = vld [vmem:[#allocation8 + $0xe0] sm:$0xff]
    %v776 = vld [vmem:[#allocation8 + $0xe8] sm:$0xff]
    %v777 = vld [vmem:[#allocation8 + $0xf0] sm:$0xff]
    %v778 = vld [vmem:[#allocation8 + $0xf8] sm:$0xff]
    %v779 = vld [vmem:[#allocation8 + $0x100] sm:$0xff]
    %v780 = vld [vmem:[#allocation8 + $0x108] sm:$0xff]
    %v781 = vld [vmem:[#allocation8 + $0x110] sm:$0xff]
    %v782 = vld [vmem:[#allocation8 + $0x118] sm:$0xff]
    %v783 = vld [vmem:[#allocation8 + $0x120] sm:$0xff]
    %v784 = vld [vmem:[#allocation8 + $0x128] sm:$0xff]
    %v785 = vld [vmem:[#allocation8 + $0x130] sm:$0xff]
    %v786 = vld [vmem:[#allocation8 + $0x138] sm:$0xff]
    %v787 = vld [vmem:[#allocation8 + $0x140] sm:$0xff]
    %v788 = vld [vmem:[#allocation8 + $0x148] sm:$0xff]
    %v789 = vld [vmem:[#allocation8 + $0x150] sm:$0xff]
    %v790 = vld [vmem:[#allocation8 + $0x158] sm:$0xff]
    %v791 = vld [vmem:[#allocation8 + $0x160] sm:$0xff]
    %v792 = vld [vmem:[#allocation8 + $0x168] sm:$0xff]
    %v793 = vld [vmem:[#allocation8 + $0x170] sm:$0xff]
    %v794 = vld [vmem:[#allocation8 + $0x178] sm:$0xff]
    %v795 = vld [vmem:[#allocation8 + $0x180] sm:$0xff]
    %v796 = vld [vmem:[#allocation8 + $0x188] sm:$0xff]
    %v797 = vld [vmem:[#allocation8 + $0x190] sm:$0xff]
    %v798 = vld [vmem:[#allocation8 + $0x198] sm:$0xff]
    %v799 = vld [vmem:[#allocation8 + $0x1a0] sm:$0xff]
    %v800 = vld [vmem:[#allocation8 + $0x1a8] sm:$0xff]
    %v801 = vld [vmem:[#allocation8 + $0x1b0] sm:$0xff]
    %v802 = vld [vmem:[#allocation8 + $0x1b8] sm:$0xff]
    %v803 = vld [vmem:[#allocation8 + $0x1c0] sm:$0xff]
    %v804 = vld [vmem:[#allocation8 + $0x1c8] sm:$0xff]
    %v805 = vld [vmem:[#allocation8 + $0x1d0] sm:$0xff]
    %v806 = vld [vmem:[#allocation8 + $0x1d8] sm:$0xff]
    %v807 = vld [vmem:[#allocation8 + $0x1e0] sm:$0xff]
    %v808 = vld [vmem:[#allocation8 + $0x1e8] sm:$0xff]
    %v809 = vld [vmem:[#allocation8 + $0x1f0] sm:$0xff]
    %v810 = vld [vmem:[#allocation8 + $0x1f8] sm:$0xff]
    %v811 = vld [vmem:[%s15] sm:$0xf]
    %v813 = vperm.slane %v811, 0
    %v814 = vperm.slane %v811, 1
    %v815 = vperm.slane %v811, 2
    %v816 = vperm.slane %v811, 3
    %821 = vmatpush.msra.mxu0 %v807
    %822 = vmatpush.msra.mxu0 %v803
    %823 = vmatpush.msra.mxu0 %v799
    %824 = vmatpush.msra.mxu0 %v795
    %825 = vmatpush.msra.mxu0 %v791
    %826 = vmatpush.msra.mxu0 %v787
    %827 = vmatpush.msra.mxu0 %v783
    %828 = vmatpush.msra.mxu0 %v779
    %829 = vmatpush.msra.mxu0 %v775
    %830 = vmatpush.msra.mxu0 %v771
    %831 = vmatpush.msra.mxu0 %v767
    %832 = vmatpush.msra.mxu0 %v763
    %833 = vmatpush.msra.mxu0 %v759
    %834 = vmatpush.msra.mxu0 %v755
    %835 = vmatpush.msra.mxu0 %v751
    %836 = vmatpush.msra.mxu0 %v747
    %837 = vmatmul.f32.gmra.mxu0 %v744
    %v838 = vpop.f32.mrf.mxu0
    %v839 = vadd.f32 %v813, %v838
    %840 = vmatmul.f32.gmra.mxu0 %v745
    %v841 = vpop.f32.mrf.mxu0
    %v842 = vadd.f32 %v813, %v841
    %843 = vmatmul.f32.gmra.mxu0 %v746
    %v844 = vpop.f32.mrf.mxu0
    %v845 = vadd.f32 %v813, %v844
    %846 = vdwg.mxu0
    %847 = vmatpush.msra.mxu0 %v808
    %848 = vmatpush.msra.mxu0 %v804
    %849 = vmatpush.msra.mxu0 %v800
    %850 = vmatpush.msra.mxu0 %v796
    %851 = vmatpush.msra.mxu0 %v792
    %852 = vmatpush.msra.mxu0 %v788
    %853 = vmatpush.msra.mxu0 %v784
    %854 = vmatpush.msra.mxu0 %v780
    %855 = vmatpush.msra.mxu0 %v776
    %856 = vmatpush.msra.mxu0 %v772
    %857 = vmatpush.msra.mxu0 %v768
    %858 = vmatpush.msra.mxu0 %v764
    %859 = vmatpush.msra.mxu0 %v760
    %860 = vmatpush.msra.mxu0 %v756
    %861 = vmatpush.msra.mxu0 %v752
    %862 = vmatpush.msra.mxu0 %v748
    %863 = vmatmul.f32.gmra.mxu0 %v744
    %v864 = vpop.f32.mrf.mxu0
    %v865 = vadd.f32 %v814, %v864
    %866 = vmatmul.f32.gmra.mxu0 %v745
    %v867 = vpop.f32.mrf.mxu0
    %v868 = vadd.f32 %v814, %v867
    %869 = vmatmul.f32.gmra.mxu0 %v746
    %v870 = vpop.f32.mrf.mxu0
    %v871 = vadd.f32 %v814, %v870
    %872 = vdwg.mxu0
    %873 = vmatpush.msra.mxu0 %v809
    %874 = vmatpush.msra.mxu0 %v805
    %875 = vmatpush.msra.mxu0 %v801
    %876 = vmatpush.msra.mxu0 %v797
    %877 = vmatpush.msra.mxu0 %v793
    %878 = vmatpush.msra.mxu0 %v789
    %879 = vmatpush.msra.mxu0 %v785
    %880 = vmatpush.msra.mxu0 %v781
    %881 = vmatpush.msra.mxu0 %v777
    %882 = vmatpush.msra.mxu0 %v773
    %883 = vmatpush.msra.mxu0 %v769
    %884 = vmatpush.msra.mxu0 %v765
    %885 = vmatpush.msra.mxu0 %v761
    %886 = vmatpush.msra.mxu0 %v757
    %887 = vmatpush.msra.mxu0 %v753
    %888 = vmatpush.msra.mxu0 %v749
    %889 = vmatmul.f32.gmra.mxu0 %v744
    %v890 = vpop.f32.mrf.mxu0
    %v891 = vadd.f32 %v815, %v890
    %892 = vmatmul.f32.gmra.mxu0 %v745
    %v893 = vpop.f32.mrf.mxu0
    %v894 = vadd.f32 %v815, %v893
    %895 = vmatmul.f32.gmra.mxu0 %v746
    %v896 = vpop.f32.mrf.mxu0
    %v897 = vadd.f32 %v815, %v896
    %898 = vdwg.mxu0
    %899 = vmatpush.msra.mxu0 %v810
    %900 = vmatpush.msra.mxu0 %v806
    %901 = vmatpush.msra.mxu0 %v802
    %902 = vmatpush.msra.mxu0 %v798
    %903 = vmatpush.msra.mxu0 %v794
    %904 = vmatpush.msra.mxu0 %v790
    %905 = vmatpush.msra.mxu0 %v786
    %906 = vmatpush.msra.mxu0 %v782
    %907 = vmatpush.msra.mxu0 %v778
    %908 = vmatpush.msra.mxu0 %v774
    %909 = vmatpush.msra.mxu0 %v770
    %910 = vmatpush.msra.mxu0 %v766
    %911 = vmatpush.msra.mxu0 %v762
    %912 = vmatpush.msra.mxu0 %v758
    %913 = vmatpush.msra.mxu0 %v754
    %914 = vmatpush.msra.mxu0 %v750
    %915 = vmatmul.f32.gmra.mxu0 %v744
    %v916 = vpop.f32.mrf.mxu0
    %v917 = vadd.f32 %v816, %v916
    %918 = vmatmul.f32.gmra.mxu0 %v745
    %v919 = vpop.f32.mrf.mxu0
    %v920 = vadd.f32 %v816, %v919
    %921 = vmatmul.f32.gmra.mxu0 %v746
    %v922 = vpop.f32.mrf.mxu0
    %v923 = vadd.f32 %v816, %v922
    %924 = vdwg.mxu0
    %v925 = vmul.f32 %v839, 0.5
    %v926 = vmul.f32 %v865, 0.5
    %v927 = vmul.f32 %v891, 0.5
    %v928 = vmul.f32 %v917, 0.5
    %v929 = vmul.f32 %v842, 0.5
    %v930 = vmul.f32 %v868, 0.5
    %v931 = vmul.f32 %v894, 0.5
    %v932 = vmul.f32 %v920, 0.5
    %v933 = vmul.f32 %v845, 0.5
    %v934 = vmul.f32 %v871, 0.5
    %v935 = vmul.f32 %v897, 0.5
    %v936 = vmul.f32 %v923, 0.5
    %v937 = vmul.f32 %v839, 0.044715
    %v938 = vmul.f32 %v865, 0.044715
    %v939 = vmul.f32 %v891, 0.044715
    %v940 = vmul.f32 %v917, 0.044715
    %v941 = vmul.f32 %v842, 0.044715
    %v942 = vmul.f32 %v868, 0.044715
    %v943 = vmul.f32 %v894, 0.044715
    %v944 = vmul.f32 %v920, 0.044715
    %v945 = vmul.f32 %v845, 0.044715
    %v946 = vmul.f32 %v871, 0.044715
    %v947 = vmul.f32 %v897, 0.044715
    %v948 = vmul.f32 %v923, 0.044715
    %v949 = vmul.f32 %v937, %v839
    %v950 = vmul.f32 %v938, %v865
    %v951 = vmul.f32 %v939, %v891
    %v952 = vmul.f32 %v940, %v917
    %v953 = vmul.f32 %v941, %v842
    %v954 = vmul.f32 %v942, %v868
    %v955 = vmul.f32 %v943, %v894
    %v956 = vmul.f32 %v944, %v920
    %v957 = vmul.f32 %v945, %v845
    %v958 = vmul.f32 %v946, %v871
    %v959 = vmul.f32 %v947, %v897
    %v960 = vmul.f32 %v948, %v923
    %v961 = vmul.f32 %v949, %v839
    %v962 = vmul.f32 %v950, %v865
    %v963 = vmul.f32 %v951, %v891
    %v964 = vmul.f32 %v952, %v917
    %v965 = vmul.f32 %v953, %v842
    %v966 = vmul.f32 %v954, %v868
    %v967 = vmul.f32 %v955, %v894
    %v968 = vmul.f32 %v956, %v920
    %v969 = vmul.f32 %v957, %v845
    %v970 = vmul.f32 %v958, %v871
    %v971 = vmul.f32 %v959, %v897
    %v972 = vmul.f32 %v960, %v923
    %v973 = vadd.f32 %v839, %v961
    %v974 = vadd.f32 %v865, %v962
    %v975 = vadd.f32 %v891, %v963
    %v976 = vadd.f32 %v917, %v964
    %v977 = vadd.f32 %v842, %v965
    %v978 = vadd.f32 %v868, %v966
    %v979 = vadd.f32 %v894, %v967
    %v980 = vadd.f32 %v920, %v968
    %v981 = vadd.f32 %v845, %v969
    %v982 = vadd.f32 %v871, %v970
    %v983 = vadd.f32 %v897, %v971
    %v984 = vadd.f32 %v923, %v972
    %v985 = vmul.f32 %v973, 0.7978846
    %v986 = vmul.f32 %v974, 0.7978846
    %v987 = vmul.f32 %v975, 0.7978846
    %v988 = vmul.f32 %v976, 0.7978846
    %v989 = vmul.f32 %v977, 0.7978846
    %v990 = vmul.f32 %v978, 0.7978846
    %v991 = vmul.f32 %v979, 0.7978846
    %v992 = vmul.f32 %v980, 0.7978846
    %v993 = vmul.f32 %v981, 0.7978846
    %v994 = vmul.f32 %v982, 0.7978846
    %v995 = vmul.f32 %v983, 0.7978846
    %v996 = vmul.f32 %v984, 0.7978846
    %v997 = vtanh.pop %v985
    %v998 = vtanh.pop %v986
    %v999 = vtanh.pop %v987
    %v1000 = vtanh.pop %v988
    %v1001 = vtanh.pop %v989
    %v1002 = vtanh.pop %v990
    %v1003 = vtanh.pop %v991
    %v1004 = vtanh.pop %v992
    %v1005 = vtanh.pop %v993
    %v1006 = vtanh.pop %v994
    %v1007 = vtanh.pop %v995
    %v1008 = vtanh.pop %v996
    %v1009 = vadd.f32 %v997, 1.0
    %v1010 = vadd.f32 %v998, 1.0
    %v1011 = vadd.f32 %v999, 1.0
    %v1012 = vadd.f32 %v1000, 1.0
    %v1013 = vadd.f32 %v1001, 1.0
    %v1014 = vadd.f32 %v1002, 1.0
    %v1015 = vadd.f32 %v1003, 1.0
    %v1016 = vadd.f32 %v1004, 1.0
    %v1017 = vadd.f32 %v1005, 1.0
    %v1018 = vadd.f32 %v1006, 1.0
    %v1019 = vadd.f32 %v1007, 1.0
    %v1020 = vadd.f32 %v1008, 1.0
    %v1021 = vmul.f32 %v925, %v1009
    %v1022 = vmul.f32 %v926, %v1010
    %v1023 = vmul.f32 %v927, %v1011
    %v1024 = vmul.f32 %v928, %v1012
    %v1025 = vmul.f32 %v929, %v1013
    %v1026 = vmul.f32 %v930, %v1014
    %v1027 = vmul.f32 %v931, %v1015
    %v1028 = vmul.f32 %v932, %v1016
    %v1029 = vmul.f32 %v933, %v1017
    %v1030 = vmul.f32 %v934, %v1018
    %v1031 = vmul.f32 %v935, %v1019
    %v1032 = vmul.f32 %v936, %v1020
    %v1033 = vld [vmem:[#allocation10] sm:$0xff]
    %v1034 = vld [vmem:[#allocation10 + $0x8] sm:$0xff]
    %v1035 = vld [vmem:[#allocation10 + $0x10] sm:$0xff]
    %v1036 = vld [vmem:[#allocation10 + $0x18] sm:$0xff]
    %v1037 = vld [vmem:[#allocation10 + $0x20] sm:$0xff]
    %v1038 = vld [vmem:[#allocation10 + $0x28] sm:$0xff]
    %v1039 = vld [vmem:[#allocation10 + $0x30] sm:$0xff]
    %v1040 = vld [vmem:[#allocation10 + $0x38] sm:$0xff]
    %v1041 = vld [vmem:[#allocation10 + $0x40] sm:$0xff]
    %v1042 = vld [vmem:[#allocation10 + $0x48] sm:$0xff]
    %v1043 = vld [vmem:[#allocation10 + $0x50] sm:$0xff]
    %v1044 = vld [vmem:[#allocation10 + $0x58] sm:$0xff]
    %v1045 = vld [vmem:[#allocation10 + $0x60] sm:$0xff]
    %v1046 = vld [vmem:[#allocation10 + $0x68] sm:$0xff]
    %v1047 = vld [vmem:[#allocation10 + $0x70] sm:$0xff]
    %v1048 = vld [vmem:[#allocation10 + $0x78] sm:$0xff]
    %v1049 = vld [vmem:[#allocation10 + $0x80] sm:$0xff]
    %v1050 = vld [vmem:[#allocation10 + $0x88] sm:$0xff]
    %v1051 = vld [vmem:[#allocation10 + $0x90] sm:$0xff]
    %v1052 = vld [vmem:[#allocation10 + $0x98] sm:$0xff]
    %v1053 = vld [vmem:[#allocation10 + $0xa0] sm:$0xff]
    %v1054 = vld [vmem:[#allocation10 + $0xa8] sm:$0xff]
    %v1055 = vld [vmem:[#allocation10 + $0xb0] sm:$0xff]
    %v1056 = vld [vmem:[#allocation10 + $0xb8] sm:$0xff]
    %v1057 = vld [vmem:[#allocation10 + $0xc0] sm:$0xff]
    %v1058 = vld [vmem:[#allocation10 + $0xc8] sm:$0xff]
    %v1059 = vld [vmem:[#allocation10 + $0xd0] sm:$0xff]
    %v1060 = vld [vmem:[#allocation10 + $0xd8] sm:$0xff]
    %v1061 = vld [vmem:[#allocation10 + $0xe0] sm:$0xff]
    %v1062 = vld [vmem:[#allocation10 + $0xe8] sm:$0xff]
    %v1063 = vld [vmem:[#allocation10 + $0xf0] sm:$0xff]
    %v1064 = vld [vmem:[#allocation10 + $0xf8] sm:$0xff]
    %v1065 = vld [vmem:[#allocation10 + $0x100] sm:$0xff]
    %v1066 = vld [vmem:[#allocation10 + $0x108] sm:$0xff]
    %v1067 = vld [vmem:[#allocation10 + $0x110] sm:$0xff]
    %v1068 = vld [vmem:[#allocation10 + $0x118] sm:$0xff]
    %v1069 = vld [vmem:[#allocation10 + $0x120] sm:$0xff]
    %v1070 = vld [vmem:[#allocation10 + $0x128] sm:$0xff]
    %v1071 = vld [vmem:[#allocation10 + $0x130] sm:$0xff]
    %v1072 = vld [vmem:[#allocation10 + $0x138] sm:$0xff]
    %v1073 = vld [vmem:[#allocation10 + $0x140] sm:$0xff]
    %v1074 = vld [vmem:[#allocation10 + $0x148] sm:$0xff]
    %v1075 = vld [vmem:[#allocation10 + $0x150] sm:$0xff]
    %v1076 = vld [vmem:[#allocation10 + $0x158] sm:$0xff]
    %v1077 = vld [vmem:[#allocation10 + $0x160] sm:$0xff]
    %v1078 = vld [vmem:[#allocation10 + $0x168] sm:$0xff]
    %v1079 = vld [vmem:[#allocation10 + $0x170] sm:$0xff]
    %v1080 = vld [vmem:[#allocation10 + $0x178] sm:$0xff]
    %v1081 = vld [vmem:[#allocation10 + $0x180] sm:$0xff]
    %v1082 = vld [vmem:[#allocation10 + $0x188] sm:$0xff]
    %v1083 = vld [vmem:[#allocation10 + $0x190] sm:$0xff]
    %v1084 = vld [vmem:[#allocation10 + $0x198] sm:$0xff]
    %v1085 = vld [vmem:[#allocation10 + $0x1a0] sm:$0xff]
    %v1086 = vld [vmem:[#allocation10 + $0x1a8] sm:$0xff]
    %v1087 = vld [vmem:[#allocation10 + $0x1b0] sm:$0xff]
    %v1088 = vld [vmem:[#allocation10 + $0x1b8] sm:$0xff]
    %v1089 = vld [vmem:[#allocation10 + $0x1c0] sm:$0xff]
    %v1090 = vld [vmem:[#allocation10 + $0x1c8] sm:$0xff]
    %v1091 = vld [vmem:[#allocation10 + $0x1d0] sm:$0xff]
    %v1092 = vld [vmem:[#allocation10 + $0x1d8] sm:$0xff]
    %v1093 = vld [vmem:[#allocation10 + $0x1e0] sm:$0xff]
    %v1094 = vld [vmem:[#allocation10 + $0x1e8] sm:$0xff]
    %v1095 = vld [vmem:[#allocation10 + $0x1f0] sm:$0xff]
    %v1096 = vld [vmem:[#allocation10 + $0x1f8] sm:$0xff]
    %v1097 = vld [vmem:[%s17] sm:$0x1]
    %v1099 = vperm.slane %v1097, 0
    %1101 = vmatpush.msra.mxu0 %v1048
    %1102 = vmatpush.msra.mxu0 %v1047
    %1103 = vmatpush.msra.mxu0 %v1046
    %1104 = vmatpush.msra.mxu0 %v1045
    %1105 = vmatpush.msra.mxu0 %v1044
    %1106 = vmatpush.msra.mxu0 %v1043
    %1107 = vmatpush.msra.mxu0 %v1042
    %1108 = vmatpush.msra.mxu0 %v1041
    %1109 = vmatpush.msra.mxu0 %v1040
    %1110 = vmatpush.msra.mxu0 %v1039
    %1111 = vmatpush.msra.mxu0 %v1038
    %1112 = vmatpush.msra.mxu0 %v1037
    %1113 = vmatpush.msra.mxu0 %v1036
    %1114 = vmatpush.msra.mxu0 %v1035
    %1115 = vmatpush.msra.mxu0 %v1034
    %1116 = vmatpush.msra.mxu0 %v1033
    %1117 = vmatmul.f32.gmra.mxu0 %v1021
    %v1118 = vpop.f32.mrf.mxu0
    %v1119 = vadd.f32 %v1099, %v1118
    %1120 = vmatmul.f32.gmra.mxu0 %v1025
    %v1121 = vpop.f32.mrf.mxu0
    %v1122 = vadd.f32 %v1099, %v1121
    %1123 = vmatmul.f32.gmra.mxu0 %v1029
    %v1124 = vpop.f32.mrf.mxu0
    %v1125 = vadd.f32 %v1099, %v1124
    %1126 = vdwg.mxu0
    %1127 = vmatpush.msra.mxu0 %v1064
    %1128 = vmatpush.msra.mxu0 %v1063
    %1129 = vmatpush.msra.mxu0 %v1062
    %1130 = vmatpush.msra.mxu0 %v1061
    %1131 = vmatpush.msra.mxu0 %v1060
    %1132 = vmatpush.msra.mxu0 %v1059
    %1133 = vmatpush.msra.mxu0 %v1058
    %1134 = vmatpush.msra.mxu0 %v1057
    %1135 = vmatpush.msra.mxu0 %v1056
    %1136 = vmatpush.msra.mxu0 %v1055
    %1137 = vmatpush.msra.mxu0 %v1054
    %1138 = vmatpush.msra.mxu0 %v1053
    %1139 = vmatpush.msra.mxu0 %v1052
    %1140 = vmatpush.msra.mxu0 %v1051
    %1141 = vmatpush.msra.mxu0 %v1050
    %1142 = vmatpush.msra.mxu0 %v1049
    %1143 = vmatmul.f32.gmra.mxu0 %v1022
    %v1144 = vpop.f32.mrf.mxu0
    %v1145 = vadd.f32 %v1119, %v1144
    %1146 = vmatmul.f32.gmra.mxu0 %v1026
    %v1147 = vpop.f32.mrf.mxu0
    %v1148 = vadd.f32 %v1122, %v1147
    %1149 = vmatmul.f32.gmra.mxu0 %v1030
    %v1150 = vpop.f32.mrf.mxu0
    %v1151 = vadd.f32 %v1125, %v1150
    %1152 = vdwg.mxu0
    %1153 = vmatpush.msra.mxu0 %v1080
    %1154 = vmatpush.msra.mxu0 %v1079
    %1155 = vmatpush.msra.mxu0 %v1078
    %1156 = vmatpush.msra.mxu0 %v1077
    %1157 = vmatpush.msra.mxu0 %v1076
    %1158 = vmatpush.msra.mxu0 %v1075
    %1159 = vmatpush.msra.mxu0 %v1074
    %1160 = vmatpush.msra.mxu0 %v1073
    %1161 = vmatpush.msra.mxu0 %v1072
    %1162 = vmatpush.msra.mxu0 %v1071
    %1163 = vmatpush.msra.mxu0 %v1070
    %1164 = vmatpush.msra.mxu0 %v1069
    %1165 = vmatpush.msra.mxu0 %v1068
    %1166 = vmatpush.msra.mxu0 %v1067
    %1167 = vmatpush.msra.mxu0 %v1066
    %1168 = vmatpush.msra.mxu0 %v1065
    %1169 = vmatmul.f32.gmra.mxu0 %v1023
    %v1170 = vpop.f32.mrf.mxu0
    %v1171 = vadd.f32 %v1145, %v1170
    %1172 = vmatmul.f32.gmra.mxu0 %v1027
    %v1173 = vpop.f32.mrf.mxu0
    %v1174 = vadd.f32 %v1148, %v1173
    %1175 = vmatmul.f32.gmra.mxu0 %v1031
    %v1176 = vpop.f32.mrf.mxu0
    %v1177 = vadd.f32 %v1151, %v1176
    %1178 = vdwg.mxu0
    %1179 = vmatpush.msra.mxu0 %v1096
    %1180 = vmatpush.msra.mxu0 %v1095
    %1181 = vmatpush.msra.mxu0 %v1094
    %1182 = vmatpush.msra.mxu0 %v1093
    %1183 = vmatpush.msra.mxu0 %v1092
    %1184 = vmatpush.msra.mxu0 %v1091
    %1185 = vmatpush.msra.mxu0 %v1090
    %1186 = vmatpush.msra.mxu0 %v1089
    %1187 = vmatpush.msra.mxu0 %v1088
    %1188 = vmatpush.msra.mxu0 %v1087
    %1189 = vmatpush.msra.mxu0 %v1086
    %1190 = vmatpush.msra.mxu0 %v1085
    %1191 = vmatpush.msra.mxu0 %v1084
    %1192 = vmatpush.msra.mxu0 %v1083
    %1193 = vmatpush.msra.mxu0 %v1082
    %1194 = vmatpush.msra.mxu0 %v1081
    %1195 = vmatmul.f32.gmra.mxu0 %v1024
    %v1196 = vpop.f32.mrf.mxu0
    %v1197 = vadd.f32 %v1171, %v1196
    %1198 = vmatmul.f32.gmra.mxu0 %v1028
    %v1199 = vpop.f32.mrf.mxu0
    %v1200 = vadd.f32 %v1174, %v1199
    %1201 = vmatmul.f32.gmra.mxu0 %v1032
    %v1202 = vpop.f32.mrf.mxu0
    %v1203 = vadd.f32 %v1177, %v1202
    %1204 = vdwg.mxu0
    %v1205 = vadd.f32 %v670, %v1197
    %v1206 = vadd.f32 %v671, %v1200
    %v1207 = vadd.f32 %v672, %v1203
    %s1208 = scalar_lea.vmem %s6, 1
    %v1209 = vld [vmem:[%s1208] sm:$0x1]
    %s1210 = scalar_lea.vmem %s7, 1
    %v1211 = vld [vmem:[%s1210] sm:$0x1]
    %1212 = vadd.xlane.f32.xlu0 %v1205
    %v1213 = vpop.xlane.xlu0 %1212
    %1214 = vadd.xlane.f32.xlu0 %v1206
    %v1215 = vpop.xlane.xlu0 %1214
    %1216 = vadd.xlane.f32.xlu0 %v1207
    %v1217 = vpop.xlane.xlu0 %1216
    %v1218 = vmul.f32 %v1213, %v289
    %v1219 = vmul.f32 %v1215, %v289
    %v1220 = vmul.f32 %v1217, %v289
    %v1221 = vsub.f32 %v1205, %v1218
    %v1222 = vsub.f32 %v1206, %v1219
    %v1223 = vsub.f32 %v1207, %v1220
    %v1224 = vmul.f32 %v1221, %v1221
    %v1225 = vmul.f32 %v1222, %v1222
    %v1226 = vmul.f32 %v1223, %v1223
    %1227 = vadd.xlane.f32.xlu0 %v1224
    %v1228 = vpop.xlane.xlu0 %1227
    %1229 = vadd.xlane.f32.xlu0 %v1225
    %v1230 = vpop.xlane.xlu0 %1229
    %1231 = vadd.xlane.f32.xlu0 %v1226
    %v1232 = vpop.xlane.xlu0 %1231
    %v1233 = vmul.f32 %v1228, %v289
    %v1234 = vmul.f32 %v1230, %v289
    %v1235 = vmul.f32 %v1232, %v289
    %v1236 = vadd.f32 %v1233, 1e-05
    %v1237 = vadd.f32 %v1234, 1e-05
    %v1238 = vadd.f32 %v1235, 1e-05
    %v1239 = vrsqrt.pop %v1236
    %v1240 = vmul.f32 %v1239, %v1236
    %v1241 = vmul.f32 %v1240, %v1239
    %v1242 = vmul.f32 0.5, %v1241
    %v1243 = vsub.f32 1.5, %v1242
    %v1244 = vmul.f32 %v1239, %v1243
    %vm1245 = vweird.f32 %v1236
    %vm1246 = vweird.f32 %v1239
    %vm1247 = vmor %vm1245, %vm1246
    %v1248 = vsel %vm1247, %v1239, %v1244
    %v1249 = vrsqrt.pop %v1237
    %v1250 = vmul.f32 %v1249, %v1237
    %v1251 = vmul.f32 %v1250, %v1249
    %v1252 = vmul.f32 0.5, %v1251
    %v1253 = vsub.f32 1.5, %v1252
    %v1254 = vmul.f32 %v1249, %v1253
    %vm1255 = vweird.f32 %v1237
    %vm1256 = vweird.f32 %v1249
    %vm1257 = vmor %vm1255, %vm1256
    %v1258 = vsel %vm1257, %v1249, %v1254
    %v1259 = vrsqrt.pop %v1238
    %v1260 = vmul.f32 %v1259, %v1238
    %v1261 = vmul.f32 %v1260, %v1259
    %v1262 = vmul.f32 0.5, %v1261
    %v1263 = vsub.f32 1.5, %v1262
    %v1264 = vmul.f32 %v1259, %v1263
    %vm1265 = vweird.f32 %v1238
    %vm1266 = vweird.f32 %v1259
    %vm1267 = vmor %vm1265, %vm1266
    %v1268 = vsel %vm1267, %v1259, %v1264
    %v1269 = vmul.f32 %v1221, %v1248
    %v1270 = vmul.f32 %v1222, %v1258
    %v1271 = vmul.f32 %v1223, %v1268
    %v1273 = vperm.slane %v1209, 0
    %v1275 = vmul.f32 %v1269, %v1273
    %v1276 = vmul.f32 %v1270, %v1273
    %v1277 = vmul.f32 %v1271, %v1273
    %v1279 = vperm.slane %v1211, 0
    %v1281 = vadd.f32 %v1275, %v1279
    %v1282 = vadd.f32 %v1276, %v1279
    %v1283 = vadd.f32 %v1277, %v1279
    %s1284 = scalar_lea.vmem [#allocation5], 384
    %v1285 = vld [vmem:[%s1284] sm:$0xff]
    %v1286 = vld [vmem:[%s1284 + $0x8] sm:$0xff]
    %v1287 = vld [vmem:[%s1284 + $0x10] sm:$0xff]
    %v1288 = vld [vmem:[%s1284 + $0x18] sm:$0xff]
    %v1289 = vld [vmem:[%s1284 + $0x20] sm:$0xff]
    %v1290 = vld [vmem:[%s1284 + $0x28] sm:$0xff]
    %v1291 = vld [vmem:[%s1284 + $0x30] sm:$0xff]
    %v1292 = vld [vmem:[%s1284 + $0x38] sm:$0xff]
    %v1293 = vld [vmem:[%s1284 + $0x40] sm:$0xff]
    %v1294 = vld [vmem:[%s1284 + $0x48] sm:$0xff]
    %v1295 = vld [vmem:[%s1284 + $0x50] sm:$0xff]
    %v1296 = vld [vmem:[%s1284 + $0x58] sm:$0xff]
    %v1297 = vld [vmem:[%s1284 + $0x60] sm:$0xff]
    %v1298 = vld [vmem:[%s1284 + $0x68] sm:$0xff]
    %v1299 = vld [vmem:[%s1284 + $0x70] sm:$0xff]
    %v1300 = vld [vmem:[%s1284 + $0x78] sm:$0xff]
    %v1301 = vld [vmem:[%s1284 + $0x80] sm:$0xff]
    %v1302 = vld [vmem:[%s1284 + $0x88] sm:$0xff]
    %v1303 = vld [vmem:[%s1284 + $0x90] sm:$0xff]
    %v1304 = vld [vmem:[%s1284 + $0x98] sm:$0xff]
    %v1305 = vld [vmem:[%s1284 + $0xa0] sm:$0xff]
    %v1306 = vld [vmem:[%s1284 + $0xa8] sm:$0xff]
    %v1307 = vld [vmem:[%s1284 + $0xb0] sm:$0xff]
    %v1308 = vld [vmem:[%s1284 + $0xb8] sm:$0xff]
    %v1309 = vld [vmem:[%s1284 + $0xc0] sm:$0xff]
    %v1310 = vld [vmem:[%s1284 + $0xc8] sm:$0xff]
    %v1311 = vld [vmem:[%s1284 + $0xd0] sm:$0xff]
    %v1312 = vld [vmem:[%s1284 + $0xd8] sm:$0xff]
    %v1313 = vld [vmem:[%s1284 + $0xe0] sm:$0xff]
    %v1314 = vld [vmem:[%s1284 + $0xe8] sm:$0xff]
    %v1315 = vld [vmem:[%s1284 + $0xf0] sm:$0xff]
    %v1316 = vld [vmem:[%s1284 + $0xf8] sm:$0xff]
    %v1317 = vld [vmem:[%s1284 + $0x100] sm:$0xff]
    %v1318 = vld [vmem:[%s1284 + $0x108] sm:$0xff]
    %v1319 = vld [vmem:[%s1284 + $0x110] sm:$0xff]
    %v1320 = vld [vmem:[%s1284 + $0x118] sm:$0xff]
    %v1321 = vld [vmem:[%s1284 + $0x120] sm:$0xff]
    %v1322 = vld [vmem:[%s1284 + $0x128] sm:$0xff]
    %v1323 = vld [vmem:[%s1284 + $0x130] sm:$0xff]
    %v1324 = vld [vmem:[%s1284 + $0x138] sm:$0xff]
    %v1325 = vld [vmem:[%s1284 + $0x140] sm:$0xff]
    %v1326 = vld [vmem:[%s1284 + $0x148] sm:$0xff]
    %v1327 = vld [vmem:[%s1284 + $0x150] sm:$0xff]
    %v1328 = vld [vmem:[%s1284 + $0x158] sm:$0xff]
    %v1329 = vld [vmem:[%s1284 + $0x160] sm:$0xff]
    %v1330 = vld [vmem:[%s1284 + $0x168] sm:$0xff]
    %v1331 = vld [vmem:[%s1284 + $0x170] sm:$0xff]
    %v1332 = vld [vmem:[%s1284 + $0x178] sm:$0xff]
    %s1333 = scalar_lea.vmem %s9, 3
    %v1334 = vld [vmem:[%s1333] sm:$0x7]
    %v1336 = vperm.slane %v1334, 0
    %v1337 = vperm.slane %v1334, 1
    %v1338 = vperm.slane %v1334, 2
    %1342 = vmatpush.msra.mxu0 %v1330
    %1343 = vmatpush.msra.mxu0 %v1327
    %1344 = vmatpush.msra.mxu0 %v1324
    %1345 = vmatpush.msra.mxu0 %v1321
    %1346 = vmatpush.msra.mxu0 %v1318
    %1347 = vmatpush.msra.mxu0 %v1315
    %1348 = vmatpush.msra.mxu0 %v1312
    %1349 = vmatpush.msra.mxu0 %v1309
    %1350 = vmatpush.msra.mxu0 %v1306
    %1351 = vmatpush.msra.mxu0 %v1303
    %1352 = vmatpush.msra.mxu0 %v1300
    %1353 = vmatpush.msra.mxu0 %v1297
    %1354 = vmatpush.msra.mxu0 %v1294
    %1355 = vmatpush.msra.mxu0 %v1291
    %1356 = vmatpush.msra.mxu0 %v1288
    %1357 = vmatpush.msra.mxu0 %v1285
    %1358 = vmatmul.f32.gmra.mxu0 %v1281
    %v1359 = vpop.f32.mrf.mxu0
    %v1360 = vadd.f32 %v1336, %v1359
    %1361 = vmatmul.f32.gmra.mxu0 %v1282
    %v1362 = vpop.f32.mrf.mxu0
    %v1363 = vadd.f32 %v1336, %v1362
    %1364 = vmatmul.f32.gmra.mxu0 %v1283
    %v1365 = vpop.f32.mrf.mxu0
    %v1366 = vadd.f32 %v1336, %v1365
    %1367 = vdwg.mxu0
    %1368 = vmatpush.msra.mxu0 %v1331
    %1369 = vmatpush.msra.mxu0 %v1328
    %1370 = vmatpush.msra.mxu0 %v1325
    %1371 = vmatpush.msra.mxu0 %v1322
    %1372 = vmatpush.msra.mxu0 %v1319
    %1373 = vmatpush.msra.mxu0 %v1316
    %1374 = vmatpush.msra.mxu0 %v1313
    %1375 = vmatpush.msra.mxu0 %v1310
    %1376 = vmatpush.msra.mxu0 %v1307
    %1377 = vmatpush.msra.mxu0 %v1304
    %1378 = vmatpush.msra.mxu0 %v1301
    %1379 = vmatpush.msra.mxu0 %v1298
    %1380 = vmatpush.msra.mxu0 %v1295
    %1381 = vmatpush.msra.mxu0 %v1292
    %1382 = vmatpush.msra.mxu0 %v1289
    %1383 = vmatpush.msra.mxu0 %v1286
    %1384 = vmatmul.f32.gmra.mxu0 %v1281
    %v1385 = vpop.f32.mrf.mxu0
    %v1386 = vadd.f32 %v1337, %v1385
    %1387 = vmatmul.f32.gmra.mxu0 %v1282
    %v1388 = vpop.f32.mrf.mxu0
    %v1389 = vadd.f32 %v1337, %v1388
    %1390 = vmatmul.f32.gmra.mxu0 %v1283
    %v1391 = vpop.f32.mrf.mxu0
    %v1392 = vadd.f32 %v1337, %v1391
    %1393 = vdwg.mxu0
    %1394 = vmatpush.msra.mxu0 %v1332
    %1395 = vmatpush.msra.mxu0 %v1329
    %1396 = vmatpush.msra.mxu0 %v1326
    %1397 = vmatpush.msra.mxu0 %v1323
    %1398 = vmatpush.msra.mxu0 %v1320
    %1399 = vmatpush.msra.mxu0 %v1317
    %1400 = vmatpush.msra.mxu0 %v1314
    %1401 = vmatpush.msra.mxu0 %v1311
    %1402 = vmatpush.msra.mxu0 %v1308
    %1403 = vmatpush.msra.mxu0 %v1305
    %1404 = vmatpush.msra.mxu0 %v1302
    %1405 = vmatpush.msra.mxu0 %v1299
    %1406 = vmatpush.msra.mxu0 %v1296
    %1407 = vmatpush.msra.mxu0 %v1293
    %1408 = vmatpush.msra.mxu0 %v1290
    %1409 = vmatpush.msra.mxu0 %v1287
    %1410 = vmatmul.f32.gmra.mxu0 %v1281
    %v1411 = vpop.f32.mrf.mxu0
    %v1412 = vadd.f32 %v1338, %v1411
    %1413 = vmatmul.f32.gmra.mxu0 %v1282
    %v1414 = vpop.f32.mrf.mxu0
    %v1415 = vadd.f32 %v1338, %v1414
    %1416 = vmatmul.f32.gmra.mxu0 %v1283
    %v1417 = vpop.f32.mrf.mxu0
    %v1418 = vadd.f32 %v1338, %v1417
    %1419 = vdwg.mxu0
    %1420 = vmatpush.xpose.msra.mxu0 0.0
    %1421 = vmatpush.xpose.msra.mxu0 0.0
    %1422 = vmatpush.xpose.msra.mxu0 0.0
    %1423 = vmatpush.xpose.msra.mxu0 0.0
    %1424 = vmatpush.xpose.msra.mxu0 0.0
    %1425 = vmatpush.xpose.msra.mxu0 0.0
    %1426 = vmatpush.xpose.msra.mxu0 0.0
    %1427 = vmatpush.xpose.msra.mxu0 0.0
    %1428 = vmatpush.xpose.msra.mxu0 0.0
    %1429 = vmatpush.xpose.msra.mxu0 0.0
    %1430 = vmatpush.xpose.msra.mxu0 0.0
    %1431 = vmatpush.xpose.msra.mxu0 0.0
    %1432 = vmatpush.xpose.msra.mxu0 0.0
    %1433 = vmatpush.xpose.msra.mxu0 %v1392
    %1434 = vmatpush.xpose.msra.mxu0 %v1389
    %1435 = vmatpush.xpose.msra.mxu0 %v1386
    %1436 = vmatmul.f32.gmra.mxu0 %v1360
    %v1437 = vpop.f32.mrf.mxu0
    %v1438 = vadd.f32 %v272, %v1437
    %1439 = vmatmul.f32.gmra.mxu0 %v1363
    %v1440 = vpop.f32.mrf.mxu0
    %v1441 = vadd.f32 %v273, %v1440
    %1442 = vmatmul.f32.gmra.mxu0 %v1366
    %v1443 = vpop.f32.mrf.mxu0
    %v1444 = vadd.f32 %v274, %v1443
    %1445 = vdwg.mxu0
    %v1446 = vsel %vm516, %v1438, -inf
    %1447 = vmax.xlane.f32.xlu0 %v1446
    %v1448 = vpop.xlane.xlu0 %1447
    %v1449 = vsel %vm516, %v1441, -inf
    %1450 = vmax.xlane.f32.xlu0 %v1449
    %v1451 = vpop.xlane.xlu0 %1450
    %v1452 = vsel %vm516, %v1444, -inf
    %1453 = vmax.xlane.f32.xlu0 %v1452
    %v1454 = vpop.xlane.xlu0 %1453
    %v1455 = vsub.f32 %v1438, %v1448
    %v1456 = vsub.f32 %v1441, %v1451
    %v1457 = vsub.f32 %v1444, %v1454
    %v1458 = vmul.f32 %v1455, 1.442695
    %v1459 = vpow.pop %v1458
    %v1460 = vmul.f32 %v1456, 1.442695
    %v1461 = vpow.pop %v1460
    %v1462 = vmul.f32 %v1457, 1.442695
    %v1463 = vpow.pop %v1462
    %v1464 = vsel %vm516, %v1459, 0.0
    %1465 = vadd.xlane.f32.xlu0 %v1464
    %v1466 = vpop.xlane.xlu0 %1465
    %v1467 = vsel %vm516, %v1461, 0.0
    %1468 = vadd.xlane.f32.xlu0 %v1467
    %v1469 = vpop.xlane.xlu0 %1468
    %v1470 = vsel %vm516, %v1463, 0.0
    %1471 = vadd.xlane.f32.xlu0 %v1470
    %v1472 = vpop.xlane.xlu0 %1471
    %v1473 = vrcp.pop %v1466
    %v1474 = vmul.f32 %v1466, %v1473
    %v1475 = vsub.f32 1.0, %v1474
    %v1476 = vmul.f32 %v1473, %v1475
    %v1477 = vadd.f32 %v1473, %v1476
    %vm1478 = vweird.f32 %v1466
    %vm1479 = vweird.f32 %v1473
    %vm1480 = vmor %vm1478, %vm1479
    %v1481 = vsel %vm1480, %v1473, %v1477
    %v1482 = vand.u32 2147483647, %v1466
    %vm1483 = vcmp.eq.f32.partialorder %v1482, 8.507059e+37
    %v1484 = vand.u32 %v1466, 2147483648
    %v1485 = vor.u32 1.1754944e-38, %v1484
    %v1486 = vsel %vm1483, %v1485, %v1481
    %v1487 = vmul.f32 %v1459, %v1486
    %v1488 = vrcp.pop %v1469
    %v1489 = vmul.f32 %v1469, %v1488
    %v1490 = vsub.f32 1.0, %v1489
    %v1491 = vmul.f32 %v1488, %v1490
    %v1492 = vadd.f32 %v1488, %v1491
    %vm1493 = vweird.f32 %v1469
    %vm1494 = vweird.f32 %v1488
    %vm1495 = vmor %vm1493, %vm1494
    %v1496 = vsel %vm1495, %v1488, %v1492
    %v1497 = vand.u32 2147483647, %v1469
    %vm1498 = vcmp.eq.f32.partialorder %v1497, 8.507059e+37
    %v1499 = vand.u32 %v1469, 2147483648
    %v1500 = vor.u32 1.1754944e-38, %v1499
    %v1501 = vsel %vm1498, %v1500, %v1496
    %v1502 = vmul.f32 %v1461, %v1501
    %v1503 = vrcp.pop %v1472
    %v1504 = vmul.f32 %v1472, %v1503
    %v1505 = vsub.f32 1.0, %v1504
    %v1506 = vmul.f32 %v1503, %v1505
    %v1507 = vadd.f32 %v1503, %v1506
    %vm1508 = vweird.f32 %v1472
    %vm1509 = vweird.f32 %v1503
    %vm1510 = vmor %vm1508, %vm1509
    %v1511 = vsel %vm1510, %v1503, %v1507
    %v1512 = vand.u32 2147483647, %v1472
    %vm1513 = vcmp.eq.f32.partialorder %v1512, 8.507059e+37
    %v1514 = vand.u32 %v1472, 2147483648
    %v1515 = vor.u32 1.1754944e-38, %v1514
    %v1516 = vsel %vm1513, %v1515, %v1511
    %v1517 = vmul.f32 %v1463, %v1516
    %v1519 = vsel %vm516, %v1487, 0
    %v1522 = vsel %vm516, %v1502, 0
    %v1525 = vsel %vm516, %v1517, 0
    %1527 = vmatpush.msra.mxu0 0.0
    %1528 = vmatpush.msra.mxu0 0.0
    %1529 = vmatpush.msra.mxu0 0.0
    %1530 = vmatpush.msra.mxu0 0.0
    %1531 = vmatpush.msra.mxu0 0.0
    %1532 = vmatpush.msra.mxu0 0.0
    %1533 = vmatpush.msra.mxu0 0.0
    %1534 = vmatpush.msra.mxu0 0.0
    %1535 = vmatpush.msra.mxu0 0.0
    %1536 = vmatpush.msra.mxu0 0.0
    %1537 = vmatpush.msra.mxu0 0.0
    %1538 = vmatpush.msra.mxu0 0.0
    %1539 = vmatpush.msra.mxu0 0.0
    %1540 = vmatpush.msra.mxu0 %v1418
    %1541 = vmatpush.msra.mxu0 %v1415
    %1542 = vmatpush.msra.mxu0 %v1412
    %1543 = vmatmul.f32.gmra.mxu0 %v1519
    %v1544 = vpop.f32.mrf.mxu0
    %v1545 = vadd.f32 0.0, %v1544
    %1546 = vmatmul.f32.gmra.mxu0 %v1522
    %v1547 = vpop.f32.mrf.mxu0
    %v1548 = vadd.f32 0.0, %v1547
    %1549 = vmatmul.f32.gmra.mxu0 %v1525
    %v1550 = vpop.f32.mrf.mxu0
    %v1551 = vadd.f32 0.0, %v1550
    %1552 = vdwg.mxu0
    %s1553 = scalar_lea.vmem [#allocation7], 128
    %v1554 = vld [vmem:[%s1553] sm:$0xff]
    %v1555 = vld [vmem:[%s1553 + $0x8] sm:$0xff]
    %v1556 = vld [vmem:[%s1553 + $0x10] sm:$0xff]
    %v1557 = vld [vmem:[%s1553 + $0x18] sm:$0xff]
    %v1558 = vld [vmem:[%s1553 + $0x20] sm:$0xff]
    %v1559 = vld [vmem:[%s1553 + $0x28] sm:$0xff]
    %v1560 = vld [vmem:[%s1553 + $0x30] sm:$0xff]
    %v1561 = vld [vmem:[%s1553 + $0x38] sm:$0xff]
    %v1562 = vld [vmem:[%s1553 + $0x40] sm:$0xff]
    %v1563 = vld [vmem:[%s1553 + $0x48] sm:$0xff]
    %v1564 = vld [vmem:[%s1553 + $0x50] sm:$0xff]
    %v1565 = vld [vmem:[%s1553 + $0x58] sm:$0xff]
    %v1566 = vld [vmem:[%s1553 + $0x60] sm:$0xff]
    %v1567 = vld [vmem:[%s1553 + $0x68] sm:$0xff]
    %v1568 = vld [vmem:[%s1553 + $0x70] sm:$0xff]
    %v1569 = vld [vmem:[%s1553 + $0x78] sm:$0xff]
    %s1570 = scalar_lea.vmem %s11, 1
    %v1571 = vld [vmem:[%s1570] sm:$0x1]
    %v1573 = vperm.slane %v1571, 0
    %1575 = vmatpush.msra.mxu0 %v1569
    %1576 = vmatpush.msra.mxu0 %v1568
    %1577 = vmatpush.msra.mxu0 %v1567
    %1578 = vmatpush.msra.mxu0 %v1566
    %1579 = vmatpush.msra.mxu0 %v1565
    %1580 = vmatpush.msra.mxu0 %v1564
    %1581 = vmatpush.msra.mxu0 %v1563
    %1582 = vmatpush.msra.mxu0 %v1562
    %1583 = vmatpush.msra.mxu0 %v1561
    %1584 = vmatpush.msra.mxu0 %v1560
    %1585 = vmatpush.msra.mxu0 %v1559
    %1586 = vmatpush.msra.mxu0 %v1558
    %1587 = vmatpush.msra.mxu0 %v1557
    %1588 = vmatpush.msra.mxu0 %v1556
    %1589 = vmatpush.msra.mxu0 %v1555
    %1590 = vmatpush.msra.mxu0 %v1554
    %1591 = vmatmul.f32.gmra.mxu0 %v1545
    %v1592 = vpop.f32.mrf.mxu0
    %v1593 = vadd.f32 %v1573, %v1592
    %1594 = vmatmul.f32.gmra.mxu0 %v1548
    %v1595 = vpop.f32.mrf.mxu0
    %v1596 = vadd.f32 %v1573, %v1595
    %1597 = vmatmul.f32.gmra.mxu0 %v1551
    %v1598 = vpop.f32.mrf.mxu0
    %v1599 = vadd.f32 %v1573, %v1598
    %1600 = vdwg.mxu0
    %v1601 = vadd.f32 %v1205, %v1593
    %v1602 = vadd.f32 %v1206, %v1596
    %v1603 = vadd.f32 %v1207, %v1599
    %s1604 = scalar_lea.vmem %s12, 1
    %v1605 = vld [vmem:[%s1604] sm:$0x1]
    %s1606 = scalar_lea.vmem %s13, 1
    %v1607 = vld [vmem:[%s1606] sm:$0x1]
    %1608 = vadd.xlane.f32.xlu0 %v1601
    %v1609 = vpop.xlane.xlu0 %1608
    %1610 = vadd.xlane.f32.xlu0 %v1602
    %v1611 = vpop.xlane.xlu0 %1610
    %1612 = vadd.xlane.f32.xlu0 %v1603
    %v1613 = vpop.xlane.xlu0 %1612
    %v1614 = vmul.f32 %v1609, %v289
    %v1615 = vmul.f32 %v1611, %v289
    %v1616 = vmul.f32 %v1613, %v289
    %v1617 = vsub.f32 %v1601, %v1614
    %v1618 = vsub.f32 %v1602, %v1615
    %v1619 = vsub.f32 %v1603, %v1616
    %v1620 = vmul.f32 %v1617, %v1617
    %v1621 = vmul.f32 %v1618, %v1618
    %v1622 = vmul.f32 %v1619, %v1619
    %1623 = vadd.xlane.f32.xlu0 %v1620
    %v1624 = vpop.xlane.xlu0 %1623
    %1625 = vadd.xlane.f32.xlu0 %v1621
    %v1626 = vpop.xlane.xlu0 %1625
    %1627 = vadd.xlane.f32.xlu0 %v1622
    %v1628 = vpop.xlane.xlu0 %1627
    %v1629 = vmul.f32 %v1624, %v289
    %v1630 = vmul.f32 %v1626, %v289
    %v1631 = vmul.f32 %v1628, %v289
    %v1632 = vadd.f32 %v1629, 1e-05
    %v1633 = vadd.f32 %v1630, 1e-05
    %v1634 = vadd.f32 %v1631, 1e-05
    %v1635 = vrsqrt.pop %v1632
    %v1636 = vmul.f32 %v1635, %v1632
    %v1637 = vmul.f32 %v1636, %v1635
    %v1638 = vmul.f32 0.5, %v1637
    %v1639 = vsub.f32 1.5, %v1638
    %v1640 = vmul.f32 %v1635, %v1639
    %vm1641 = vweird.f32 %v1632
    %vm1642 = vweird.f32 %v1635
    %vm1643 = vmor %vm1641, %vm1642
    %v1644 = vsel %vm1643, %v1635, %v1640
    %v1645 = vrsqrt.pop %v1633
    %v1646 = vmul.f32 %v1645, %v1633
    %v1647 = vmul.f32 %v1646, %v1645
    %v1648 = vmul.f32 0.5, %v1647
    %v1649 = vsub.f32 1.5, %v1648
    %v1650 = vmul.f32 %v1645, %v1649
    %vm1651 = vweird.f32 %v1633
    %vm1652 = vweird.f32 %v1645
    %vm1653 = vmor %vm1651, %vm1652
    %v1654 = vsel %vm1653, %v1645, %v1650
    %v1655 = vrsqrt.pop %v1634
    %v1656 = vmul.f32 %v1655, %v1634
    %v1657 = vmul.f32 %v1656, %v1655
    %v1658 = vmul.f32 0.5, %v1657
    %v1659 = vsub.f32 1.5, %v1658
    %v1660 = vmul.f32 %v1655, %v1659
    %vm1661 = vweird.f32 %v1634
    %vm1662 = vweird.f32 %v1655
    %vm1663 = vmor %vm1661, %vm1662
    %v1664 = vsel %vm1663, %v1655, %v1660
    %v1665 = vmul.f32 %v1617, %v1644
    %v1666 = vmul.f32 %v1618, %v1654
    %v1667 = vmul.f32 %v1619, %v1664
    %v1669 = vperm.slane %v1605, 0
    %v1671 = vmul.f32 %v1665, %v1669
    %v1672 = vmul.f32 %v1666, %v1669
    %v1673 = vmul.f32 %v1667, %v1669
    %v1675 = vperm.slane %v1607, 0
    %v1677 = vadd.f32 %v1671, %v1675
    %v1678 = vadd.f32 %v1672, %v1675
    %v1679 = vadd.f32 %v1673, %v1675
    %s1680 = scalar_lea.vmem [#allocation8], 512
    %v1681 = vld [vmem:[%s1680] sm:$0xff]
    %v1682 = vld [vmem:[%s1680 + $0x8] sm:$0xff]
    %v1683 = vld [vmem:[%s1680 + $0x10] sm:$0xff]
    %v1684 = vld [vmem:[%s1680 + $0x18] sm:$0xff]
    %v1685 = vld [vmem:[%s1680 + $0x20] sm:$0xff]
    %v1686 = vld [vmem:[%s1680 + $0x28] sm:$0xff]
    %v1687 = vld [vmem:[%s1680 + $0x30] sm:$0xff]
    %v1688 = vld [vmem:[%s1680 + $0x38] sm:$0xff]
    %v1689 = vld [vmem:[%s1680 + $0x40] sm:$0xff]
    %v1690 = vld [vmem:[%s1680 + $0x48] sm:$0xff]
    %v1691 = vld [vmem:[%s1680 + $0x50] sm:$0xff]
    %v1692 = vld [vmem:[%s1680 + $0x58] sm:$0xff]
    %v1693 = vld [vmem:[%s1680 + $0x60] sm:$0xff]
    %v1694 = vld [vmem:[%s1680 + $0x68] sm:$0xff]
    %v1695 = vld [vmem:[%s1680 + $0x70] sm:$0xff]
    %v1696 = vld [vmem:[%s1680 + $0x78] sm:$0xff]
    %v1697 = vld [vmem:[%s1680 + $0x80] sm:$0xff]
    %v1698 = vld [vmem:[%s1680 + $0x88] sm:$0xff]
    %v1699 = vld [vmem:[%s1680 + $0x90] sm:$0xff]
    %v1700 = vld [vmem:[%s1680 + $0x98] sm:$0xff]
    %v1701 = vld [vmem:[%s1680 + $0xa0] sm:$0xff]
    %v1702 = vld [vmem:[%s1680 + $0xa8] sm:$0xff]
    %v1703 = vld [vmem:[%s1680 + $0xb0] sm:$0xff]
    %v1704 = vld [vmem:[%s1680 + $0xb8] sm:$0xff]
    %v1705 = vld [vmem:[%s1680 + $0xc0] sm:$0xff]
    %v1706 = vld [vmem:[%s1680 + $0xc8] sm:$0xff]
    %v1707 = vld [vmem:[%s1680 + $0xd0] sm:$0xff]
    %v1708 = vld [vmem:[%s1680 + $0xd8] sm:$0xff]
    %v1709 = vld [vmem:[%s1680 + $0xe0] sm:$0xff]
    %v1710 = vld [vmem:[%s1680 + $0xe8] sm:$0xff]
    %v1711 = vld [vmem:[%s1680 + $0xf0] sm:$0xff]
    %v1712 = vld [vmem:[%s1680 + $0xf8] sm:$0xff]
    %v1713 = vld [vmem:[%s1680 + $0x100] sm:$0xff]
    %v1714 = vld [vmem:[%s1680 + $0x108] sm:$0xff]
    %v1715 = vld [vmem:[%s1680 + $0x110] sm:$0xff]
    %v1716 = vld [vmem:[%s1680 + $0x118] sm:$0xff]
    %v1717 = vld [vmem:[%s1680 + $0x120] sm:$0xff]
    %v1718 = vld [vmem:[%s1680 + $0x128] sm:$0xff]
    %v1719 = vld [vmem:[%s1680 + $0x130] sm:$0xff]
    %v1720 = vld [vmem:[%s1680 + $0x138] sm:$0xff]
    %v1721 = vld [vmem:[%s1680 + $0x140] sm:$0xff]
    %v1722 = vld [vmem:[%s1680 + $0x148] sm:$0xff]
    %v1723 = vld [vmem:[%s1680 + $0x150] sm:$0xff]
    %v1724 = vld [vmem:[%s1680 + $0x158] sm:$0xff]
    %v1725 = vld [vmem:[%s1680 + $0x160] sm:$0xff]
    %v1726 = vld [vmem:[%s1680 + $0x168] sm:$0xff]
    %v1727 = vld [vmem:[%s1680 + $0x170] sm:$0xff]
    %v1728 = vld [vmem:[%s1680 + $0x178] sm:$0xff]
    %v1729 = vld [vmem:[%s1680 + $0x180] sm:$0xff]
    %v1730 = vld [vmem:[%s1680 + $0x188] sm:$0xff]
    %v1731 = vld [vmem:[%s1680 + $0x190] sm:$0xff]
    %v1732 = vld [vmem:[%s1680 + $0x198] sm:$0xff]
    %v1733 = vld [vmem:[%s1680 + $0x1a0] sm:$0xff]
    %v1734 = vld [vmem:[%s1680 + $0x1a8] sm:$0xff]
    %v1735 = vld [vmem:[%s1680 + $0x1b0] sm:$0xff]
    %v1736 = vld [vmem:[%s1680 + $0x1b8] sm:$0xff]
    %v1737 = vld [vmem:[%s1680 + $0x1c0] sm:$0xff]
    %v1738 = vld [vmem:[%s1680 + $0x1c8] sm:$0xff]
    %v1739 = vld [vmem:[%s1680 + $0x1d0] sm:$0xff]
    %v1740 = vld [vmem:[%s1680 + $0x1d8] sm:$0xff]
    %v1741 = vld [vmem:[%s1680 + $0x1e0] sm:$0xff]
    %v1742 = vld [vmem:[%s1680 + $0x1e8] sm:$0xff]
    %v1743 = vld [vmem:[%s1680 + $0x1f0] sm:$0xff]
    %v1744 = vld [vmem:[%s1680 + $0x1f8] sm:$0xff]
    %s1745 = scalar_lea.vmem %s15, 4
    %v1746 = vld [vmem:[%s1745] sm:$0xf]
    %v1748 = vperm.slane %v1746, 0
    %v1749 = vperm.slane %v1746, 1
    %v1750 = vperm.slane %v1746, 2
    %v1751 = vperm.slane %v1746, 3
    %1756 = vmatpush.msra.mxu0 %v1741
    %1757 = vmatpush.msra.mxu0 %v1737
    %1758 = vmatpush.msra.mxu0 %v1733
    %1759 = vmatpush.msra.mxu0 %v1729
    %1760 = vmatpush.msra.mxu0 %v1725
    %1761 = vmatpush.msra.mxu0 %v1721
    %1762 = vmatpush.msra.mxu0 %v1717
    %1763 = vmatpush.msra.mxu0 %v1713
    %1764 = vmatpush.msra.mxu0 %v1709
    %1765 = vmatpush.msra.mxu0 %v1705
    %1766 = vmatpush.msra.mxu0 %v1701
    %1767 = vmatpush.msra.mxu0 %v1697
    %1768 = vmatpush.msra.mxu0 %v1693
    %1769 = vmatpush.msra.mxu0 %v1689
    %1770 = vmatpush.msra.mxu0 %v1685
    %1771 = vmatpush.msra.mxu0 %v1681
    %1772 = vmatmul.f32.gmra.mxu0 %v1677
    %v1773 = vpop.f32.mrf.mxu0
    %v1774 = vadd.f32 %v1748, %v1773
    %1775 = vmatmul.f32.gmra.mxu0 %v1678
    %v1776 = vpop.f32.mrf.mxu0
    %v1777 = vadd.f32 %v1748, %v1776
    %1778 = vmatmul.f32.gmra.mxu0 %v1679
    %v1779 = vpop.f32.mrf.mxu0
    %v1780 = vadd.f32 %v1748, %v1779
    %1781 = vdwg.mxu0
    %1782 = vmatpush.msra.mxu0 %v1742
    %1783 = vmatpush.msra.mxu0 %v1738
    %1784 = vmatpush.msra.mxu0 %v1734
    %1785 = vmatpush.msra.mxu0 %v1730
    %1786 = vmatpush.msra.mxu0 %v1726
    %1787 = vmatpush.msra.mxu0 %v1722
    %1788 = vmatpush.msra.mxu0 %v1718
    %1789 = vmatpush.msra.mxu0 %v1714
    %1790 = vmatpush.msra.mxu0 %v1710
    %1791 = vmatpush.msra.mxu0 %v1706
    %1792 = vmatpush.msra.mxu0 %v1702
    %1793 = vmatpush.msra.mxu0 %v1698
    %1794 = vmatpush.msra.mxu0 %v1694
    %1795 = vmatpush.msra.mxu0 %v1690
    %1796 = vmatpush.msra.mxu0 %v1686
    %1797 = vmatpush.msra.mxu0 %v1682
    %1798 = vmatmul.f32.gmra.mxu0 %v1677
    %v1799 = vpop.f32.mrf.mxu0
    %v1800 = vadd.f32 %v1749, %v1799
    %1801 = vmatmul.f32.gmra.mxu0 %v1678
    %v1802 = vpop.f32.mrf.mxu0
    %v1803 = vadd.f32 %v1749, %v1802
    %1804 = vmatmul.f32.gmra.mxu0 %v1679
    %v1805 = vpop.f32.mrf.mxu0
    %v1806 = vadd.f32 %v1749, %v1805
    %1807 = vdwg.mxu0
    %1808 = vmatpush.msra.mxu0 %v1743
    %1809 = vmatpush.msra.mxu0 %v1739
    %1810 = vmatpush.msra.mxu0 %v1735
    %1811 = vmatpush.msra.mxu0 %v1731
    %1812 = vmatpush.msra.mxu0 %v1727
    %1813 = vmatpush.msra.mxu0 %v1723
    %1814 = vmatpush.msra.mxu0 %v1719
    %1815 = vmatpush.msra.mxu0 %v1715
    %1816 = vmatpush.msra.mxu0 %v1711
    %1817 = vmatpush.msra.mxu0 %v1707
    %1818 = vmatpush.msra.mxu0 %v1703
    %1819 = vmatpush.msra.mxu0 %v1699
    %1820 = vmatpush.msra.mxu0 %v1695
    %1821 = vmatpush.msra.mxu0 %v1691
    %1822 = vmatpush.msra.mxu0 %v1687
    %1823 = vmatpush.msra.mxu0 %v1683
    %1824 = vmatmul.f32.gmra.mxu0 %v1677
    %v1825 = vpop.f32.mrf.mxu0
    %v1826 = vadd.f32 %v1750, %v1825
    %1827 = vmatmul.f32.gmra.mxu0 %v1678
    %v1828 = vpop.f32.mrf.mxu0
    %v1829 = vadd.f32 %v1750, %v1828
    %1830 = vmatmul.f32.gmra.mxu0 %v1679
    %v1831 = vpop.f32.mrf.mxu0
    %v1832 = vadd.f32 %v1750, %v1831
    %1833 = vdwg.mxu0
    %1834 = vmatpush.msra.mxu0 %v1744
    %1835 = vmatpush.msra.mxu0 %v1740
    %1836 = vmatpush.msra.mxu0 %v1736
    %1837 = vmatpush.msra.mxu0 %v1732
    %1838 = vmatpush.msra.mxu0 %v1728
    %1839 = vmatpush.msra.mxu0 %v1724
    %1840 = vmatpush.msra.mxu0 %v1720
    %1841 = vmatpush.msra.mxu0 %v1716
    %1842 = vmatpush.msra.mxu0 %v1712
    %1843 = vmatpush.msra.mxu0 %v1708
    %1844 = vmatpush.msra.mxu0 %v1704
    %1845 = vmatpush.msra.mxu0 %v1700
    %1846 = vmatpush.msra.mxu0 %v1696
    %1847 = vmatpush.msra.mxu0 %v1692
    %1848 = vmatpush.msra.mxu0 %v1688
    %1849 = vmatpush.msra.mxu0 %v1684
    %1850 = vmatmul.f32.gmra.mxu0 %v1677
    %v1851 = vpop.f32.mrf.mxu0
    %v1852 = vadd.f32 %v1751, %v1851
    %1853 = vmatmul.f32.gmra.mxu0 %v1678
    %v1854 = vpop.f32.mrf.mxu0
    %v1855 = vadd.f32 %v1751, %v1854
    %1856 = vmatmul.f32.gmra.mxu0 %v1679
    %v1857 = vpop.f32.mrf.mxu0
    %v1858 = vadd.f32 %v1751, %v1857
    %1859 = vdwg.mxu0
    %v1860 = vmul.f32 %v1774, 0.5
    %v1861 = vmul.f32 %v1800, 0.5
    %v1862 = vmul.f32 %v1826, 0.5
    %v1863 = vmul.f32 %v1852, 0.5
    %v1864 = vmul.f32 %v1777, 0.5
    %v1865 = vmul.f32 %v1803, 0.5
    %v1866 = vmul.f32 %v1829, 0.5
    %v1867 = vmul.f32 %v1855, 0.5
    %v1868 = vmul.f32 %v1780, 0.5
    %v1869 = vmul.f32 %v1806, 0.5
    %v1870 = vmul.f32 %v1832, 0.5
    %v1871 = vmul.f32 %v1858, 0.5
    %v1872 = vmul.f32 %v1774, 0.044715
    %v1873 = vmul.f32 %v1800, 0.044715
    %v1874 = vmul.f32 %v1826, 0.044715
    %v1875 = vmul.f32 %v1852, 0.044715
    %v1876 = vmul.f32 %v1777, 0.044715
    %v1877 = vmul.f32 %v1803, 0.044715
    %v1878 = vmul.f32 %v1829, 0.044715
    %v1879 = vmul.f32 %v1855, 0.044715
    %v1880 = vmul.f32 %v1780, 0.044715
    %v1881 = vmul.f32 %v1806, 0.044715
    %v1882 = vmul.f32 %v1832, 0.044715
    %v1883 = vmul.f32 %v1858, 0.044715
    %v1884 = vmul.f32 %v1872, %v1774
    %v1885 = vmul.f32 %v1873, %v1800
    %v1886 = vmul.f32 %v1874, %v1826
    %v1887 = vmul.f32 %v1875, %v1852
    %v1888 = vmul.f32 %v1876, %v1777
    %v1889 = vmul.f32 %v1877, %v1803
    %v1890 = vmul.f32 %v1878, %v1829
    %v1891 = vmul.f32 %v1879, %v1855
    %v1892 = vmul.f32 %v1880, %v1780
    %v1893 = vmul.f32 %v1881, %v1806
    %v1894 = vmul.f32 %v1882, %v1832
    %v1895 = vmul.f32 %v1883, %v1858
    %v1896 = vmul.f32 %v1884, %v1774
    %v1897 = vmul.f32 %v1885, %v1800
    %v1898 = vmul.f32 %v1886, %v1826
    %v1899 = vmul.f32 %v1887, %v1852
    %v1900 = vmul.f32 %v1888, %v1777
    %v1901 = vmul.f32 %v1889, %v1803
    %v1902 = vmul.f32 %v1890, %v1829
    %v1903 = vmul.f32 %v1891, %v1855
    %v1904 = vmul.f32 %v1892, %v1780
    %v1905 = vmul.f32 %v1893, %v1806
    %v1906 = vmul.f32 %v1894, %v1832
    %v1907 = vmul.f32 %v1895, %v1858
    %v1908 = vadd.f32 %v1774, %v1896
    %v1909 = vadd.f32 %v1800, %v1897
    %v1910 = vadd.f32 %v1826, %v1898
    %v1911 = vadd.f32 %v1852, %v1899
    %v1912 = vadd.f32 %v1777, %v1900
    %v1913 = vadd.f32 %v1803, %v1901
    %v1914 = vadd.f32 %v1829, %v1902
    %v1915 = vadd.f32 %v1855, %v1903
    %v1916 = vadd.f32 %v1780, %v1904
    %v1917 = vadd.f32 %v1806, %v1905
    %v1918 = vadd.f32 %v1832, %v1906
    %v1919 = vadd.f32 %v1858, %v1907
    %v1920 = vmul.f32 %v1908, 0.7978846
    %v1921 = vmul.f32 %v1909, 0.7978846
    %v1922 = vmul.f32 %v1910, 0.7978846
    %v1923 = vmul.f32 %v1911, 0.7978846
    %v1924 = vmul.f32 %v1912, 0.7978846
    %v1925 = vmul.f32 %v1913, 0.7978846
    %v1926 = vmul.f32 %v1914, 0.7978846
    %v1927 = vmul.f32 %v1915, 0.7978846
    %v1928 = vmul.f32 %v1916, 0.7978846
    %v1929 = vmul.f32 %v1917, 0.7978846
    %v1930 = vmul.f32 %v1918, 0.7978846
    %v1931 = vmul.f32 %v1919, 0.7978846
    %v1932 = vtanh.pop %v1920
    %v1933 = vtanh.pop %v1921
    %v1934 = vtanh.pop %v1922
    %v1935 = vtanh.pop %v1923
    %v1936 = vtanh.pop %v1924
    %v1937 = vtanh.pop %v1925
    %v1938 = vtanh.pop %v1926
    %v1939 = vtanh.pop %v1927
    %v1940 = vtanh.pop %v1928
    %v1941 = vtanh.pop %v1929
    %v1942 = vtanh.pop %v1930
    %v1943 = vtanh.pop %v1931
    %v1944 = vadd.f32 %v1932, 1.0
    %v1945 = vadd.f32 %v1933, 1.0
    %v1946 = vadd.f32 %v1934, 1.0
    %v1947 = vadd.f32 %v1935, 1.0
    %v1948 = vadd.f32 %v1936, 1.0
    %v1949 = vadd.f32 %v1937, 1.0
    %v1950 = vadd.f32 %v1938, 1.0
    %v1951 = vadd.f32 %v1939, 1.0
    %v1952 = vadd.f32 %v1940, 1.0
    %v1953 = vadd.f32 %v1941, 1.0
    %v1954 = vadd.f32 %v1942, 1.0
    %v1955 = vadd.f32 %v1943, 1.0
    %v1956 = vmul.f32 %v1860, %v1944
    %v1957 = vmul.f32 %v1861, %v1945
    %v1958 = vmul.f32 %v1862, %v1946
    %v1959 = vmul.f32 %v1863, %v1947
    %v1960 = vmul.f32 %v1864, %v1948
    %v1961 = vmul.f32 %v1865, %v1949
    %v1962 = vmul.f32 %v1866, %v1950
    %v1963 = vmul.f32 %v1867, %v1951
    %v1964 = vmul.f32 %v1868, %v1952
    %v1965 = vmul.f32 %v1869, %v1953
    %v1966 = vmul.f32 %v1870, %v1954
    %v1967 = vmul.f32 %v1871, %v1955
    %s1968 = scalar_lea.vmem [#allocation10], 512
    %v1969 = vld [vmem:[%s1968] sm:$0xff]
    %v1970 = vld [vmem:[%s1968 + $0x8] sm:$0xff]
    %v1971 = vld [vmem:[%s1968 + $0x10] sm:$0xff]
    %v1972 = vld [vmem:[%s1968 + $0x18] sm:$0xff]
    %v1973 = vld [vmem:[%s1968 + $0x20] sm:$0xff]
    %v1974 = vld [vmem:[%s1968 + $0x28] sm:$0xff]
    %v1975 = vld [vmem:[%s1968 + $0x30] sm:$0xff]
    %v1976 = vld [vmem:[%s1968 + $0x38] sm:$0xff]
    %v1977 = vld [vmem:[%s1968 + $0x40] sm:$0xff]
    %v1978 = vld [vmem:[%s1968 + $0x48] sm:$0xff]
    %v1979 = vld [vmem:[%s1968 + $0x50] sm:$0xff]
    %v1980 = vld [vmem:[%s1968 + $0x58] sm:$0xff]
    %v1981 = vld [vmem:[%s1968 + $0x60] sm:$0xff]
    %v1982 = vld [vmem:[%s1968 + $0x68] sm:$0xff]
    %v1983 = vld [vmem:[%s1968 + $0x70] sm:$0xff]
    %v1984 = vld [vmem:[%s1968 + $0x78] sm:$0xff]
    %v1985 = vld [vmem:[%s1968 + $0x80] sm:$0xff]
    %v1986 = vld [vmem:[%s1968 + $0x88] sm:$0xff]
    %v1987 = vld [vmem:[%s1968 + $0x90] sm:$0xff]
    %v1988 = vld [vmem:[%s1968 + $0x98] sm:$0xff]
    %v1989 = vld [vmem:[%s1968 + $0xa0] sm:$0xff]
    %v1990 = vld [vmem:[%s1968 + $0xa8] sm:$0xff]
    %v1991 = vld [vmem:[%s1968 + $0xb0] sm:$0xff]
    %v1992 = vld [vmem:[%s1968 + $0xb8] sm:$0xff]
    %v1993 = vld [vmem:[%s1968 + $0xc0] sm:$0xff]
    %v1994 = vld [vmem:[%s1968 + $0xc8] sm:$0xff]
    %v1995 = vld [vmem:[%s1968 + $0xd0] sm:$0xff]
    %v1996 = vld [vmem:[%s1968 + $0xd8] sm:$0xff]
    %v1997 = vld [vmem:[%s1968 + $0xe0] sm:$0xff]
    %v1998 = vld [vmem:[%s1968 + $0xe8] sm:$0xff]
    %v1999 = vld [vmem:[%s1968 + $0xf0] sm:$0xff]
    %v2000 = vld [vmem:[%s1968 + $0xf8] sm:$0xff]
    %v2001 = vld [vmem:[%s1968 + $0x100] sm:$0xff]
    %v2002 = vld [vmem:[%s1968 + $0x108] sm:$0xff]
    %v2003 = vld [vmem:[%s1968 + $0x110] sm:$0xff]
    %v2004 = vld [vmem:[%s1968 + $0x118] sm:$0xff]
    %v2005 = vld [vmem:[%s1968 + $0x120] sm:$0xff]
    %v2006 = vld [vmem:[%s1968 + $0x128] sm:$0xff]
    %v2007 = vld [vmem:[%s1968 + $0x130] sm:$0xff]
    %v2008 = vld [vmem:[%s1968 + $0x138] sm:$0xff]
    %v2009 = vld [vmem:[%s1968 + $0x140] sm:$0xff]
    %v2010 = vld [vmem:[%s1968 + $0x148] sm:$0xff]
    %v2011 = vld [vmem:[%s1968 + $0x150] sm:$0xff]
    %v2012 = vld [vmem:[%s1968 + $0x158] sm:$0xff]
    %v2013 = vld [vmem:[%s1968 + $0x160] sm:$0xff]
    %v2014 = vld [vmem:[%s1968 + $0x168] sm:$0xff]
    %v2015 = vld [vmem:[%s1968 + $0x170] sm:$0xff]
    %v2016 = vld [vmem:[%s1968 + $0x178] sm:$0xff]
    %v2017 = vld [vmem:[%s1968 + $0x180] sm:$0xff]
    %v2018 = vld [vmem:[%s1968 + $0x188] sm:$0xff]
    %v2019 = vld [vmem:[%s1968 + $0x190] sm:$0xff]
    %v2020 = vld [vmem:[%s1968 + $0x198] sm:$0xff]
    %v2021 = vld [vmem:[%s1968 + $0x1a0] sm:$0xff]
    %v2022 = vld [vmem:[%s1968 + $0x1a8] sm:$0xff]
    %v2023 = vld [vmem:[%s1968 + $0x1b0] sm:$0xff]
    %v2024 = vld [vmem:[%s1968 + $0x1b8] sm:$0xff]
    %v2025 = vld [vmem:[%s1968 + $0x1c0] sm:$0xff]
    %v2026 = vld [vmem:[%s1968 + $0x1c8] sm:$0xff]
    %v2027 = vld [vmem:[%s1968 + $0x1d0] sm:$0xff]
    %v2028 = vld [vmem:[%s1968 + $0x1d8] sm:$0xff]
    %v2029 = vld [vmem:[%s1968 + $0x1e0] sm:$0xff]
    %v2030 = vld [vmem:[%s1968 + $0x1e8] sm:$0xff]
    %v2031 = vld [vmem:[%s1968 + $0x1f0] sm:$0xff]
    %v2032 = vld [vmem:[%s1968 + $0x1f8] sm:$0xff]
    %s2033 = scalar_lea.vmem %s17, 1
    %v2034 = vld [vmem:[%s2033] sm:$0x1]
    %v2036 = vperm.slane %v2034, 0
    %2038 = vmatpush.msra.mxu0 %v1984
    %2039 = vmatpush.msra.mxu0 %v1983
    %2040 = vmatpush.msra.mxu0 %v1982
    %2041 = vmatpush.msra.mxu0 %v1981
    %2042 = vmatpush.msra.mxu0 %v1980
    %2043 = vmatpush.msra.mxu0 %v1979
    %2044 = vmatpush.msra.mxu0 %v1978
    %2045 = vmatpush.msra.mxu0 %v1977
    %2046 = vmatpush.msra.mxu0 %v1976
    %2047 = vmatpush.msra.mxu0 %v1975
    %2048 = vmatpush.msra.mxu0 %v1974
    %2049 = vmatpush.msra.mxu0 %v1973
    %2050 = vmatpush.msra.mxu0 %v1972
    %2051 = vmatpush.msra.mxu0 %v1971
    %2052 = vmatpush.msra.mxu0 %v1970
    %2053 = vmatpush.msra.mxu0 %v1969
    %2054 = vmatmul.f32.gmra.mxu0 %v1956
    %v2055 = vpop.f32.mrf.mxu0
    %v2056 = vadd.f32 %v2036, %v2055
    %2057 = vmatmul.f32.gmra.mxu0 %v1960
    %v2058 = vpop.f32.mrf.mxu0
    %v2059 = vadd.f32 %v2036, %v2058
    %2060 = vmatmul.f32.gmra.mxu0 %v1964
    %v2061 = vpop.f32.mrf.mxu0
    %v2062 = vadd.f32 %v2036, %v2061
    %2063 = vdwg.mxu0
    %2064 = vmatpush.msra.mxu0 %v2000
    %2065 = vmatpush.msra.mxu0 %v1999
    %2066 = vmatpush.msra.mxu0 %v1998
    %2067 = vmatpush.msra.mxu0 %v1997
    %2068 = vmatpush.msra.mxu0 %v1996
    %2069 = vmatpush.msra.mxu0 %v1995
    %2070 = vmatpush.msra.mxu0 %v1994
    %2071 = vmatpush.msra.mxu0 %v1993
    %2072 = vmatpush.msra.mxu0 %v1992
    %2073 = vmatpush.msra.mxu0 %v1991
    %2074 = vmatpush.msra.mxu0 %v1990
    %2075 = vmatpush.msra.mxu0 %v1989
    %2076 = vmatpush.msra.mxu0 %v1988
    %2077 = vmatpush.msra.mxu0 %v1987
    %2078 = vmatpush.msra.mxu0 %v1986
    %2079 = vmatpush.msra.mxu0 %v1985
    %2080 = vmatmul.f32.gmra.mxu0 %v1957
    %v2081 = vpop.f32.mrf.mxu0
    %v2082 = vadd.f32 %v2056, %v2081
    %2083 = vmatmul.f32.gmra.mxu0 %v1961
    %v2084 = vpop.f32.mrf.mxu0
    %v2085 = vadd.f32 %v2059, %v2084
    %2086 = vmatmul.f32.gmra.mxu0 %v1965
    %v2087 = vpop.f32.mrf.mxu0
    %v2088 = vadd.f32 %v2062, %v2087
    %2089 = vdwg.mxu0
    %2090 = vmatpush.msra.mxu0 %v2016
    %2091 = vmatpush.msra.mxu0 %v2015
    %2092 = vmatpush.msra.mxu0 %v2014
    %2093 = vmatpush.msra.mxu0 %v2013
    %2094 = vmatpush.msra.mxu0 %v2012
    %2095 = vmatpush.msra.mxu0 %v2011
    %2096 = vmatpush.msra.mxu0 %v2010
    %2097 = vmatpush.msra.mxu0 %v2009
    %2098 = vmatpush.msra.mxu0 %v2008
    %2099 = vmatpush.msra.mxu0 %v2007
    %2100 = vmatpush.msra.mxu0 %v2006
    %2101 = vmatpush.msra.mxu0 %v2005
    %2102 = vmatpush.msra.mxu0 %v2004
    %2103 = vmatpush.msra.mxu0 %v2003
    %2104 = vmatpush.msra.mxu0 %v2002
    %2105 = vmatpush.msra.mxu0 %v2001
    %2106 = vmatmul.f32.gmra.mxu0 %v1958
    %v2107 = vpop.f32.mrf.mxu0
    %v2108 = vadd.f32 %v2082, %v2107
    %2109 = vmatmul.f32.gmra.mxu0 %v1962
    %v2110 = vpop.f32.mrf.mxu0
    %v2111 = vadd.f32 %v2085, %v2110
    %2112 = vmatmul.f32.gmra.mxu0 %v1966
    %v2113 = vpop.f32.mrf.mxu0
    %v2114 = vadd.f32 %v2088, %v2113
    %2115 = vdwg.mxu0
    %2116 = vmatpush.msra.mxu0 %v2032
    %2117 = vmatpush.msra.mxu0 %v2031
    %2118 = vmatpush.msra.mxu0 %v2030
    %2119 = vmatpush.msra.mxu0 %v2029
    %2120 = vmatpush.msra.mxu0 %v2028
    %2121 = vmatpush.msra.mxu0 %v2027
    %2122 = vmatpush.msra.mxu0 %v2026
    %2123 = vmatpush.msra.mxu0 %v2025
    %2124 = vmatpush.msra.mxu0 %v2024
    %2125 = vmatpush.msra.mxu0 %v2023
    %2126 = vmatpush.msra.mxu0 %v2022
    %2127 = vmatpush.msra.mxu0 %v2021
    %2128 = vmatpush.msra.mxu0 %v2020
    %2129 = vmatpush.msra.mxu0 %v2019
    %2130 = vmatpush.msra.mxu0 %v2018
    %2131 = vmatpush.msra.mxu0 %v2017
    %2132 = vmatmul.f32.gmra.mxu0 %v1959
    %v2133 = vpop.f32.mrf.mxu0
    %v2134 = vadd.f32 %v2108, %v2133
    %2135 = vmatmul.f32.gmra.mxu0 %v1963
    %v2136 = vpop.f32.mrf.mxu0
    %v2137 = vadd.f32 %v2111, %v2136
    %2138 = vmatmul.f32.gmra.mxu0 %v1967
    %v2139 = vpop.f32.mrf.mxu0
    %v2140 = vadd.f32 %v2114, %v2139
    %2141 = vdwg.mxu0
    %v2142 = vadd.f32 %v1601, %v2134
    %v2143 = vadd.f32 %v1602, %v2137
    %v2144 = vadd.f32 %v1603, %v2140
    %v2145 = vld [vmem:[%s18] sm:$0x1]
    %v2146 = vld [vmem:[%s19] sm:$0x1]
    %2147 = vadd.xlane.f32.xlu0 %v2142
    %v2148 = vpop.xlane.xlu0 %2147
    %2149 = vadd.xlane.f32.xlu0 %v2143
    %v2150 = vpop.xlane.xlu0 %2149
    %2151 = vadd.xlane.f32.xlu0 %v2144
    %v2152 = vpop.xlane.xlu0 %2151
    %v2153 = vmul.f32 %v2148, %v289
    %v2154 = vmul.f32 %v2150, %v289
    %v2155 = vmul.f32 %v2152, %v289
    %v2156 = vsub.f32 %v2142, %v2153
    %v2157 = vsub.f32 %v2143, %v2154
    %v2158 = vsub.f32 %v2144, %v2155
    %v2159 = vmul.f32 %v2156, %v2156
    %v2160 = vmul.f32 %v2157, %v2157
    %v2161 = vmul.f32 %v2158, %v2158
    %2162 = vadd.xlane.f32.xlu0 %v2159
    %v2163 = vpop.xlane.xlu0 %2162
    %2164 = vadd.xlane.f32.xlu0 %v2160
    %v2165 = vpop.xlane.xlu0 %2164
    %2166 = vadd.xlane.f32.xlu0 %v2161
    %v2167 = vpop.xlane.xlu0 %2166
    %v2168 = vmul.f32 %v2163, %v289
    %v2169 = vmul.f32 %v2165, %v289
    %v2170 = vmul.f32 %v2167, %v289
    %v2171 = vadd.f32 %v2168, 1e-05
    %v2172 = vadd.f32 %v2169, 1e-05
    %v2173 = vadd.f32 %v2170, 1e-05
    %v2174 = vrsqrt.pop %v2171
    %v2175 = vmul.f32 %v2174, %v2171
    %v2176 = vmul.f32 %v2175, %v2174
    %v2177 = vmul.f32 0.5, %v2176
    %v2178 = vsub.f32 1.5, %v2177
    %v2179 = vmul.f32 %v2174, %v2178
    %vm2180 = vweird.f32 %v2171
    %vm2181 = vweird.f32 %v2174
    %vm2182 = vmor %vm2180, %vm2181
    %v2183 = vsel %vm2182, %v2174, %v2179
    %v2184 = vrsqrt.pop %v2172
    %v2185 = vmul.f32 %v2184, %v2172
    %v2186 = vmul.f32 %v2185, %v2184
    %v2187 = vmul.f32 0.5, %v2186
    %v2188 = vsub.f32 1.5, %v2187
    %v2189 = vmul.f32 %v2184, %v2188
    %vm2190 = vweird.f32 %v2172
    %vm2191 = vweird.f32 %v2184
    %vm2192 = vmor %vm2190, %vm2191
    %v2193 = vsel %vm2192, %v2184, %v2189
    %v2194 = vrsqrt.pop %v2173
    %v2195 = vmul.f32 %v2194, %v2173
    %v2196 = vmul.f32 %v2195, %v2194
    %v2197 = vmul.f32 0.5, %v2196
    %v2198 = vsub.f32 1.5, %v2197
    %v2199 = vmul.f32 %v2194, %v2198
    %vm2200 = vweird.f32 %v2173
    %vm2201 = vweird.f32 %v2194
    %vm2202 = vmor %vm2200, %vm2201
    %v2203 = vsel %vm2202, %v2194, %v2199
    %v2204 = vmul.f32 %v2156, %v2183
    %v2205 = vmul.f32 %v2157, %v2193
    %v2206 = vmul.f32 %v2158, %v2203
    %v2208 = vperm.slane %v2145, 0
    %v2210 = vmul.f32 %v2204, %v2208
    %v2211 = vmul.f32 %v2205, %v2208
    %v2212 = vmul.f32 %v2206, %v2208
    %v2214 = vperm.slane %v2146, 0
    %v2216 = vadd.f32 %v2210, %v2214
    %v2217 = vadd.f32 %v2211, %v2214
    %v2218 = vadd.f32 %v2212, %v2214
    %2219 = vst [vmem:[#allocation11] sm:$0xff] %v2216
    %2220 = vst [vmem:[#allocation11 + $0x8] sm:$0xff] %v2217
    %2221 = vst [vmem:[#allocation11 + $0x10] sm:$0xff] %v2218
    // Predicated region
    $region102: #{mae_encoder_pallas.3} parent=1 // pred_check
      _
    $region103: #{mae_encoder_pallas.3} parent=1 // pred_check_branch
      %2223 = sbr.rel (0) target = $region105
    $region104: #{mae_encoder_pallas.3} parent=1 // pred_region
      %2225 = vsyncadd [#allocation4], 0
      %s2226 = sshll.u32 [#allocation11], 4
      %s2227 = int_to_ptr.vmem [resolvable:$true] %s2226
      %s2228 = sshll.u32 %s20, 4
      %s2229 = int_to_ptr.hbm [resolvable:$true] %s2228
      %2234 = dma.vmem_to_hbm [thread:$0]  %s2227, 384, %s2229, [#allocation4], 128, 128, 8
    $region105: #{mae_encoder_pallas.3} parent=1 // pred_fallthru
      _
    // Predicated region
    $region106: #{mae_encoder_pallas.3} parent=1 // pred_check
      _
    $region107: #{mae_encoder_pallas.3} parent=1 // pred_check_branch
      %2236 = sbr.rel (0) target = $region109
    $region108: #{mae_encoder_pallas.3} parent=1 // pred_region
      %2238 = dma.done [#allocation4], 384
    $region109: #{mae_encoder_pallas.3} parent=1 // pred_fallthru
      _
    %2239 = vsyncpa [#allocation3], 1
    %2240 = vsyncpa [#allocation6], 1
    %2241 = vsyncpa [#allocation9], 1
    %2242 = vsyncpa [#allocation4], 1

</llo_original>
